<compile_context>
chip_gen: v7x
topology: tpu7x:2x2x1
jax: 0.10.0
libtpu: 0.0.40
codegen_flags: <defaults>
</compile_context>

<pallas_src>
import functools
import math

import jax
import jax.numpy as jnp
from jax.experimental import pallas as pl
from jax.experimental.pallas import tpu as pltpu


# -----------------------------------------------------------------------------
# Fused conv2d (+ folded BN / bias, optional residual, ReLU) Pallas kernel
# -----------------------------------------------------------------------------
def _conv_kernel(*refs, n_in, K, TH, Wo, relu, has_res):
    x_refs = refs[:n_in]
    w_refs = refs[n_in:2 * n_in]
    s_ref = refs[2 * n_in]
    b_ref = refs[2 * n_in + 1]
    pos = 2 * n_in + 2
    if has_res:
        r_ref = refs[pos]
        pos += 1
    o_ref = refs[pos]
    acc_ref = refs[pos + 1]

    r = pl.program_id(2)                       # output-row tile index
    row0 = pl.multiple_of(r * TH, TH)

    acc_ref[...] = jnp.zeros_like(acc_ref)
    for x_ref, w_ref in zip(x_refs, w_refs):
        cin = x_ref.shape[-1]
        for kh in range(K):
            # one dynamic ref-load per row tap; kw taps are value-level slices
            rows = x_ref[0, pl.ds(row0 + kh, TH), :, :]        # (TH, Wp, Cin)
            for kw in range(K):
                patch = rows[:, kw:kw + Wo, :].reshape(TH * Wo, cin)
                acc_ref[...] += jnp.dot(patch, w_ref[kh * K + kw],
                                        preferred_element_type=jnp.float32)

    y = acc_ref[...] * s_ref[...] + b_ref[...]     # fused BatchNorm (eval) / conv bias
    if has_res:
        y = y + r_ref[0].astype(jnp.float32).reshape(TH * Wo, r_ref.shape[-1])
    if relu:
        y = jnp.maximum(y, 0.0)
    o_ref[0] = y.reshape(TH, Wo, y.shape[-1]).astype(o_ref.dtype)


def _pick_row_tile(Ho, target=64):
    """Largest divisor of Ho that is <= target (toy sizes -> single tile)."""
    if Ho <= target:
        return Ho
    best = 1
    for d in range(1, target + 1):
        if Ho % d == 0:
            best = d
    return best


def fused_conv(pairs, scale, bias, *, relu=True, residual=None,
               out_dtype=jnp.bfloat16):
    """Stride-1 conv of sum_i conv(x_i, w_i) + affine (+res) (+ReLU).

    pairs: list of (x, w); x: (N, Hp, Wp, Cin_i) already padded, w: (K*K, Cin_i, Cout).
    All x share N/Hp/Wp; all w share K/Cout.  scale/bias: (1, Cout) f32.
    """
    N, Hp, Wp, _ = pairs[0][0].shape
    KK, _, Cout = pairs[0][1].shape
    K = int(round(math.sqrt(KK)))
    Ho, Wo = Hp - K + 1, Wp - K + 1
    for x, w in pairs:
        assert x.shape[0] == N and x.shape[1] == Hp and x.shape[2] == Wp
        assert w.shape[0] == KK and w.shape[2] == Cout

    TCout = min(Cout, 128)
    n_ct = Cout // TCout
    TH = _pick_row_tile(Ho)
    n_rt = Ho // TH

    kernel = functools.partial(_conv_kernel, n_in=len(pairs), K=K, TH=TH, Wo=Wo,
                               relu=relu, has_res=residual is not None)

    in_specs, args = [], []
    for x, _ in pairs:
        cin = x.shape[-1]
        # TODO(synk): halo'd row-tiling of the input block (currently the full per-batch
        # plane stays resident in VMEM across row/Cout tiles) for production BEV sizes.
        in_specs.append(pl.BlockSpec((1, Hp, Wp, cin), lambda n, j, r: (n, 0, 0, 0)))
        args.append(x)
    for _, w in pairs:
        cin = w.shape[1]
        in_specs.append(pl.BlockSpec((KK, cin, TCout), lambda n, j, r: (0, 0, j)))
        args.append(w)
    in_specs.append(pl.BlockSpec((1, TCout), lambda n, j, r: (0, j)))
    args.append(scale)
    in_specs.append(pl.BlockSpec((1, TCout), lambda n, j, r: (0, j)))
    args.append(bias)
    if residual is not None:
        in_specs.append(pl.BlockSpec((1, TH, Wo, TCout), lambda n, j, r: (n, r, 0, j)))
        args.append(residual)

    return pl.pallas_call(
        kernel,
        out_shape=jax.ShapeDtypeStruct((N, Ho, Wo, Cout), out_dtype),
        grid=(N, n_ct, n_rt),
        in_specs=in_specs,
        out_specs=pl.BlockSpec((1, TH, Wo, TCout), lambda n, j, r: (n, r, 0, j)),
        scratch_shapes=[pltpu.VMEM((TH * Wo, TCout), jnp.float32)],
        compiler_params=pltpu.CompilerParams(
            dimension_semantics=("parallel", "parallel", "parallel"),
            vmem_limit_bytes=48 * 1024 * 1024),
    )(*args)


def conv2d(x, w, scale, bias, *, stride=1, padding=0, relu=True, residual=None):
    """x: (N,H,W,Cin) NHWC bf16, w: (K*K,Cin,Cout) bf16, scale/bias: (1,Cout) f32.

    stride > 1 is folded into channels (space-to-depth phases) so the Pallas kernel
    only ever runs stride-1 taps -> no wasted MACs, no post-hoc subsampling.
    """
    assert residual is None or stride == 1
    N, H, W, Cin = x.shape
    KK, _, Cout = w.shape
    K = int(round(math.sqrt(KK)))

    if padding:
        x = jnp.pad(x, ((0, 0), (padding, padding), (padding, padding), (0, 0)))

    if stride == 1:
        return fused_conv([(x, w)], scale, bias, relu=relu, residual=residual)

    if K == 1:
        # 1x1 strided conv == subsample then 1x1 stride-1 conv
        xs = x[:, ::stride, ::stride, :]
        return fused_conv([(xs, w)], scale, bias, relu=relu, residual=residual)

    # General strided conv: phase (space-to-depth) rearrangement.
    s = stride
    Hp, Wp = x.shape[1], x.shape[2]
    Ho, Wo = (Hp - K) // s + 1, (Wp - K) // s + 1
    KA = -(-K // s)                       # ceil(K / s)
    Hn, Wn = Ho + KA - 1, Wo + KA - 1

    planes = []
    for p in range(s):
        for q in range(s):
            pln = x[:, p::s, q::s, :][:, :Hn, :Wn, :]
            pln = jnp.pad(pln, ((0, 0), (0, Hn - pln.shape[1]),
                                (0, Wn - pln.shape[2]), (0, 0)))
            planes.append(pln)
    xph = jnp.concatenate(planes, axis=-1)            # (N, Hn, Wn, s*s*Cin)

    w4 = w.reshape(K, K, Cin, Cout)
    wre = jnp.zeros((KA, KA, s * s * Cin, Cout), w.dtype)
    for a in range(KA):
        for b in range(KA):
            for p in range(s):
                for q in range(s):
                    kh, kw = s * a + p, s * b + q
                    if kh < K and kw < K:
                        wre = wre.at[a, b, (p * s + q) * Cin:(p * s + q + 1) * Cin, :
                                     ].set(w4[kh, kw])
    wre = wre.reshape(KA * KA, s * s * Cin, Cout)

    return fused_conv([(xph, wre)], scale, bias, relu=relu, residual=residual)


# -----------------------------------------------------------------------------
# MaxFusion: per-batch max over agents (each agent block read exactly once)
# -----------------------------------------------------------------------------
def _maxfuse_kernel(bid_ref, start_ref, x_ref, o_ref):
    n = pl.program_id(1)                 # agent index (sequential axis)
    b = bid_ref[n]
    first = n == start_ref[b]            # first agent of this batch

    @pl.when(first)
    def _():
        o_ref[...] = x_ref[...]

    @pl.when(jnp.logical_not(first))
    def _():
        o_ref[...] = jnp.maximum(o_ref[...], x_ref[...])


def max_fusion(x, record_len):
    """x: (sum(record_len), H, W, C) -> (B, H, W, C) max over each batch's agents.

    Requires record_len[b] >= 1 for every batch (same as the PyTorch reference).
    """
    N, H, W, C = x.shape
    B = record_len.shape[0]
    rl = record_len.astype(jnp.int32)
    starts = jnp.concatenate([jnp.zeros((1,), jnp.int32), jnp.cumsum(rl)[:-1]])
    ends = jnp.cumsum(rl)
    # per-agent batch id (agents of a batch are contiguous)
    bid = jnp.sum(jnp.arange(N, dtype=jnp.int32)[:, None] >= ends[None, :],
                  axis=1).astype(jnp.int32)

    TC = min(C, 128)
    n_ct = C // TC

    def x_map(ct, n, bid_ref, start_ref):
        return (n, 0, 0, ct)

    def o_map(ct, n, bid_ref, start_ref):
        return (bid_ref[n], 0, 0, ct)

    return pl.pallas_call(
        _maxfuse_kernel,
        out_shape=jax.ShapeDtypeStruct((B, H, W, C), x.dtype),
        grid_spec=pltpu.PrefetchScalarGridSpec(
            num_scalar_prefetch=2,
            grid=(n_ct, N),
            in_specs=[pl.BlockSpec((1, H, W, TC), x_map)],
            out_specs=pl.BlockSpec((1, H, W, TC), o_map)),
        compiler_params=pltpu.CompilerParams(
            dimension_semantics=("parallel", "arbitrary")),
    )(bid, starts, x)


# -----------------------------------------------------------------------------
# Glue ops (plain JAX)
# -----------------------------------------------------------------------------
def upsample_bilinear_x2(x):
    # nn.Upsample(scale_factor=2, mode='bilinear', align_corners=True)
    # TODO(synk): fuse this fixed-pattern interpolation into the following conv kernel.
    N, H, W, C = x.shape
    Ho, Wo = 2 * H, 2 * W
    ys = jnp.arange(Ho, dtype=jnp.float32) * ((H - 1) / max(Ho - 1, 1))
    xs = jnp.arange(Wo, dtype=jnp.float32) * ((W - 1) / max(Wo - 1, 1))
    y0 = jnp.floor(ys).astype(jnp.int32)
    y1 = jnp.minimum(y0 + 1, H - 1)
    wy = (ys - y0.astype(jnp.float32))[None, :, None, None]
    x0 = jnp.floor(xs).astype(jnp.int32)
    x1 = jnp.minimum(x0 + 1, W - 1)
    wx = (xs - x0.astype(jnp.float32))[None, None, :, None]
    xf = x.astype(jnp.float32)
    rows = xf[:, y0] * (1.0 - wy) + xf[:, y1] * wy
    out = rows[:, :, x0] * (1.0 - wx) + rows[:, :, x1] * wx
    return out.astype(x.dtype)


def normalize_pairwise_tfm(pairwise_t_matrix, H, W, discrete_ratio, downsample_rate=1):
    t = pairwise_t_matrix[..., :2, :]            # rows [0, 1]
    t = t[..., jnp.array([0, 1, 3])]             # cols [0, 1, 3] -> (B, L, L, 2, 3)
    t = t.at[..., 0, 1].multiply(H / W)
    t = t.at[..., 1, 0].multiply(W / H)
    t = t.at[..., 0, 2].set(t[..., 0, 2] / (downsample_rate * discrete_ratio * W) * 2)
    t = t.at[..., 1, 2].set(t[..., 1, 2] / (downsample_rate * discrete_ratio * H) * 2)
    return t


# -----------------------------------------------------------------------------
# Deterministic parameter construction
# -----------------------------------------------------------------------------
class ParamGen:
    def __init__(self, seed=0):
        self._key = jax.random.PRNGKey(seed)

    def normal(self, shape, std=1.0):
        self._key, sub = jax.random.split(self._key)
        return std * jax.random.normal(sub, shape, jnp.float32)


def make_conv_w(pg, cout, cin, k):
    std = math.sqrt(2.0 / (cin * k * k))
    w = pg.normal((cout, cin, k, k), std)                    # PyTorch OIHW layout
    w = jnp.transpose(w, (2, 3, 1, 0)).reshape(k * k, cin, cout)
    return w.astype(jnp.bfloat16)


def make_bn(pg, c, eps=1e-5):
    # TODO(synk): BatchNorm folded as eval-mode affine (running stats); training-mode
    # batch statistics are not reproduced.
    gamma = 1.0 + 0.1 * pg.normal((c,))
    beta = 0.1 * pg.normal((c,))
    mean = 0.1 * pg.normal((c,))
    var = 1.0 + 0.1 * jnp.abs(pg.normal((c,)))
    scale = gamma / jnp.sqrt(var + eps)
    bias = beta - mean * scale
    return scale.reshape(1, c), bias.reshape(1, c)


def make_basic_block(pg, cin, cout, stride):
    p = {
        'stride': stride,
        'conv1_w': make_conv_w(pg, cout, cin, 3), 'bn1': make_bn(pg, cout),
        'conv2_w': make_conv_w(pg, cout, cout, 3), 'bn2': make_bn(pg, cout),
    }
    if stride != 1 or cin != cout:
        p['ds_w'] = make_conv_w(pg, cout, cin, 1)
        p['ds_bn'] = make_bn(pg, cout)
    return p


def make_up(pg, cin, cout):
    return {
        'conv1_w': make_conv_w(pg, cout, cin, 3), 'bn1': make_bn(pg, cout),
        'conv2_w': make_conv_w(pg, cout, cout, 3), 'bn2': make_bn(pg, cout),
    }


def make_down(pg):
    return {
        'conv1_w': make_conv_w(pg, 256, 256, 3),
        's1': jnp.ones((1, 256), jnp.float32), 'b1': 0.01 * pg.normal((1, 256)),
        'conv2_w': make_conv_w(pg, 128, 256, 3),
        's2': jnp.ones((1, 128), jnp.float32), 'b2': 0.01 * pg.normal((1, 128)),
    }


def init_params(in_channels, seed=0):
    pg = ParamGen(seed)
    return {
        'conv1_w': make_conv_w(pg, 64, in_channels, 7), 'bn1': make_bn(pg, 64),
        'layer1': [make_basic_block(pg, 64, 64, 1), make_basic_block(pg, 64, 64, 1)],
        'layer2': [make_basic_block(pg, 64, 128, 2), make_basic_block(pg, 128, 128, 1)],
        'layer3': [make_basic_block(pg, 128, 256, 2), make_basic_block(pg, 256, 256, 1)],
        'up_layer1': make_up(pg, 64 + 256, 256),
        'up_layer2': make_up(pg, 128 + 256, 256),
        'down': make_down(pg),
    }


# -----------------------------------------------------------------------------
# Module forward
# -----------------------------------------------------------------------------
def basic_block(x, p):
    s = p['stride']
    out = conv2d(x, p['conv1_w'], *p['bn1'], stride=s, padding=1, relu=True)
    if 'ds_w' in p:
        identity = conv2d(x, p['ds_w'], *p['ds_bn'], stride=s, padding=0, relu=False)
    else:
        identity = x
    return conv2d(out, p['conv2_w'], *p['bn2'], stride=1, padding=1, relu=True,
                  residual=identity)


def up_block(x1, x2, p):
    # Up.forward(x1, x2): upsample x1, pad to x2, cat([x2, x1]), conv-bn-relu x2.
    x1 = upsample_bilinear_x2(x1)
    dy = x2.shape[1] - x1.shape[1]
    dx = x2.shape[2] - x1.shape[2]
    x1 = jnp.pad(x1, ((0, 0), (dy // 2, dy - dy // 2), (dx // 2, dx - dx // 2), (0, 0)))

    # First conv without materializing the channel concat: two (input, weight-slice)
    # pairs accumulated in the same kernel (concat order = [x2, x1]).
    c2 = x2.shape[-1]
    w = p['conv1_w']
    wa, wb = w[:, :c2, :], w[:, c2:, :]
    x2p = jnp.pad(x2, ((0, 0), (1, 1), (1, 1), (0, 0)))
    x1p = jnp.pad(x1, ((0, 0), (1, 1), (1, 1), (0, 0)))
    y = fused_conv([(x2p, wa), (x1p, wb)], *p['bn1'], relu=True)
    y = conv2d(y, p['conv2_w'], *p['bn2'], padding=1, relu=True)
    return y


def down_layer(x, p):
    x = conv2d(x, p['conv1_w'], p['s1'], p['b1'], padding=1, relu=True)
    x = conv2d(x, p['conv2_w'], p['s2'], p['b2'], padding=1, relu=True)
    return x


def bev_encode_ms_fusion(params, x_nchw, record_len, pairwise_t_matrix,
                         discrete_ratio, downsample_rate=1):
    x = jnp.transpose(x_nchw, (0, 2, 3, 1)).astype(jnp.bfloat16)   # NCHW -> NHWC, bf16
    _, H, W, _ = x.shape

    # normalized pairwise transforms (unused by MaxFusion; computed for forward parity)
    _ = normalize_pairwise_tfm(pairwise_t_matrix, H, W, discrete_ratio, downsample_rate)

    x = conv2d(x, params['conv1_w'], *params['bn1'], stride=2, padding=3, relu=True)
    x1 = x
    for blk in params['layer1']:
        x1 = basic_block(x1, blk)
    x2 = x1
    for blk in params['layer2']:
        x2 = basic_block(x2, blk)
    x3 = x2
    for blk in params['layer3']:
        x3 = basic_block(x3, blk)

    def decode(a1, a2, a3):
        y = up_block(a3, a2, params['up_layer2'])
        y = up_block(y, a1, params['up_layer1'])
        return down_layer(y, params['down'])

    x_single = decode(x1, x2, x3)

    x1_f = max_fusion(x1, record_len)
    x2_f = max_fusion(x2, record_len)
    x3_f = max_fusion(x3, record_len)
    x_fuse = decode(x1_f, x2_f, x3_f)

    # back to NCHW f32 to match the PyTorch module's output convention
    return (jnp.transpose(x_single, (0, 3, 1, 2)).astype(jnp.float32),
            jnp.transpose(x_fuse, (0, 3, 1, 2)).astype(jnp.float32))


# -----------------------------------------------------------------------------
if __name__ == "__main__":
    key = jax.random.PRNGKey(0)
    in_channels = 8
    H = W = 16
    N, B, L = 3, 2, 2
    record_len = jnp.array([2, 1], dtype=jnp.int32)   # sum == N, each >= 1

    k_x, k_t = jax.random.split(key)
    x = jax.random.normal(k_x, (N, in_channels, H, W), jnp.float32)
    pairwise_t_matrix = (jnp.tile(jnp.eye(4, dtype=jnp.float32), (B, L, L, 1, 1))
                         + 0.01 * jax.random.normal(k_t, (B, L, L, 4, 4), jnp.float32))

    params = init_params(in_channels, seed=0)

    x_single, x_fuse = bev_encode_ms_fusion(params, x, record_len, pairwise_t_matrix,
                                            discrete_ratio=0.4)
    jax.block_until_ready((x_single, x_fuse))

    assert x_single.shape == (N, 128, H // 2, W // 2)
    assert x_fuse.shape == (B, 128, H // 2, W // 2)
    assert bool(jnp.all(jnp.isfinite(x_single))) and bool(jnp.all(jnp.isfinite(x_fuse)))
    print("KERNEL_OK")
</pallas_src>

<mosaic_0001>
module attributes {stable_mosaic.version = 11 : i64} {
  func.func @_conv_kernel(%arg0: i32, %arg1: i32, %arg2: i32, %arg3: memref<1x11x11x32xbf16, #tpu.memory_space<vmem>>, %arg4: memref<16x32x64xbf16, #tpu.memory_space<vmem>>, %arg5: memref<1x64xf32, #tpu.memory_space<vmem>>, %arg6: memref<1x64xf32, #tpu.memory_space<vmem>>, %arg7: memref<1x8x8x64xbf16, #tpu.memory_space<vmem>>, %arg8: memref<64x64xf32, #tpu.memory_space<vmem>>) attributes {dimension_semantics = [#tpu.dimension_semantics<parallel>, #tpu.dimension_semantics<parallel>, #tpu.dimension_semantics<parallel>], iteration_bounds = array<i64: 3, 1, 1>, scalar_prefetch = 0 : i64, scratch_operands = 1 : i64, tpu.core_type = #tpu.core_type<tc>, window_params = [{transform_indices = @transform_0, window_bounds = array<i64: 1, 11, 11, 32>}, {transform_indices = @transform_1, window_bounds = array<i64: 16, 32, 64>}, {transform_indices = @transform_2, window_bounds = array<i64: 1, 64>}, {transform_indices = @transform_3, window_bounds = array<i64: 1, 64>}, {transform_indices = @transform_4, window_bounds = array<i64: 1, 8, 8, 64>}]} {
    %c8_i32 = arith.constant 8 : i32
    %0 = arith.muli %arg2, %c8_i32 : i32
    %1 = tpu.assume_multiple %0, 8 : i32
    %cst = arith.constant 0.000000e+00 : f32
    %2 = vector.broadcast %cst : f32 to vector<64x64xf32>
    %c0 = arith.constant 0 : index
    %c0_0 = arith.constant 0 : index
    %3 = vector.load %arg8[%c0, %c0_0] : memref<64x64xf32, #tpu.memory_space<vmem>>, vector<64x64xf32>
    tpu.vector_store %arg8[%c0, %c0_0], %2 {strides = array<i32>} : memref<64x64xf32, #tpu.memory_space<vmem>>, vector<64x64xf32>,
    %c0_i32 = arith.constant 0 : i32
    %4 = arith.addi %1, %c0_i32 : i32
    %c0_1 = arith.constant 0 : index
    %5 = arith.index_cast %4 : i32 to index
    %c0_2 = arith.constant 0 : index
    %c0_3 = arith.constant 0 : index
    %6 = vector.load %arg3[%c0_1, %5, %c0_2, %c0_3] : memref<1x11x11x32xbf16, #tpu.memory_space<vmem>>, vector<1x8x11x32xbf16>
    %7 = vector.shape_cast %6 : vector<1x8x11x32xbf16> to vector<8x11x32xbf16>
    %8 = vector.extract_strided_slice %7 {offsets = [0, 0, 0], sizes = [8, 8, 32], strides = [1, 1, 1]} : vector<8x11x32xbf16> to vector<8x8x32xbf16>
    %9 = vector.shape_cast %8 : vector<8x8x32xbf16> to vector<64x32xbf16>
    %c0_4 = arith.constant 0 : index
    %c0_5 = arith.constant 0 : index
    %10 = vector.load %arg8[%c0_4, %c0_5] : memref<64x64xf32, #tpu.memory_space<vmem>>, vector<64x64xf32>
    %c0_6 = arith.constant 0 : index
    %c0_7 = arith.constant 0 : index
    %c0_8 = arith.constant 0 : index
    %11 = vector.load %arg4[%c0_6, %c0_7, %c0_8] : memref<16x32x64xbf16, #tpu.memory_space<vmem>>, vector<1x32x64xbf16>
    %12 = vector.shape_cast %11 : vector<1x32x64xbf16> to vector<32x64xbf16>
    %cst_9 = arith.constant dense<0.000000e+00> : vector<64x64xf32>
    %13 = tpu.matmul %9, %12, %cst_9 {dimension_numbers = #tpu.dot_dimension_numbers<[1], [0], [0], [1], [0, 0, 1, 1], [], []>} : vector<64x32xbf16>, vector<32x64xbf16>, vector<64x64xf32> -> vector<64x64xf32>
    %14 = arith.addf %10, %13 : vector<64x64xf32>
    %c0_10 = arith.constant 0 : index
    %c0_11 = arith.constant 0 : index
    %15 = vector.load %arg8[%c0_10, %c0_11] : memref<64x64xf32, #tpu.memory_space<vmem>>, vector<64x64xf32>
    tpu.vector_store %arg8[%c0_10, %c0_11], %14 {strides = array<i32>} : memref<64x64xf32, #tpu.memory_space<vmem>>, vector<64x64xf32>,
    %16 = vector.extract_strided_slice %7 {offsets = [0, 1, 0], sizes = [8, 8, 32], strides = [1, 1, 1]} : vector<8x11x32xbf16> to vector<8x8x32xbf16>
    %17 = vector.shape_cast %16 : vector<8x8x32xbf16> to vector<64x32xbf16>
    %c0_12 = arith.constant 0 : index
    %c0_13 = arith.constant 0 : index
    %18 = vector.load %arg8[%c0_12, %c0_13] : memref<64x64xf32, #tpu.memory_space<vmem>>, vector<64x64xf32>
    %c1 = arith.constant 1 : index
    %c0_14 = arith.constant 0 : index
    %c0_15 = arith.constant 0 : index
    %19 = vector.load %arg4[%c1, %c0_14, %c0_15] : memref<16x32x64xbf16, #tpu.memory_space<vmem>>, vector<1x32x64xbf16>
    %20 = vector.shape_cast %19 : vector<1x32x64xbf16> to vector<32x64xbf16>
    %cst_16 = arith.constant dense<0.000000e+00> : vector<64x64xf32>
    %21 = tpu.matmul %17, %20, %cst_16 {dimension_numbers = #tpu.dot_dimension_numbers<[1], [0], [0], [1], [0, 0, 1, 1], [], []>} : vector<64x32xbf16>, vector<32x64xbf16>, vector<64x64xf32> -> vector<64x64xf32>
    %22 = arith.addf %18, %21 : vector<64x64xf32>
    %c0_17 = arith.constant 0 : index
    %c0_18 = arith.constant 0 : index
    %23 = vector.load %arg8[%c0_17, %c0_18] : memref<64x64xf32, #tpu.memory_space<vmem>>, vector<64x64xf32>
    tpu.vector_store %arg8[%c0_17, %c0_18], %22 {strides = array<i32>} : memref<64x64xf32, #tpu.memory_space<vmem>>, vector<64x64xf32>,
    %24 = vector.extract_strided_slice %7 {offsets = [0, 2, 0], sizes = [8, 8, 32], strides = [1, 1, 1]} : vector<8x11x32xbf16> to vector<8x8x32xbf16>
    %25 = vector.shape_cast %24 : vector<8x8x32xbf16> to vector<64x32xbf16>
    %c0_19 = arith.constant 0 : index
    %c0_20 = arith.constant 0 : index
    %26 = vector.load %arg8[%c0_19, %c0_20] : memref<64x64xf32, #tpu.memory_space<vmem>>, vector<64x64xf32>
    %c2 = arith.constant 2 : index
    %c0_21 = arith.constant 0 : index
    %c0_22 = arith.constant 0 : index
    %27 = vector.load %arg4[%c2, %c0_21, %c0_22] : memref<16x32x64xbf16, #tpu.memory_space<vmem>>, vector<1x32x64xbf16>
    %28 = vector.shape_cast %27 : vector<1x32x64xbf16> to vector<32x64xbf16>
    %cst_23 = arith.constant dense<0.000000e+00> : vector<64x64xf32>
    %29 = tpu.matmul %25, %28, %cst_23 {dimension_numbers = #tpu.dot_dimension_numbers<[1], [0], [0], [1], [0, 0, 1, 1], [], []>} : vector<64x32xbf16>, vector<32x64xbf16>, vector<64x64xf32> -> vector<64x64xf32>
    %30 = arith.addf %26, %29 : vector<64x64xf32>
    %c0_24 = arith.constant 0 : index
    %c0_25 = arith.constant 0 : index
    %31 = vector.load %arg8[%c0_24, %c0_25] : memref<64x64xf32, #tpu.memory_space<vmem>>, vector<64x64xf32>
    tpu.vector_store %arg8[%c0_24, %c0_25], %30 {strides = array<i32>} : memref<64x64xf32, #tpu.memory_space<vmem>>, vector<64x64xf32>,
    %32 = vector.extract_strided_slice %7 {offsets = [0, 3, 0], sizes = [8, 8, 32], strides = [1, 1, 1]} : vector<8x11x32xbf16> to vector<8x8x32xbf16>
    %33 = vector.shape_cast %32 : vector<8x8x32xbf16> to vector<64x32xbf16>
    %c0_26 = arith.constant 0 : index
    %c0_27 = arith.constant 0 : index
    %34 = vector.load %arg8[%c0_26, %c0_27] : memref<64x64xf32, #tpu.memory_space<vmem>>, vector<64x64xf32>
    %c3 = arith.constant 3 : index
    %c0_28 = arith.constant 0 : index
    %c0_29 = arith.constant 0 : index
    %35 = vector.load %arg4[%c3, %c0_28, %c0_29] : memref<16x32x64xbf16, #tpu.memory_space<vmem>>, vector<1x32x64xbf16>
    %36 = vector.shape_cast %35 : vector<1x32x64xbf16> to vector<32x64xbf16>
    %cst_30 = arith.constant dense<0.000000e+00> : vector<64x64xf32>
    %37 = tpu.matmul %33, %36, %cst_30 {dimension_numbers = #tpu.dot_dimension_numbers<[1], [0], [0], [1], [0, 0, 1, 1], [], []>} : vector<64x32xbf16>, vector<32x64xbf16>, vector<64x64xf32> -> vector<64x64xf32>
    %38 = arith.addf %34, %37 : vector<64x64xf32>
    %c0_31 = arith.constant 0 : index
    %c0_32 = arith.constant 0 : index
    %39 = vector.load %arg8[%c0_31, %c0_32] : memref<64x64xf32, #tpu.memory_space<vmem>>, vector<64x64xf32>
    tpu.vector_store %arg8[%c0_31, %c0_32], %38 {strides = array<i32>} : memref<64x64xf32, #tpu.memory_space<vmem>>, vector<64x64xf32>,
    %c1_i32 = arith.constant 1 : i32
    %40 = arith.addi %1, %c1_i32 : i32
    %c0_33 = arith.constant 0 : index
    %41 = arith.index_cast %40 : i32 to index
    %c0_34 = arith.constant 0 : index
    %c0_35 = arith.constant 0 : index
    %42 = vector.load %arg3[%c0_33, %41, %c0_34, %c0_35] : memref<1x11x11x32xbf16, #tpu.memory_space<vmem>>, vector<1x8x11x32xbf16>
    %43 = vector.shape_cast %42 : vector<1x8x11x32xbf16> to vector<8x11x32xbf16>
    %44 = vector.extract_strided_slice %43 {offsets = [0, 0, 0], sizes = [8, 8, 32], strides = [1, 1, 1]} : vector<8x11x32xbf16> to vector<8x8x32xbf16>
    %45 = vector.shape_cast %44 : vector<8x8x32xbf16> to vector<64x32xbf16>
    %c0_36 = arith.constant 0 : index
    %c0_37 = arith.constant 0 : index
    %46 = vector.load %arg8[%c0_36, %c0_37] : memref<64x64xf32, #tpu.memory_space<vmem>>, vector<64x64xf32>
    %c4 = arith.constant 4 : index
    %c0_38 = arith.constant 0 : index
    %c0_39 = arith.constant 0 : index
    %47 = vector.load %arg4[%c4, %c0_38, %c0_39] : memref<16x32x64xbf16, #tpu.memory_space<vmem>>, vector<1x32x64xbf16>
    %48 = vector.shape_cast %47 : vector<1x32x64xbf16> to vector<32x64xbf16>
    %cst_40 = arith.constant dense<0.000000e+00> : vector<64x64xf32>
    %49 = tpu.matmul %45, %48, %cst_40 {dimension_numbers = #tpu.dot_dimension_numbers<[1], [0], [0], [1], [0, 0, 1, 1], [], []>} : vector<64x32xbf16>, vector<32x64xbf16>, vector<64x64xf32> -> vector<64x64xf32>
    %50 = arith.addf %46, %49 : vector<64x64xf32>
    %c0_41 = arith.constant 0 : index
    %c0_42 = arith.constant 0 : index
    %51 = vector.load %arg8[%c0_41, %c0_42] : memref<64x64xf32, #tpu.memory_space<vmem>>, vector<64x64xf32>
    tpu.vector_store %arg8[%c0_41, %c0_42], %50 {strides = array<i32>} : memref<64x64xf32, #tpu.memory_space<vmem>>, vector<64x64xf32>,
    %52 = vector.extract_strided_slice %43 {offsets = [0, 1, 0], sizes = [8, 8, 32], strides = [1, 1, 1]} : vector<8x11x32xbf16> to vector<8x8x32xbf16>
    %53 = vector.shape_cast %52 : vector<8x8x32xbf16> to vector<64x32xbf16>
    %c0_43 = arith.constant 0 : index
    %c0_44 = arith.constant 0 : index
    %54 = vector.load %arg8[%c0_43, %c0_44] : memref<64x64xf32, #tpu.memory_space<vmem>>, vector<64x64xf32>
    %c5 = arith.constant 5 : index
    %c0_45 = arith.constant 0 : index
    %c0_46 = arith.constant 0 : index
    %55 = vector.load %arg4[%c5, %c0_45, %c0_46] : memref<16x32x64xbf16, #tpu.memory_space<vmem>>, vector<1x32x64xbf16>
    %56 = vector.shape_cast %55 : vector<1x32x64xbf16> to vector<32x64xbf16>
    %cst_47 = arith.constant dense<0.000000e+00> : vector<64x64xf32>
    %57 = tpu.matmul %53, %56, %cst_47 {dimension_numbers = #tpu.dot_dimension_numbers<[1], [0], [0], [1], [0, 0, 1, 1], [], []>} : vector<64x32xbf16>, vector<32x64xbf16>, vector<64x64xf32> -> vector<64x64xf32>
    %58 = arith.addf %54, %57 : vector<64x64xf32>
    %c0_48 = arith.constant 0 : index
    %c0_49 = arith.constant 0 : index
    %59 = vector.load %arg8[%c0_48, %c0_49] : memref<64x64xf32, #tpu.memory_space<vmem>>, vector<64x64xf32>
    tpu.vector_store %arg8[%c0_48, %c0_49], %58 {strides = array<i32>} : memref<64x64xf32, #tpu.memory_space<vmem>>, vector<64x64xf32>,
    %60 = vector.extract_strided_slice %43 {offsets = [0, 2, 0], sizes = [8, 8, 32], strides = [1, 1, 1]} : vector<8x11x32xbf16> to vector<8x8x32xbf16>
    %61 = vector.shape_cast %60 : vector<8x8x32xbf16> to vector<64x32xbf16>
    %c0_50 = arith.constant 0 : index
    %c0_51 = arith.constant 0 : index
    %62 = vector.load %arg8[%c0_50, %c0_51] : memref<64x64xf32, #tpu.memory_space<vmem>>, vector<64x64xf32>
    %c6 = arith.constant 6 : index
    %c0_52 = arith.constant 0 : index
    %c0_53 = arith.constant 0 : index
    %63 = vector.load %arg4[%c6, %c0_52, %c0_53] : memref<16x32x64xbf16, #tpu.memory_space<vmem>>, vector<1x32x64xbf16>
    %64 = vector.shape_cast %63 : vector<1x32x64xbf16> to vector<32x64xbf16>
    %cst_54 = arith.constant dense<0.000000e+00> : vector<64x64xf32>
    %65 = tpu.matmul %61, %64, %cst_54 {dimension_numbers = #tpu.dot_dimension_numbers<[1], [0], [0], [1], [0, 0, 1, 1], [], []>} : vector<64x32xbf16>, vector<32x64xbf16>, vector<64x64xf32> -> vector<64x64xf32>
    %66 = arith.addf %62, %65 : vector<64x64xf32>
    %c0_55 = arith.constant 0 : index
    %c0_56 = arith.constant 0 : index
    %67 = vector.load %arg8[%c0_55, %c0_56] : memref<64x64xf32, #tpu.memory_space<vmem>>, vector<64x64xf32>
    tpu.vector_store %arg8[%c0_55, %c0_56], %66 {strides = array<i32>} : memref<64x64xf32, #tpu.memory_space<vmem>>, vector<64x64xf32>,
    %68 = vector.extract_strided_slice %43 {offsets = [0, 3, 0], sizes = [8, 8, 32], strides = [1, 1, 1]} : vector<8x11x32xbf16> to vector<8x8x32xbf16>
    %69 = vector.shape_cast %68 : vector<8x8x32xbf16> to vector<64x32xbf16>
    %c0_57 = arith.constant 0 : index
    %c0_58 = arith.constant 0 : index
    %70 = vector.load %arg8[%c0_57, %c0_58] : memref<64x64xf32, #tpu.memory_space<vmem>>, vector<64x64xf32>
    %c7 = arith.constant 7 : index
    %c0_59 = arith.constant 0 : index
    %c0_60 = arith.constant 0 : index
    %71 = vector.load %arg4[%c7, %c0_59, %c0_60] : memref<16x32x64xbf16, #tpu.memory_space<vmem>>, vector<1x32x64xbf16>
    %72 = vector.shape_cast %71 : vector<1x32x64xbf16> to vector<32x64xbf16>
    %cst_61 = arith.constant dense<0.000000e+00> : vector<64x64xf32>
    %73 = tpu.matmul %69, %72, %cst_61 {dimension_numbers = #tpu.dot_dimension_numbers<[1], [0], [0], [1], [0, 0, 1, 1], [], []>} : vector<64x32xbf16>, vector<32x64xbf16>, vector<64x64xf32> -> vector<64x64xf32>
    %74 = arith.addf %70, %73 : vector<64x64xf32>
    %c0_62 = arith.constant 0 : index
    %c0_63 = arith.constant 0 : index
    %75 = vector.load %arg8[%c0_62, %c0_63] : memref<64x64xf32, #tpu.memory_space<vmem>>, vector<64x64xf32>
    tpu.vector_store %arg8[%c0_62, %c0_63], %74 {strides = array<i32>} : memref<64x64xf32, #tpu.memory_space<vmem>>, vector<64x64xf32>,
    %c2_i32 = arith.constant 2 : i32
    %76 = arith.addi %1, %c2_i32 : i32
    %c0_64 = arith.constant 0 : index
    %77 = arith.index_cast %76 : i32 to index
    %c0_65 = arith.constant 0 : index
    %c0_66 = arith.constant 0 : index
    %78 = vector.load %arg3[%c0_64, %77, %c0_65, %c0_66] : memref<1x11x11x32xbf16, #tpu.memory_space<vmem>>, vector<1x8x11x32xbf16>
    %79 = vector.shape_cast %78 : vector<1x8x11x32xbf16> to vector<8x11x32xbf16>
    %80 = vector.extract_strided_slice %79 {offsets = [0, 0, 0], sizes = [8, 8, 32], strides = [1, 1, 1]} : vector<8x11x32xbf16> to vector<8x8x32xbf16>
    %81 = vector.shape_cast %80 : vector<8x8x32xbf16> to vector<64x32xbf16>
    %c0_67 = arith.constant 0 : index
    %c0_68 = arith.constant 0 : index
    %82 = vector.load %arg8[%c0_67, %c0_68] : memref<64x64xf32, #tpu.memory_space<vmem>>, vector<64x64xf32>
    %c8 = arith.constant 8 : index
    %c0_69 = arith.constant 0 : index
    %c0_70 = arith.constant 0 : index
    %83 = vector.load %arg4[%c8, %c0_69, %c0_70] : memref<16x32x64xbf16, #tpu.memory_space<vmem>>, vector<1x32x64xbf16>
    %84 = vector.shape_cast %83 : vector<1x32x64xbf16> to vector<32x64xbf16>
    %cst_71 = arith.constant dense<0.000000e+00> : vector<64x64xf32>
    %85 = tpu.matmul %81, %84, %cst_71 {dimension_numbers = #tpu.dot_dimension_numbers<[1], [0], [0], [1], [0, 0, 1, 1], [], []>} : vector<64x32xbf16>, vector<32x64xbf16>, vector<64x64xf32> -> vector<64x64xf32>
    %86 = arith.addf %82, %85 : vector<64x64xf32>
    %c0_72 = arith.constant 0 : index
    %c0_73 = arith.constant 0 : index
    %87 = vector.load %arg8[%c0_72, %c0_73] : memref<64x64xf32, #tpu.memory_space<vmem>>, vector<64x64xf32>
    tpu.vector_store %arg8[%c0_72, %c0_73], %86 {strides = array<i32>} : memref<64x64xf32, #tpu.memory_space<vmem>>, vector<64x64xf32>,
    %88 = vector.extract_strided_slice %79 {offsets = [0, 1, 0], sizes = [8, 8, 32], strides = [1, 1, 1]} : vector<8x11x32xbf16> to vector<8x8x32xbf16>
    %89 = vector.shape_cast %88 : vector<8x8x32xbf16> to vector<64x32xbf16>
    %c0_74 = arith.constant 0 : index
    %c0_75 = arith.constant 0 : index
    %90 = vector.load %arg8[%c0_74, %c0_75] : memref<64x64xf32, #tpu.memory_space<vmem>>, vector<64x64xf32>
    %c9 = arith.constant 9 : index
    %c0_76 = arith.constant 0 : index
    %c0_77 = arith.constant 0 : index
    %91 = vector.load %arg4[%c9, %c0_76, %c0_77] : memref<16x32x64xbf16, #tpu.memory_space<vmem>>, vector<1x32x64xbf16>
    %92 = vector.shape_cast %91 : vector<1x32x64xbf16> to vector<32x64xbf16>
    %cst_78 = arith.constant dense<0.000000e+00> : vector<64x64xf32>
    %93 = tpu.matmul %89, %92, %cst_78 {dimension_numbers = #tpu.dot_dimension_numbers<[1], [0], [0], [1], [0, 0, 1, 1], [], []>} : vector<64x32xbf16>, vector<32x64xbf16>, vector<64x64xf32> -> vector<64x64xf32>
    %94 = arith.addf %90, %93 : vector<64x64xf32>
    %c0_79 = arith.constant 0 : index
    %c0_80 = arith.constant 0 : index
    %95 = vector.load %arg8[%c0_79, %c0_80] : memref<64x64xf32, #tpu.memory_space<vmem>>, vector<64x64xf32>
    tpu.vector_store %arg8[%c0_79, %c0_80], %94 {strides = array<i32>} : memref<64x64xf32, #tpu.memory_space<vmem>>, vector<64x64xf32>,
    %96 = vector.extract_strided_slice %79 {offsets = [0, 2, 0], sizes = [8, 8, 32], strides = [1, 1, 1]} : vector<8x11x32xbf16> to vector<8x8x32xbf16>
    %97 = vector.shape_cast %96 : vector<8x8x32xbf16> to vector<64x32xbf16>
    %c0_81 = arith.constant 0 : index
    %c0_82 = arith.constant 0 : index
    %98 = vector.load %arg8[%c0_81, %c0_82] : memref<64x64xf32, #tpu.memory_space<vmem>>, vector<64x64xf32>
    %c10 = arith.constant 10 : index
    %c0_83 = arith.constant 0 : index
    %c0_84 = arith.constant 0 : index
    %99 = vector.load %arg4[%c10, %c0_83, %c0_84] : memref<16x32x64xbf16, #tpu.memory_space<vmem>>, vector<1x32x64xbf16>
    %100 = vector.shape_cast %99 : vector<1x32x64xbf16> to vector<32x64xbf16>
    %cst_85 = arith.constant dense<0.000000e+00> : vector<64x64xf32>
    %101 = tpu.matmul %97, %100, %cst_85 {dimension_numbers = #tpu.dot_dimension_numbers<[1], [0], [0], [1], [0, 0, 1, 1], [], []>} : vector<64x32xbf16>, vector<32x64xbf16>, vector<64x64xf32> -> vector<64x64xf32>
    %102 = arith.addf %98, %101 : vector<64x64xf32>
    %c0_86 = arith.constant 0 : index
    %c0_87 = arith.constant 0 : index
    %103 = vector.load %arg8[%c0_86, %c0_87] : memref<64x64xf32, #tpu.memory_space<vmem>>, vector<64x64xf32>
    tpu.vector_store %arg8[%c0_86, %c0_87], %102 {strides = array<i32>} : memref<64x64xf32, #tpu.memory_space<vmem>>, vector<64x64xf32>,
    %104 = vector.extract_strided_slice %79 {offsets = [0, 3, 0], sizes = [8, 8, 32], strides = [1, 1, 1]} : vector<8x11x32xbf16> to vector<8x8x32xbf16>
    %105 = vector.shape_cast %104 : vector<8x8x32xbf16> to vector<64x32xbf16>
    %c0_88 = arith.constant 0 : index
    %c0_89 = arith.constant 0 : index
    %106 = vector.load %arg8[%c0_88, %c0_89] : memref<64x64xf32, #tpu.memory_space<vmem>>, vector<64x64xf32>
    %c11 = arith.constant 11 : index
    %c0_90 = arith.constant 0 : index
    %c0_91 = arith.constant 0 : index
    %107 = vector.load %arg4[%c11, %c0_90, %c0_91] : memref<16x32x64xbf16, #tpu.memory_space<vmem>>, vector<1x32x64xbf16>
    %108 = vector.shape_cast %107 : vector<1x32x64xbf16> to vector<32x64xbf16>
    %cst_92 = arith.constant dense<0.000000e+00> : vector<64x64xf32>
    %109 = tpu.matmul %105, %108, %cst_92 {dimension_numbers = #tpu.dot_dimension_numbers<[1], [0], [0], [1], [0, 0, 1, 1], [], []>} : vector<64x32xbf16>, vector<32x64xbf16>, vector<64x64xf32> -> vector<64x64xf32>
    %110 = arith.addf %106, %109 : vector<64x64xf32>
    %c0_93 = arith.constant 0 : index
    %c0_94 = arith.constant 0 : index
    %111 = vector.load %arg8[%c0_93, %c0_94] : memref<64x64xf32, #tpu.memory_space<vmem>>, vector<64x64xf32>
    tpu.vector_store %arg8[%c0_93, %c0_94], %110 {strides = array<i32>} : memref<64x64xf32, #tpu.memory_space<vmem>>, vector<64x64xf32>,
    %c3_i32 = arith.constant 3 : i32
    %112 = arith.addi %1, %c3_i32 : i32
    %c0_95 = arith.constant 0 : index
    %113 = arith.index_cast %112 : i32 to index
    %c0_96 = arith.constant 0 : index
    %c0_97 = arith.constant 0 : index
    %114 = vector.load %arg3[%c0_95, %113, %c0_96, %c0_97] : memref<1x11x11x32xbf16, #tpu.memory_space<vmem>>, vector<1x8x11x32xbf16>
    %115 = vector.shape_cast %114 : vector<1x8x11x32xbf16> to vector<8x11x32xbf16>
    %116 = vector.extract_strided_slice %115 {offsets = [0, 0, 0], sizes = [8, 8, 32], strides = [1, 1, 1]} : vector<8x11x32xbf16> to vector<8x8x32xbf16>
    %117 = vector.shape_cast %116 : vector<8x8x32xbf16> to vector<64x32xbf16>
    %c0_98 = arith.constant 0 : index
    %c0_99 = arith.constant 0 : index
    %118 = vector.load %arg8[%c0_98, %c0_99] : memref<64x64xf32, #tpu.memory_space<vmem>>, vector<64x64xf32>
    %c12 = arith.constant 12 : index
    %c0_100 = arith.constant 0 : index
    %c0_101 = arith.constant 0 : index
    %119 = vector.load %arg4[%c12, %c0_100, %c0_101] : memref<16x32x64xbf16, #tpu.memory_space<vmem>>, vector<1x32x64xbf16>
    %120 = vector.shape_cast %119 : vector<1x32x64xbf16> to vector<32x64xbf16>
    %cst_102 = arith.constant dense<0.000000e+00> : vector<64x64xf32>
    %121 = tpu.matmul %117, %120, %cst_102 {dimension_numbers = #tpu.dot_dimension_numbers<[1], [0], [0], [1], [0, 0, 1, 1], [], []>} : vector<64x32xbf16>, vector<32x64xbf16>, vector<64x64xf32> -> vector<64x64xf32>
    %122 = arith.addf %118, %121 : vector<64x64xf32>
    %c0_103 = arith.constant 0 : index
    %c0_104 = arith.constant 0 : index
    %123 = vector.load %arg8[%c0_103, %c0_104] : memref<64x64xf32, #tpu.memory_space<vmem>>, vector<64x64xf32>
    tpu.vector_store %arg8[%c0_103, %c0_104], %122 {strides = array<i32>} : memref<64x64xf32, #tpu.memory_space<vmem>>, vector<64x64xf32>,
    %124 = vector.extract_strided_slice %115 {offsets = [0, 1, 0], sizes = [8, 8, 32], strides = [1, 1, 1]} : vector<8x11x32xbf16> to vector<8x8x32xbf16>
    %125 = vector.shape_cast %124 : vector<8x8x32xbf16> to vector<64x32xbf16>
    %c0_105 = arith.constant 0 : index
    %c0_106 = arith.constant 0 : index
    %126 = vector.load %arg8[%c0_105, %c0_106] : memref<64x64xf32, #tpu.memory_space<vmem>>, vector<64x64xf32>
    %c13 = arith.constant 13 : index
    %c0_107 = arith.constant 0 : index
    %c0_108 = arith.constant 0 : index
    %127 = vector.load %arg4[%c13, %c0_107, %c0_108] : memref<16x32x64xbf16, #tpu.memory_space<vmem>>, vector<1x32x64xbf16>
    %128 = vector.shape_cast %127 : vector<1x32x64xbf16> to vector<32x64xbf16>
    %cst_109 = arith.constant dense<0.000000e+00> : vector<64x64xf32>
    %129 = tpu.matmul %125, %128, %cst_109 {dimension_numbers = #tpu.dot_dimension_numbers<[1], [0], [0], [1], [0, 0, 1, 1], [], []>} : vector<64x32xbf16>, vector<32x64xbf16>, vector<64x64xf32> -> vector<64x64xf32>
    %130 = arith.addf %126, %129 : vector<64x64xf32>
    %c0_110 = arith.constant 0 : index
    %c0_111 = arith.constant 0 : index
    %131 = vector.load %arg8[%c0_110, %c0_111] : memref<64x64xf32, #tpu.memory_space<vmem>>, vector<64x64xf32>
    tpu.vector_store %arg8[%c0_110, %c0_111], %130 {strides = array<i32>} : memref<64x64xf32, #tpu.memory_space<vmem>>, vector<64x64xf32>,
    %132 = vector.extract_strided_slice %115 {offsets = [0, 2, 0], sizes = [8, 8, 32], strides = [1, 1, 1]} : vector<8x11x32xbf16> to vector<8x8x32xbf16>
    %133 = vector.shape_cast %132 : vector<8x8x32xbf16> to vector<64x32xbf16>
    %c0_112 = arith.constant 0 : index
    %c0_113 = arith.constant 0 : index
    %134 = vector.load %arg8[%c0_112, %c0_113] : memref<64x64xf32, #tpu.memory_space<vmem>>, vector<64x64xf32>
    %c14 = arith.constant 14 : index
    %c0_114 = arith.constant 0 : index
    %c0_115 = arith.constant 0 : index
    %135 = vector.load %arg4[%c14, %c0_114, %c0_115] : memref<16x32x64xbf16, #tpu.memory_space<vmem>>, vector<1x32x64xbf16>
    %136 = vector.shape_cast %135 : vector<1x32x64xbf16> to vector<32x64xbf16>
    %cst_116 = arith.constant dense<0.000000e+00> : vector<64x64xf32>
    %137 = tpu.matmul %133, %136, %cst_116 {dimension_numbers = #tpu.dot_dimension_numbers<[1], [0], [0], [1], [0, 0, 1, 1], [], []>} : vector<64x32xbf16>, vector<32x64xbf16>, vector<64x64xf32> -> vector<64x64xf32>
    %138 = arith.addf %134, %137 : vector<64x64xf32>
    %c0_117 = arith.constant 0 : index
    %c0_118 = arith.constant 0 : index
    %139 = vector.load %arg8[%c0_117, %c0_118] : memref<64x64xf32, #tpu.memory_space<vmem>>, vector<64x64xf32>
    tpu.vector_store %arg8[%c0_117, %c0_118], %138 {strides = array<i32>} : memref<64x64xf32, #tpu.memory_space<vmem>>, vector<64x64xf32>,
    %140 = vector.extract_strided_slice %115 {offsets = [0, 3, 0], sizes = [8, 8, 32], strides = [1, 1, 1]} : vector<8x11x32xbf16> to vector<8x8x32xbf16>
    %141 = vector.shape_cast %140 : vector<8x8x32xbf16> to vector<64x32xbf16>
    %c0_119 = arith.constant 0 : index
    %c0_120 = arith.constant 0 : index
    %142 = vector.load %arg8[%c0_119, %c0_120] : memref<64x64xf32, #tpu.memory_space<vmem>>, vector<64x64xf32>
    %c15 = arith.constant 15 : index
    %c0_121 = arith.constant 0 : index
    %c0_122 = arith.constant 0 : index
    %143 = vector.load %arg4[%c15, %c0_121, %c0_122] : memref<16x32x64xbf16, #tpu.memory_space<vmem>>, vector<1x32x64xbf16>
    %144 = vector.shape_cast %143 : vector<1x32x64xbf16> to vector<32x64xbf16>
    %cst_123 = arith.constant dense<0.000000e+00> : vector<64x64xf32>
    %145 = tpu.matmul %141, %144, %cst_123 {dimension_numbers = #tpu.dot_dimension_numbers<[1], [0], [0], [1], [0, 0, 1, 1], [], []>} : vector<64x32xbf16>, vector<32x64xbf16>, vector<64x64xf32> -> vector<64x64xf32>
    %146 = arith.addf %142, %145 : vector<64x64xf32>
    %c0_124 = arith.constant 0 : index
    %c0_125 = arith.constant 0 : index
    %147 = vector.load %arg8[%c0_124, %c0_125] : memref<64x64xf32, #tpu.memory_space<vmem>>, vector<64x64xf32>
    tpu.vector_store %arg8[%c0_124, %c0_125], %146 {strides = array<i32>} : memref<64x64xf32, #tpu.memory_space<vmem>>, vector<64x64xf32>,
    %c0_126 = arith.constant 0 : index
    %c0_127 = arith.constant 0 : index
    %148 = vector.load %arg8[%c0_126, %c0_127] : memref<64x64xf32, #tpu.memory_space<vmem>>, vector<64x64xf32>
    %c0_128 = arith.constant 0 : index
    %c0_129 = arith.constant 0 : index
    %149 = vector.load %arg5[%c0_128, %c0_129] : memref<1x64xf32, #tpu.memory_space<vmem>>, vector<1x64xf32>
    %150 = vector.broadcast %149 : vector<1x64xf32> to vector<64x64xf32>
    %151 = arith.mulf %148, %150 : vector<64x64xf32>
    %c0_130 = arith.constant 0 : index
    %c0_131 = arith.constant 0 : index
    %152 = vector.load %arg6[%c0_130, %c0_131] : memref<1x64xf32, #tpu.memory_space<vmem>>, vector<1x64xf32>
    %153 = vector.broadcast %152 : vector<1x64xf32> to vector<64x64xf32>
    %154 = arith.addf %151, %153 : vector<64x64xf32>
    %cst_132 = arith.constant 0.000000e+00 : f32
    %155 = vector.broadcast %cst_132 : f32 to vector<64x64xf32>
    %156 = arith.maximumf %154, %155 : vector<64x64xf32>
    %157 = vector.shape_cast %156 : vector<64x64xf32> to vector<8x8x64xf32>
    %158 = arith.truncf %157 : vector<8x8x64xf32> to vector<8x8x64xbf16>
    %c0_133 = arith.constant 0 : index
    %c0_134 = arith.constant 0 : index
    %c0_135 = arith.constant 0 : index
    %c0_136 = arith.constant 0 : index
    %159 = vector.load %arg7[%c0_133, %c0_134, %c0_135, %c0_136] : memref<1x8x8x64xbf16, #tpu.memory_space<vmem>>, vector<1x8x8x64xbf16>
    %160 = vector.shape_cast %159 : vector<1x8x8x64xbf16> to vector<8x8x64xbf16>
    %161 = vector.shape_cast %158 : vector<8x8x64xbf16> to vector<1x8x8x64xbf16>
    tpu.vector_store %arg7[%c0_133, %c0_134, %c0_135, %c0_136], %161 {strides = array<i32>} : memref<1x8x8x64xbf16, #tpu.memory_space<vmem>>, vector<1x8x8x64xbf16>,
    return
  }
  func.func @transform_0(%arg0: i32, %arg1: i32, %arg2: i32) -> (i32, i32, i32, i32) {
    %c0_i32 = arith.constant 0 : i32
    %c0_i32_0 = arith.constant 0 : i32
    %c0_i32_1 = arith.constant 0 : i32
    %c0_i32_2 = arith.constant 0 : i32
    return %arg0, %c0_i32, %c0_i32_0, %c0_i32_1 : i32, i32, i32, i32
  }
  func.func @transform_1(%arg0: i32, %arg1: i32, %arg2: i32) -> (i32, i32, i32) {
    %c0_i32 = arith.constant 0 : i32
    %c0_i32_0 = arith.constant 0 : i32
    %c0_i32_1 = arith.constant 0 : i32
    return %c0_i32, %c0_i32_0, %arg1 : i32, i32, i32
  }
  func.func @transform_2(%arg0: i32, %arg1: i32, %arg2: i32) -> (i32, i32) {
    %c0_i32 = arith.constant 0 : i32
    %c0_i32_0 = arith.constant 0 : i32
    return %c0_i32, %arg1 : i32, i32
  }
  func.func @transform_3(%arg0: i32, %arg1: i32, %arg2: i32) -> (i32, i32) {
    %c0_i32 = arith.constant 0 : i32
    %c0_i32_0 = arith.constant 0 : i32
    return %c0_i32, %arg1 : i32, i32
  }
  func.func @transform_4(%arg0: i32, %arg1: i32, %arg2: i32) -> (i32, i32, i32, i32) {
    %c0_i32 = arith.constant 0 : i32
    %c0_i32_0 = arith.constant 0 : i32
    return %arg0, %arg2, %c0_i32, %arg1 : i32, i32, i32, i32
  }
}

</mosaic_0001>

<llo_original>
// kernel: tpu_custom_call.1
$region0: #{tpu_custom_call.1}
  #allocation0 [shape = 'u32[]', space=smem, size = 0x4, offset = 0x4, fixed_abs, tag = 'smem constant byte address 0x4 - core index']
  #allocation1 [shape = 'u32[144,128]{1,0:T(1,128)}', space=vmem, size = 0x12000, scoped, tag = 'internal scratch']
  #allocation2 [shape = 'f32[64,64]{1,0:T(8,128)}', space=vmem, size = 0x8000, scoped, tag = 'scratch operand']
  %s0 = inlined_call_operand.vmem [shape: bf16[3,11,11,32], index: 0, kind: input, shape index: {}]
  %s1 = inlined_call_operand.vmem [shape: bf16[16,32,64], index: 1, kind: input, shape index: {}]
  %s2 = inlined_call_operand.vmem [shape: f32[1,64], index: 2, kind: input, shape index: {}]
  %s3 = inlined_call_operand.vmem [shape: f32[1,64], index: 3, kind: input, shape index: {}]
  %s4 = inlined_call_operand.hbm [shape: bf16[3,8,8,64], index: 4, kind: output, shape index: {}]
  %s5 = sld [smem:[#allocation0]]
  $region49: #{tpu_custom_call.1} parent=0
    _
  %s7 = ssub.s32 1, %s5
  %s8 = scalar_select 0, %s7, %s5
  $region1: #{tpu_custom_call.1} parent=0
    #allocation3 [shape = 'u8[32768]{0}', space=vmem, size = 0x8000, scoped, tag = 'output window, operand 0']
    #allocation4 [shape = 's32[2]{0}', space=sflag, size = 0x8, scoped, tag = 'scoped memory for tpu_custom_call.1']
    %9 = vsyncpa [#allocation4], 0
    %s10 = scalar_lea.sflag [#allocation4], 1
    %11 = vsyncpa %s10, 0
    loop: start=0, step=1, limit=5
    $region2: #{tpu_custom_call.1} parent=1 // loop_pre_header
      _
    $region3: #{tpu_custom_call.1} parent=1 // loop_header
      %s13 = sphi 0, %s17
      %p14 = scmp.ge.s32.totalorder %s13, 5
      %s20 = sphi 0, %s39
      %s21 = sphi 0, %s35
      %s22 = sphi 0, %s31
      %s23 = sphi 0, %s20
      %s24 = sphi 0, %s21
      %s25 = sphi 0, %s22
      %s26 = sphi 0, %s23
      %s27 = sphi 0, %s24
      %s28 = sphi 0, %s25
      %s42 = sphi 0, %s44
      %s45 = sphi 0, %s42
      %s46 = sphi 0, %s45
      %s62 = sphi 0, %s46
      %s68 = sphi 0, %s70
      %s71 = sphi 0, %s68
      %s72 = sphi 0, %s71
      %s88 = sphi 0, %s72
      %s94 = sphi 0, %s96
      %s97 = sphi 0, %s94
      %s98 = sphi 0, %s97
      %s114 = sphi 0, %s98
      %s120 = sphi 0, %s122
      %s123 = sphi 0, %s120
      %s124 = sphi 0, %s123
      %s140 = sphi 0, %s124
      %s150 = sphi 0, %s152
      %s153 = sphi 0, %s150
      %s154 = sphi 0, %s153
      %s170 = sphi 0, %s154
    $region4: #{tpu_custom_call.1} parent=1 // loop_header_branch
      %16 = sbr.rel (%p14) target = $region8
    $region5: #{tpu_custom_call.1} parent=1 // loop_body
      %s18 = ssub.s32 %s13, 1
      %s19 = ssub.s32 %s13, 2
      %s29 = sadd.s32 1, %s22
      %p30 = scmp.ge.s32.totalorder %s29, 1
      %s31 = scalar_select %p30, 0, %s29
      %s32 = sadd.s32 1, %s21
      %s33 = scalar_select %p30, %s32, %s21
      %p34 = scmp.ge.s32.totalorder %s33, 1
      %s35 = scalar_select %p34, 0, %s33
      %s36 = sadd.s32 1, %s20
      %s37 = scalar_select %p34, %s36, %s20
      %p38 = scmp.ge.s32.totalorder %s37, 3
      %s39 = scalar_select %p38, 0, %s37
      %s40 = ssub.s32 %s20, %s39
      %p41 = scmp.eq.s32.totalorder %s40, 0
      %s43 = sadd.s32 %s42, 1
      %s44 = scalar_select %p41, %s42, %s43
      %p47 = pneg %p41
      %p48 = scmp.eq.s32.totalorder %s13, 2
      %p49 = por %p47, %p48
      %p50 = scmp.ne.s32.totalorder %s42, %s45
      %p51 = scmp.eq.s32.totalorder %s13, 0
      %p52 = por %p50, %p51
      %p53 = scmp.ne.s32.totalorder %s42, %s45
      %p54 = scmp.eq.s32.totalorder %s18, 2
      %p55 = por %p53, %p54
      %p56 = scmp.ne.s32.totalorder %s45, %s46
      %p57 = scmp.eq.s32.totalorder %s18, 0
      %p58 = por %p56, %p57
      %p59 = scmp.ne.s32.totalorder %s45, %s46
      %p60 = scmp.eq.s32.totalorder %s19, 2
      %p61 = por %p59, %p60
      %p63 = scmp.ne.s32.totalorder %s46, %s62
      %p64 = scmp.eq.s32.totalorder %s19, 0
      %p65 = por %p63, %p64
      %s66 = ssub.s32 %s21, %s35
      %p67 = scmp.eq.s32.totalorder %s66, 0
      %s69 = sadd.s32 %s68, 1
      %s70 = scalar_select %p67, %s68, %s69
      %p73 = pneg %p67
      %p74 = scmp.eq.s32.totalorder %s13, 2
      %p75 = por %p73, %p74
      %p76 = scmp.ne.s32.totalorder %s68, %s71
      %p77 = scmp.eq.s32.totalorder %s13, 0
      %p78 = por %p76, %p77
      %p79 = scmp.ne.s32.totalorder %s68, %s71
      %p80 = scmp.eq.s32.totalorder %s18, 2
      %p81 = por %p79, %p80
      %p82 = scmp.ne.s32.totalorder %s71, %s72
      %p83 = scmp.eq.s32.totalorder %s18, 0
      %p84 = por %p82, %p83
      %p85 = scmp.ne.s32.totalorder %s71, %s72
      %p86 = scmp.eq.s32.totalorder %s19, 2
      %p87 = por %p85, %p86
      %p89 = scmp.ne.s32.totalorder %s72, %s88
      %p90 = scmp.eq.s32.totalorder %s19, 0
      %p91 = por %p89, %p90
      %s92 = ssub.s32 %s21, %s35
      %p93 = scmp.eq.s32.totalorder %s92, 0
      %s95 = sadd.s32 %s94, 1
      %s96 = scalar_select %p93, %s94, %s95
      %p99 = pneg %p93
      %p100 = scmp.eq.s32.totalorder %s13, 2
      %p101 = por %p99, %p100
      %p102 = scmp.ne.s32.totalorder %s94, %s97
      %p103 = scmp.eq.s32.totalorder %s13, 0
      %p104 = por %p102, %p103
      %p105 = scmp.ne.s32.totalorder %s94, %s97
      %p106 = scmp.eq.s32.totalorder %s18, 2
      %p107 = por %p105, %p106
      %p108 = scmp.ne.s32.totalorder %s97, %s98
      %p109 = scmp.eq.s32.totalorder %s18, 0
      %p110 = por %p108, %p109
      %p111 = scmp.ne.s32.totalorder %s97, %s98
      %p112 = scmp.eq.s32.totalorder %s19, 2
      %p113 = por %p111, %p112
      %p115 = scmp.ne.s32.totalorder %s98, %s114
      %p116 = scmp.eq.s32.totalorder %s19, 0
      %p117 = por %p115, %p116
      %s118 = ssub.s32 %s21, %s35
      %p119 = scmp.eq.s32.totalorder %s118, 0
      %s121 = sadd.s32 %s120, 1
      %s122 = scalar_select %p119, %s120, %s121
      %p125 = pneg %p119
      %p126 = scmp.eq.s32.totalorder %s13, 2
      %p127 = por %p125, %p126
      %p128 = scmp.ne.s32.totalorder %s120, %s123
      %p129 = scmp.eq.s32.totalorder %s13, 0
      %p130 = por %p128, %p129
      %p131 = scmp.ne.s32.totalorder %s120, %s123
      %p132 = scmp.eq.s32.totalorder %s18, 2
      %p133 = por %p131, %p132
      %p134 = scmp.ne.s32.totalorder %s123, %s124
      %p135 = scmp.eq.s32.totalorder %s18, 0
      %p136 = por %p134, %p135
      %p137 = scmp.ne.s32.totalorder %s123, %s124
      %p138 = scmp.eq.s32.totalorder %s19, 2
      %p139 = por %p137, %p138
      %p141 = scmp.ne.s32.totalorder %s124, %s140
      %p142 = scmp.eq.s32.totalorder %s19, 0
      %p143 = por %p141, %p142
      %s144 = ssub.s32 %s20, %s39
      %s145 = ssub.s32 %s22, %s31
      %s146 = sor.u32 %s144, %s145
      %s147 = ssub.s32 %s21, %s35
      %s148 = sor.u32 %s146, %s147
      %p149 = scmp.eq.s32.totalorder %s148, 0
      %s151 = sadd.s32 %s150, 1
      %s152 = scalar_select %p149, %s150, %s151
      %p155 = pneg %p149
      %p156 = scmp.eq.s32.totalorder %s13, 2
      %p157 = por %p155, %p156
      %p158 = scmp.ne.s32.totalorder %s150, %s153
      %p159 = scmp.eq.s32.totalorder %s13, 0
      %p160 = por %p158, %p159
      %p161 = scmp.ne.s32.totalorder %s150, %s153
      %p162 = scmp.eq.s32.totalorder %s18, 2
      %p163 = por %p161, %p162
      %p164 = scmp.ne.s32.totalorder %s153, %s154
      %p165 = scmp.eq.s32.totalorder %s18, 0
      %p166 = por %p164, %p165
      %p167 = scmp.ne.s32.totalorder %s153, %s154
      %p168 = scmp.eq.s32.totalorder %s19, 2
      %p169 = por %p167, %p168
      %p171 = scmp.ne.s32.totalorder %s154, %s170
      %p172 = scmp.eq.s32.totalorder %s19, 0
      %p173 = por %p171, %p172
      %p174 = scmp.le.s32.totalorder 1, %s13
      %p175 = scmp.lt.s32.totalorder %s13, 4
      %p176 = pnand %p174, %p175
      %p177 = pneg %p176
      // Predicated region
      $region9: #{tpu_custom_call.1} parent=5 // pred_check
        _
      $region10: #{tpu_custom_call.1} parent=5 // pred_check_branch
        %179 = sbr.rel (%p176) target = $region12
      $region11: #{tpu_custom_call.1} parent=5 // pred_region
        %s180 = ssub.s32 %s13, 1
        // Predicated region
        $region13: #{tpu_custom_call.1} parent=11 // pred_check
          %p181 = pneg %p84
        $region14: #{tpu_custom_call.1} parent=11 // pred_check_branch
          %183 = sbr.rel (%p181) target = $region16
        $region15: #{tpu_custom_call.1} parent=11 // pred_region
          %p184 = scmp.lt.s32.totalorder %s24, 0
          %s185 = scalar_select %p184, %s24, 0
          %s186 = smul.addr %s185, 4
          %s187 = scalar_lea.vmem %s1, %s186
        $region16: #{tpu_custom_call.1} parent=11 // pred_fallthru
          _
        // Predicated region
        $region17: #{tpu_custom_call.1} parent=11 // pred_check
          %p188 = pneg %p110
        $region18: #{tpu_custom_call.1} parent=11 // pred_check_branch
          %190 = sbr.rel (%p188) target = $region20
        $region19: #{tpu_custom_call.1} parent=11 // pred_region
          %p191 = scmp.lt.s32.totalorder %s24, 0
          %s192 = scalar_select %p191, %s24, 0
          %s193 = scalar_lea.vmem %s2, %s192
        $region20: #{tpu_custom_call.1} parent=11 // pred_fallthru
          _
        // Predicated region
        $region21: #{tpu_custom_call.1} parent=11 // pred_check
          %p194 = pneg %p136
        $region22: #{tpu_custom_call.1} parent=11 // pred_check_branch
          %196 = sbr.rel (%p194) target = $region24
        $region23: #{tpu_custom_call.1} parent=11 // pred_region
          %p197 = scmp.lt.s32.totalorder %s24, 0
          %s198 = scalar_select %p197, %s24, 0
          %s199 = scalar_lea.vmem %s3, %s198
        $region24: #{tpu_custom_call.1} parent=11 // pred_fallthru
          _
      $region12: #{tpu_custom_call.1} parent=5 // pred_fallthru
        _
      %p200 = scmp.lt.s32.totalorder %s13, 3
      // Predicated region
      $region25: #{tpu_custom_call.1} parent=5 // pred_check
        %p201 = pneg %p200
      $region26: #{tpu_custom_call.1} parent=5 // pred_check_branch
        %203 = sbr.rel (%p201) target = $region28
      $region27: #{tpu_custom_call.1} parent=5 // pred_region
        // Predicated region
        $region29: #{tpu_custom_call.1} parent=27 // pred_check
          %p204 = pneg %p52
        $region30: #{tpu_custom_call.1} parent=27 // pred_check_branch
          %206 = sbr.rel (%p204) target = $region32
        $region31: #{tpu_custom_call.1} parent=27 // pred_region
          %p207 = scmp.lt.s32.totalorder %s20, 2
          %s208 = scalar_select %p207, %s20, 2
          %s209 = smul.addr %s208, 22
          %s210 = smul.addr %s209, 4
          %s211 = scalar_lea.vmem %s0, %s210
        $region32: #{tpu_custom_call.1} parent=27 // pred_fallthru
          _
      $region28: #{tpu_custom_call.1} parent=5 // pred_fallthru
        _
      %p212 = scmp.le.s32.totalorder 1, %s13
      %p213 = scmp.lt.s32.totalorder %s13, 4
      %p214 = pnand %p212, %p213
      %p215 = pneg %p214
      // Predicated region
      $region33: #{tpu_custom_call.1} parent=5 // pred_check
        _
      $region34: #{tpu_custom_call.1} parent=5 // pred_check_branch
        %217 = sbr.rel (%p214) target = $region36
      $region35: #{tpu_custom_call.1} parent=5 // pred_region
        %s218 = ssub.s32 %s13, 1
        %p219 = scmp.lt.s32.totalorder %s23, 2
        %s220 = scalar_select %p219, %s23, 2
        %s221 = smul.addr %s220, 22
        %s222 = smul.addr %s221, 4
        %s223 = scalar_lea.vmem %s0, %s222
        %p224 = pneg %p58
        %p225 = pneg %p55
        %p226 = scmp.lt.s32.totalorder %s24, 0
        %s227 = scalar_select %p226, %s24, 0
        %s228 = smul.addr %s227, 4
        %s229 = scalar_lea.vmem %s1, %s228
        %p230 = pneg %p84
        %p231 = pneg %p81
        %p232 = scmp.lt.s32.totalorder %s24, 0
        %s233 = scalar_select %p232, %s24, 0
        %s234 = scalar_lea.vmem %s2, %s233
        %p235 = pneg %p110
        %p236 = pneg %p107
        %p237 = scmp.lt.s32.totalorder %s24, 0
        %s238 = scalar_select %p237, %s24, 0
        %s239 = scalar_lea.vmem %s3, %s238
        %p240 = pneg %p136
        %p241 = pneg %p133
        %p242 = pneg %p166
        %p243 = pneg %p163
        %s244 = sand.u32 %s153, 1
        %s245 = scalar_lea.sflag [#allocation4], %s244
        %s246 = sand.u32 %s153, 1
        %s247 = smul.addr %s246, 32
        %s248 = scalar_lea.vmem [#allocation3], %s247
        %p249 = scmp.lt.s32.totalorder %s23, 2
        %s250 = scalar_select %p249, %s23, 2
        %s251 = smul.addr %s250, 22
        %s252 = smul.addr %s251, 4
        %s253 = scalar_lea.vmem %s0, %s252
        %p254 = scmp.lt.s32.totalorder %s24, 0
        %s255 = scalar_select %p254, %s24, 0
        %s256 = smul.addr %s255, 4
        %s257 = scalar_lea.vmem %s1, %s256
        %p258 = scmp.lt.s32.totalorder %s24, 0
        %s259 = scalar_select %p258, %s24, 0
        %s260 = scalar_lea.vmem %s2, %s259
        %p261 = scmp.lt.s32.totalorder %s24, 0
        %s262 = scalar_select %p261, %s24, 0
        %s263 = scalar_lea.vmem %s3, %s262
        %s264 = smul.u32 8, %s25
        %s266 = smul.u32 %s25, 8
        %vm267 = vcmask 523264
        %268 = vst.msk [vmem:[#allocation2] sm:$0xff] %vm267, 0.0
        %269 = vst.msk [vmem:[#allocation2 + $0x8] sm:$0xff] %vm267, 0.0
        %270 = vst.msk [vmem:[#allocation2 + $0x10] sm:$0xff] %vm267, 0.0
        %271 = vst.msk [vmem:[#allocation2 + $0x18] sm:$0xff] %vm267, 0.0
        %272 = vst.msk [vmem:[#allocation2 + $0x20] sm:$0xff] %vm267, 0.0
        %273 = vst.msk [vmem:[#allocation2 + $0x28] sm:$0xff] %vm267, 0.0
        %274 = vst.msk [vmem:[#allocation2 + $0x30] sm:$0xff] %vm267, 0.0
        %275 = vst.msk [vmem:[#allocation2 + $0x38] sm:$0xff] %vm267, 0.0
        %s276 = smul.u32 %s266, 2
        %s277 = smul.addr %s276, 4
        %s278 = scalar_lea.vmem %s253, %s277
        %v279 = vld [vmem:[%s278] sm:$0xf]
        %v280 = vld [vmem:[%s278 + $0x4] sm:$0x3]
        %v281 = vld [vmem:[%s278 + $0x8] sm:$0xf]
        %v282 = vld [vmem:[%s278 + $0xc] sm:$0x3]
        %v283 = vld [vmem:[%s278 + $0x10] sm:$0xf]
        %v284 = vld [vmem:[%s278 + $0x14] sm:$0x3]
        %v285 = vld [vmem:[%s278 + $0x18] sm:$0xf]
        %v286 = vld [vmem:[%s278 + $0x1c] sm:$0x3]
        %v287 = vld [vmem:[%s278 + $0x20] sm:$0xf]
        %v288 = vld [vmem:[%s278 + $0x24] sm:$0x3]
        %v289 = vld [vmem:[%s278 + $0x28] sm:$0xf]
        %v290 = vld [vmem:[%s278 + $0x2c] sm:$0x3]
        %v291 = vld [vmem:[%s278 + $0x30] sm:$0xf]
        %v292 = vld [vmem:[%s278 + $0x34] sm:$0x3]
        %v293 = vld [vmem:[%s278 + $0x38] sm:$0xf]
        %v294 = vld [vmem:[%s278 + $0x3c] sm:$0x3]
        %v295 = vld [vmem:[#allocation2] sm:$0xff]
        %v296 = vld [vmem:[#allocation2 + $0x8] sm:$0xff]
        %v297 = vld [vmem:[#allocation2 + $0x10] sm:$0xff]
        %v298 = vld [vmem:[#allocation2 + $0x18] sm:$0xff]
        %v299 = vld [vmem:[#allocation2 + $0x20] sm:$0xff]
        %v300 = vld [vmem:[#allocation2 + $0x28] sm:$0xff]
        %v301 = vld [vmem:[#allocation2 + $0x30] sm:$0xff]
        %v302 = vld [vmem:[#allocation2 + $0x38] sm:$0xff]
        %v303 = vld [vmem:[%s257] sm:$0xf]
        %v304 = vld [vmem:[%s257 + $0x4] sm:$0xf]
        %v305 = vld [vmem:[%s257 + $0x8] sm:$0xf]
        %v306 = vld [vmem:[%s257 + $0xc] sm:$0xf]
        %v315 = vunpack.c.l.b16 %v279
        %v316 = vunpack.c.l.b16 %v281
        %v317 = vunpack.c.l.b16 %v283
        %v318 = vunpack.c.l.b16 %v285
        %v319 = vunpack.c.l.b16 %v287
        %v320 = vunpack.c.l.b16 %v289
        %v321 = vunpack.c.l.b16 %v291
        %v322 = vunpack.c.l.b16 %v293
        %v323 = vpack.c.b16 %v316, %v315
        %v324 = vpack.c.b16 %v318, %v317
        %v325 = vpack.c.b16 %v320, %v319
        %v326 = vpack.c.b16 %v322, %v321
        %v331 = vunpack.c.l.b16 %v303
        %v332 = vunpack.c.l.b16 %v304
        %v333 = vunpack.c.l.b16 %v305
        %v334 = vunpack.c.l.b16 %v306
        %v335 = vpack.c.b16 %v332, %v331
        %v336 = vpack.c.b16 %v334, %v333
        %vm339 = vcmask 261120
        %v341 = vsel %vm339, %v323, 0
        %v344 = vsel %vm339, %v324, 0
        %v347 = vsel %vm339, %v325, 0
        %v350 = vsel %vm339, %v326, 0
        %352 = vmatprep.subr.bf16.mxu0 0
        %353 = vmatpush1.bf16.msra.mxu0 %v335
        %354 = vmatprep.subr.bf16.mxu0 0
        %355 = vmatpush1.bf16.msra.mxu0 %v336
        %356 = vmatprep.subr.bf16.mxu0 0
        %357 = vmatpush1.bf16.msra.mxu0 0
        %358 = vmatprep.subr.bf16.mxu0 0
        %359 = vmatpush1.bf16.msra.mxu0 0
        %360 = vmatprep.subr.bf16.mxu0 0
        %361 = vmatpush1.bf16.msra.mxu0 0
        %362 = vmatprep.subr.bf16.mxu0 0
        %363 = vmatpush1.bf16.msra.mxu0 0
        %364 = vmatprep.subr.bf16.mxu0 0
        %365 = vmatpush1.bf16.msra.mxu0 0
        %366 = vmatprep.subr.bf16.mxu0 0
        %367 = vmatpush1.bf16.msra.mxu0 0
        %368 = vmatprep.subr.bf16.mxu0 0
        %369 = vmatpush1.bf16.msra.mxu0 0
        %370 = vmatprep.subr.bf16.mxu0 0
        %371 = vmatpush1.bf16.msra.mxu0 0
        %372 = vmatprep.subr.bf16.mxu0 0
        %373 = vmatpush1.bf16.msra.mxu0 0
        %374 = vmatprep.subr.bf16.mxu0 0
        %375 = vmatpush1.bf16.msra.mxu0 0
        %376 = vmatprep.subr.bf16.mxu0 0
        %377 = vmatpush1.bf16.msra.mxu0 0
        %378 = vmatprep.subr.bf16.mxu0 0
        %379 = vmatpush1.bf16.msra.mxu0 0
        %380 = vmatprep.subr.bf16.mxu0 0
        %381 = vmatpush1.bf16.msra.mxu0 0
        %382 = vmatprep.subr.bf16.mxu0 0
        %383 = vmatpush1.bf16.msra.mxu0 0
        %384 = vmatprep.mubr.bf16.mxu0 0
        %385 = vmatmul.mubr.bf16.gmra.mrb[0].mxu0 %v341
        %v386 = vpop.f32.mrb[0].mxu0
        %v387 = vadd.f32 0.0, %v386
        %v388 = vpop.f32.mrb[0].mxu0
        %v389 = vpop.f32.mrb[0].mxu0
        %v390 = vadd.f32 0.0, %v389
        %v391 = vpop.f32.mrb[0].mxu0
        %392 = vmatprep.mubr.bf16.mxu0 0
        %393 = vmatmul.mubr.bf16.gmra.mrb[0].mxu0 %v344
        %v394 = vpop.f32.mrb[0].mxu0
        %v395 = vadd.f32 0.0, %v394
        %v396 = vpop.f32.mrb[0].mxu0
        %v397 = vpop.f32.mrb[0].mxu0
        %v398 = vadd.f32 0.0, %v397
        %v399 = vpop.f32.mrb[0].mxu0
        %400 = vmatprep.mubr.bf16.mxu0 0
        %401 = vmatmul.mubr.bf16.gmra.mrb[0].mxu0 %v347
        %v402 = vpop.f32.mrb[0].mxu0
        %v403 = vadd.f32 0.0, %v402
        %v404 = vpop.f32.mrb[0].mxu0
        %v405 = vpop.f32.mrb[0].mxu0
        %v406 = vadd.f32 0.0, %v405
        %v407 = vpop.f32.mrb[0].mxu0
        %408 = vmatprep.mubr.bf16.mxu0 0
        %409 = vmatmul.mubr.bf16.gmra.mrb[0].mxu0 %v350
        %v410 = vpop.f32.mrb[0].mxu0
        %v411 = vadd.f32 0.0, %v410
        %v412 = vpop.f32.mrb[0].mxu0
        %v413 = vpop.f32.mrb[0].mxu0
        %v414 = vadd.f32 0.0, %v413
        %v415 = vpop.f32.mrb[0].mxu0
        %416 = vdwg.mxu0
        %v417 = vadd.f32 %v295, %v387
        %v418 = vadd.f32 %v296, %v390
        %v419 = vadd.f32 %v297, %v395
        %v420 = vadd.f32 %v298, %v398
        %v421 = vadd.f32 %v299, %v403
        %v422 = vadd.f32 %v300, %v406
        %v423 = vadd.f32 %v301, %v411
        %v424 = vadd.f32 %v302, %v414
        %425 = vst.msk [vmem:[#allocation2] sm:$0xff] %vm267, %v417
        %426 = vst.msk [vmem:[#allocation2 + $0x8] sm:$0xff] %vm267, %v418
        %427 = vst.msk [vmem:[#allocation2 + $0x10] sm:$0xff] %vm267, %v419
        %428 = vst.msk [vmem:[#allocation2 + $0x18] sm:$0xff] %vm267, %v420
        %429 = vst.msk [vmem:[#allocation2 + $0x20] sm:$0xff] %vm267, %v421
        %430 = vst.msk [vmem:[#allocation2 + $0x28] sm:$0xff] %vm267, %v422
        %431 = vst.msk [vmem:[#allocation2 + $0x30] sm:$0xff] %vm267, %v423
        %432 = vst.msk [vmem:[#allocation2 + $0x38] sm:$0xff] %vm267, %v424
        %vm433 = vsmask.f32 3328
        %vm434 = vsmask.f32 7440
        %vm435 = vmor %vm433, %vm434
        %v437 = vshrl.u32 %v279, 16
        %v439 = vrot.slane %v437, 4
        %v440 = vshll.u32 %v279, 16
        %v442 = vrot.slane %v440, 5
        %v443 = vor.u32 %v439, %v442
        %v444 = vrot.slane %v443, 4
        %v446 = vshll.u32 %v280, 16
        %v448 = vrot.slane %v446, 5
        %v449 = vsel %vm435, %v444, %v448
        %v451 = vshrl.u32 %v281, 16
        %v453 = vrot.slane %v451, 4
        %v454 = vshll.u32 %v281, 16
        %v456 = vrot.slane %v454, 5
        %v457 = vor.u32 %v453, %v456
        %v458 = vrot.slane %v457, 4
        %v460 = vshll.u32 %v282, 16
        %v462 = vrot.slane %v460, 5
        %v463 = vsel %vm435, %v458, %v462
        %v465 = vshrl.u32 %v283, 16
        %v467 = vrot.slane %v465, 4
        %v468 = vshll.u32 %v283, 16
        %v470 = vrot.slane %v468, 5
        %v471 = vor.u32 %v467, %v470
        %v472 = vrot.slane %v471, 4
        %v474 = vshll.u32 %v284, 16
        %v476 = vrot.slane %v474, 5
        %v477 = vsel %vm435, %v472, %v476
        %v479 = vshrl.u32 %v285, 16
        %v481 = vrot.slane %v479, 4
        %v482 = vshll.u32 %v285, 16
        %v484 = vrot.slane %v482, 5
        %v485 = vor.u32 %v481, %v484
        %v486 = vrot.slane %v485, 4
        %v488 = vshll.u32 %v286, 16
        %v490 = vrot.slane %v488, 5
        %v491 = vsel %vm435, %v486, %v490
        %v493 = vshrl.u32 %v287, 16
        %v495 = vrot.slane %v493, 4
        %v496 = vshll.u32 %v287, 16
        %v498 = vrot.slane %v496, 5
        %v499 = vor.u32 %v495, %v498
        %v500 = vrot.slane %v499, 4
        %v502 = vshll.u32 %v288, 16
        %v504 = vrot.slane %v502, 5
        %v505 = vsel %vm435, %v500, %v504
        %v507 = vshrl.u32 %v289, 16
        %v509 = vrot.slane %v507, 4
        %v510 = vshll.u32 %v289, 16
        %v512 = vrot.slane %v510, 5
        %v513 = vor.u32 %v509, %v512
        %v514 = vrot.slane %v513, 4
        %v516 = vshll.u32 %v290, 16
        %v518 = vrot.slane %v516, 5
        %v519 = vsel %vm435, %v514, %v518
        %v521 = vshrl.u32 %v291, 16
        %v523 = vrot.slane %v521, 4
        %v524 = vshll.u32 %v291, 16
        %v526 = vrot.slane %v524, 5
        %v527 = vor.u32 %v523, %v526
        %v528 = vrot.slane %v527, 4
        %v530 = vshll.u32 %v292, 16
        %v532 = vrot.slane %v530, 5
        %v533 = vsel %vm435, %v528, %v532
        %v535 = vshrl.u32 %v293, 16
        %v537 = vrot.slane %v535, 4
        %v538 = vshll.u32 %v293, 16
        %v540 = vrot.slane %v538, 5
        %v541 = vor.u32 %v537, %v540
        %v542 = vrot.slane %v541, 4
        %v544 = vshll.u32 %v294, 16
        %v546 = vrot.slane %v544, 5
        %v547 = vsel %vm435, %v542, %v546
        %v548 = vld [vmem:[#allocation2] sm:$0xff]
        %v549 = vld [vmem:[#allocation2 + $0x8] sm:$0xff]
        %v550 = vld [vmem:[#allocation2 + $0x10] sm:$0xff]
        %v551 = vld [vmem:[#allocation2 + $0x18] sm:$0xff]
        %v552 = vld [vmem:[#allocation2 + $0x20] sm:$0xff]
        %v553 = vld [vmem:[#allocation2 + $0x28] sm:$0xff]
        %v554 = vld [vmem:[#allocation2 + $0x30] sm:$0xff]
        %v555 = vld [vmem:[#allocation2 + $0x38] sm:$0xff]
        %s556 = scalar_lea.vmem %s257, 16
        %v557 = vld [vmem:[%s556] sm:$0xf]
        %v558 = vld [vmem:[%s556 + $0x4] sm:$0xf]
        %v559 = vld [vmem:[%s556 + $0x8] sm:$0xf]
        %v560 = vld [vmem:[%s556 + $0xc] sm:$0xf]
        %v561 = vunpack.c.l.b16 %v449
        %v562 = vunpack.c.l.b16 %v463
        %v563 = vunpack.c.l.b16 %v477
        %v564 = vunpack.c.l.b16 %v491
        %v565 = vunpack.c.l.b16 %v505
        %v566 = vunpack.c.l.b16 %v519
        %v567 = vunpack.c.l.b16 %v533
        %v568 = vunpack.c.l.b16 %v547
        %v569 = vpack.c.b16 %v562, %v561
        %v570 = vpack.c.b16 %v564, %v563
        %v571 = vpack.c.b16 %v566, %v565
        %v572 = vpack.c.b16 %v568, %v567
        %v577 = vunpack.c.l.b16 %v557
        %v578 = vunpack.c.l.b16 %v558
        %v579 = vunpack.c.l.b16 %v559
        %v580 = vunpack.c.l.b16 %v560
        %v581 = vpack.c.b16 %v578, %v577
        %v582 = vpack.c.b16 %v580, %v579
        %v586 = vsel %vm339, %v569, 0
        %v589 = vsel %vm339, %v570, 0
        %v592 = vsel %vm339, %v571, 0
        %v595 = vsel %vm339, %v572, 0
        %597 = vmatprep.subr.bf16.mxu0 0
        %598 = vmatpush1.bf16.msra.mxu0 %v581
        %599 = vmatprep.subr.bf16.mxu0 0
        %600 = vmatpush1.bf16.msra.mxu0 %v582
        %601 = vmatprep.subr.bf16.mxu0 0
        %602 = vmatpush1.bf16.msra.mxu0 0
        %603 = vmatprep.subr.bf16.mxu0 0
        %604 = vmatpush1.bf16.msra.mxu0 0
        %605 = vmatprep.subr.bf16.mxu0 0
        %606 = vmatpush1.bf16.msra.mxu0 0
        %607 = vmatprep.subr.bf16.mxu0 0
        %608 = vmatpush1.bf16.msra.mxu0 0
        %609 = vmatprep.subr.bf16.mxu0 0
        %610 = vmatpush1.bf16.msra.mxu0 0
        %611 = vmatprep.subr.bf16.mxu0 0
        %612 = vmatpush1.bf16.msra.mxu0 0
        %613 = vmatprep.subr.bf16.mxu0 0
        %614 = vmatpush1.bf16.msra.mxu0 0
        %615 = vmatprep.subr.bf16.mxu0 0
        %616 = vmatpush1.bf16.msra.mxu0 0
        %617 = vmatprep.subr.bf16.mxu0 0
        %618 = vmatpush1.bf16.msra.mxu0 0
        %619 = vmatprep.subr.bf16.mxu0 0
        %620 = vmatpush1.bf16.msra.mxu0 0
        %621 = vmatprep.subr.bf16.mxu0 0
        %622 = vmatpush1.bf16.msra.mxu0 0
        %623 = vmatprep.subr.bf16.mxu0 0
        %624 = vmatpush1.bf16.msra.mxu0 0
        %625 = vmatprep.subr.bf16.mxu0 0
        %626 = vmatpush1.bf16.msra.mxu0 0
        %627 = vmatprep.subr.bf16.mxu0 0
        %628 = vmatpush1.bf16.msra.mxu0 0
        %629 = vmatprep.mubr.bf16.mxu0 0
        %630 = vmatmul.mubr.bf16.gmra.mrb[0].mxu0 %v586
        %v631 = vpop.f32.mrb[0].mxu0
        %v632 = vadd.f32 0.0, %v631
        %v633 = vpop.f32.mrb[0].mxu0
        %v634 = vpop.f32.mrb[0].mxu0
        %v635 = vadd.f32 0.0, %v634
        %v636 = vpop.f32.mrb[0].mxu0
        %637 = vmatprep.mubr.bf16.mxu0 0
        %638 = vmatmul.mubr.bf16.gmra.mrb[0].mxu0 %v589
        %v639 = vpop.f32.mrb[0].mxu0
        %v640 = vadd.f32 0.0, %v639
        %v641 = vpop.f32.mrb[0].mxu0
        %v642 = vpop.f32.mrb[0].mxu0
        %v643 = vadd.f32 0.0, %v642
        %v644 = vpop.f32.mrb[0].mxu0
        %645 = vmatprep.mubr.bf16.mxu0 0
        %646 = vmatmul.mubr.bf16.gmra.mrb[0].mxu0 %v592
        %v647 = vpop.f32.mrb[0].mxu0
        %v648 = vadd.f32 0.0, %v647
        %v649 = vpop.f32.mrb[0].mxu0
        %v650 = vpop.f32.mrb[0].mxu0
        %v651 = vadd.f32 0.0, %v650
        %v652 = vpop.f32.mrb[0].mxu0
        %653 = vmatprep.mubr.bf16.mxu0 0
        %654 = vmatmul.mubr.bf16.gmra.mrb[0].mxu0 %v595
        %v655 = vpop.f32.mrb[0].mxu0
        %v656 = vadd.f32 0.0, %v655
        %v657 = vpop.f32.mrb[0].mxu0
        %v658 = vpop.f32.mrb[0].mxu0
        %v659 = vadd.f32 0.0, %v658
        %v660 = vpop.f32.mrb[0].mxu0
        %661 = vdwg.mxu0
        %v662 = vadd.f32 %v548, %v632
        %v663 = vadd.f32 %v549, %v635
        %v664 = vadd.f32 %v550, %v640
        %v665 = vadd.f32 %v551, %v643
        %v666 = vadd.f32 %v552, %v648
        %v667 = vadd.f32 %v553, %v651
        %v668 = vadd.f32 %v554, %v656
        %v669 = vadd.f32 %v555, %v659
        %670 = vst.msk [vmem:[#allocation2] sm:$0xff] %vm267, %v662
        %671 = vst.msk [vmem:[#allocation2 + $0x8] sm:$0xff] %vm267, %v663
        %672 = vst.msk [vmem:[#allocation2 + $0x10] sm:$0xff] %vm267, %v664
        %673 = vst.msk [vmem:[#allocation2 + $0x18] sm:$0xff] %vm267, %v665
        %674 = vst.msk [vmem:[#allocation2 + $0x20] sm:$0xff] %vm267, %v666
        %675 = vst.msk [vmem:[#allocation2 + $0x28] sm:$0xff] %vm267, %v667
        %676 = vst.msk [vmem:[#allocation2 + $0x30] sm:$0xff] %vm267, %v668
        %677 = vst.msk [vmem:[#allocation2 + $0x38] sm:$0xff] %vm267, %v669
        %vm686 = vcmask 1042432
        %vm687 = vcmask 1046532
        %vm688 = vmor %vm686, %vm687
        %v689 = vrot.slane %v279, 5
        %v690 = vrot.slane %v689, 4
        %v691 = vrot.slane %v280, 5
        %v692 = vsel %vm688, %v690, %v691
        %v693 = vrot.slane %v281, 5
        %v694 = vrot.slane %v693, 4
        %v695 = vrot.slane %v282, 5
        %v696 = vsel %vm688, %v694, %v695
        %v697 = vrot.slane %v283, 5
        %v698 = vrot.slane %v697, 4
        %v699 = vrot.slane %v284, 5
        %v700 = vsel %vm688, %v698, %v699
        %v701 = vrot.slane %v285, 5
        %v702 = vrot.slane %v701, 4
        %v703 = vrot.slane %v286, 5
        %v704 = vsel %vm688, %v702, %v703
        %v705 = vrot.slane %v287, 5
        %v706 = vrot.slane %v705, 4
        %v707 = vrot.slane %v288, 5
        %v708 = vsel %vm688, %v706, %v707
        %v709 = vrot.slane %v289, 5
        %v710 = vrot.slane %v709, 4
        %v711 = vrot.slane %v290, 5
        %v712 = vsel %vm688, %v710, %v711
        %v713 = vrot.slane %v291, 5
        %v714 = vrot.slane %v713, 4
        %v715 = vrot.slane %v292, 5
        %v716 = vsel %vm688, %v714, %v715
        %v717 = vrot.slane %v293, 5
        %v718 = vrot.slane %v717, 4
        %v719 = vrot.slane %v294, 5
        %v720 = vsel %vm688, %v718, %v719
        %v721 = vld [vmem:[#allocation2] sm:$0xff]
        %v722 = vld [vmem:[#allocation2 + $0x8] sm:$0xff]
        %v723 = vld [vmem:[#allocation2 + $0x10] sm:$0xff]
        %v724 = vld [vmem:[#allocation2 + $0x18] sm:$0xff]
        %v725 = vld [vmem:[#allocation2 + $0x20] sm:$0xff]
        %v726 = vld [vmem:[#allocation2 + $0x28] sm:$0xff]
        %v727 = vld [vmem:[#allocation2 + $0x30] sm:$0xff]
        %v728 = vld [vmem:[#allocation2 + $0x38] sm:$0xff]
        %s729 = scalar_lea.vmem %s257, 32
        %v730 = vld [vmem:[%s729] sm:$0xf]
        %v731 = vld [vmem:[%s729 + $0x4] sm:$0xf]
        %v732 = vld [vmem:[%s729 + $0x8] sm:$0xf]
        %v733 = vld [vmem:[%s729 + $0xc] sm:$0xf]
        %v734 = vunpack.c.l.b16 %v692
        %v735 = vunpack.c.l.b16 %v696
        %v736 = vunpack.c.l.b16 %v700
        %v737 = vunpack.c.l.b16 %v704
        %v738 = vunpack.c.l.b16 %v708
        %v739 = vunpack.c.l.b16 %v712
        %v740 = vunpack.c.l.b16 %v716
        %v741 = vunpack.c.l.b16 %v720
        %v742 = vpack.c.b16 %v735, %v734
        %v743 = vpack.c.b16 %v737, %v736
        %v744 = vpack.c.b16 %v739, %v738
        %v745 = vpack.c.b16 %v741, %v740
        %v750 = vunpack.c.l.b16 %v730
        %v751 = vunpack.c.l.b16 %v731
        %v752 = vunpack.c.l.b16 %v732
        %v753 = vunpack.c.l.b16 %v733
        %v754 = vpack.c.b16 %v751, %v750
        %v755 = vpack.c.b16 %v753, %v752
        %v759 = vsel %vm339, %v742, 0
        %v762 = vsel %vm339, %v743, 0
        %v765 = vsel %vm339, %v744, 0
        %v768 = vsel %vm339, %v745, 0
        %770 = vmatprep.subr.bf16.mxu0 0
        %771 = vmatpush1.bf16.msra.mxu0 %v754
        %772 = vmatprep.subr.bf16.mxu0 0
        %773 = vmatpush1.bf16.msra.mxu0 %v755
        %774 = vmatprep.subr.bf16.mxu0 0
        %775 = vmatpush1.bf16.msra.mxu0 0
        %776 = vmatprep.subr.bf16.mxu0 0
        %777 = vmatpush1.bf16.msra.mxu0 0
        %778 = vmatprep.subr.bf16.mxu0 0
        %779 = vmatpush1.bf16.msra.mxu0 0
        %780 = vmatprep.subr.bf16.mxu0 0
        %781 = vmatpush1.bf16.msra.mxu0 0
        %782 = vmatprep.subr.bf16.mxu0 0
        %783 = vmatpush1.bf16.msra.mxu0 0
        %784 = vmatprep.subr.bf16.mxu0 0
        %785 = vmatpush1.bf16.msra.mxu0 0
        %786 = vmatprep.subr.bf16.mxu0 0
        %787 = vmatpush1.bf16.msra.mxu0 0
        %788 = vmatprep.subr.bf16.mxu0 0
        %789 = vmatpush1.bf16.msra.mxu0 0
        %790 = vmatprep.subr.bf16.mxu0 0
        %791 = vmatpush1.bf16.msra.mxu0 0
        %792 = vmatprep.subr.bf16.mxu0 0
        %793 = vmatpush1.bf16.msra.mxu0 0
        %794 = vmatprep.subr.bf16.mxu0 0
        %795 = vmatpush1.bf16.msra.mxu0 0
        %796 = vmatprep.subr.bf16.mxu0 0
        %797 = vmatpush1.bf16.msra.mxu0 0
        %798 = vmatprep.subr.bf16.mxu0 0
        %799 = vmatpush1.bf16.msra.mxu0 0
        %800 = vmatprep.subr.bf16.mxu0 0
        %801 = vmatpush1.bf16.msra.mxu0 0
        %802 = vmatprep.mubr.bf16.mxu0 0
        %803 = vmatmul.mubr.bf16.gmra.mrb[0].mxu0 %v759
        %v804 = vpop.f32.mrb[0].mxu0
        %v805 = vadd.f32 0.0, %v804
        %v806 = vpop.f32.mrb[0].mxu0
        %v807 = vpop.f32.mrb[0].mxu0
        %v808 = vadd.f32 0.0, %v807
        %v809 = vpop.f32.mrb[0].mxu0
        %810 = vmatprep.mubr.bf16.mxu0 0
        %811 = vmatmul.mubr.bf16.gmra.mrb[0].mxu0 %v762
        %v812 = vpop.f32.mrb[0].mxu0
        %v813 = vadd.f32 0.0, %v812
        %v814 = vpop.f32.mrb[0].mxu0
        %v815 = vpop.f32.mrb[0].mxu0
        %v816 = vadd.f32 0.0, %v815
        %v817 = vpop.f32.mrb[0].mxu0
        %818 = vmatprep.mubr.bf16.mxu0 0
        %819 = vmatmul.mubr.bf16.gmra.mrb[0].mxu0 %v765
        %v820 = vpop.f32.mrb[0].mxu0
        %v821 = vadd.f32 0.0, %v820
        %v822 = vpop.f32.mrb[0].mxu0
        %v823 = vpop.f32.mrb[0].mxu0
        %v824 = vadd.f32 0.0, %v823
        %v825 = vpop.f32.mrb[0].mxu0
        %826 = vmatprep.mubr.bf16.mxu0 0
        %827 = vmatmul.mubr.bf16.gmra.mrb[0].mxu0 %v768
        %v828 = vpop.f32.mrb[0].mxu0
        %v829 = vadd.f32 0.0, %v828
        %v830 = vpop.f32.mrb[0].mxu0
        %v831 = vpop.f32.mrb[0].mxu0
        %v832 = vadd.f32 0.0, %v831
        %v833 = vpop.f32.mrb[0].mxu0
        %834 = vdwg.mxu0
        %v835 = vadd.f32 %v721, %v805
        %v836 = vadd.f32 %v722, %v808
        %v837 = vadd.f32 %v723, %v813
        %v838 = vadd.f32 %v724, %v816
        %v839 = vadd.f32 %v725, %v821
        %v840 = vadd.f32 %v726, %v824
        %v841 = vadd.f32 %v727, %v829
        %v842 = vadd.f32 %v728, %v832
        %843 = vst.msk [vmem:[#allocation2] sm:$0xff] %vm267, %v835
        %844 = vst.msk [vmem:[#allocation2 + $0x8] sm:$0xff] %vm267, %v836
        %845 = vst.msk [vmem:[#allocation2 + $0x10] sm:$0xff] %vm267, %v837
        %846 = vst.msk [vmem:[#allocation2 + $0x18] sm:$0xff] %vm267, %v838
        %847 = vst.msk [vmem:[#allocation2 + $0x20] sm:$0xff] %vm267, %v839
        %848 = vst.msk [vmem:[#allocation2 + $0x28] sm:$0xff] %vm267, %v840
        %849 = vst.msk [vmem:[#allocation2 + $0x30] sm:$0xff] %vm267, %v841
        %850 = vst.msk [vmem:[#allocation2 + $0x38] sm:$0xff] %vm267, %v842
        %vm851 = vsmask.f32 2304
        %vm852 = vsmask.f32 6416
        %vm853 = vmor %vm851, %vm852
        %v854 = vrot.slane %v437, 5
        %v855 = vrot.slane %v440, 6
        %v856 = vor.u32 %v854, %v855
        %v857 = vrot.slane %v856, 4
        %v858 = vshrl.u32 %v280, 16
        %v860 = vrot.slane %v858, 5
        %v861 = vrot.slane %v446, 6
        %v862 = vor.u32 %v860, %v861
        %v863 = vsel %vm853, %v857, %v862
        %v864 = vrot.slane %v451, 5
        %v865 = vrot.slane %v454, 6
        %v866 = vor.u32 %v864, %v865
        %v867 = vrot.slane %v866, 4
        %v868 = vshrl.u32 %v282, 16
        %v870 = vrot.slane %v868, 5
        %v871 = vrot.slane %v460, 6
        %v872 = vor.u32 %v870, %v871
        %v873 = vsel %vm853, %v867, %v872
        %v874 = vrot.slane %v465, 5
        %v875 = vrot.slane %v468, 6
        %v876 = vor.u32 %v874, %v875
        %v877 = vrot.slane %v876, 4
        %v878 = vshrl.u32 %v284, 16
        %v880 = vrot.slane %v878, 5
        %v881 = vrot.slane %v474, 6
        %v882 = vor.u32 %v880, %v881
        %v883 = vsel %vm853, %v877, %v882
        %v884 = vrot.slane %v479, 5
        %v885 = vrot.slane %v482, 6
        %v886 = vor.u32 %v884, %v885
        %v887 = vrot.slane %v886, 4
        %v888 = vshrl.u32 %v286, 16
        %v890 = vrot.slane %v888, 5
        %v891 = vrot.slane %v488, 6
        %v892 = vor.u32 %v890, %v891
        %v893 = vsel %vm853, %v887, %v892
        %v894 = vrot.slane %v493, 5
        %v895 = vrot.slane %v496, 6
        %v896 = vor.u32 %v894, %v895
        %v897 = vrot.slane %v896, 4
        %v898 = vshrl.u32 %v288, 16
        %v900 = vrot.slane %v898, 5
        %v901 = vrot.slane %v502, 6
        %v902 = vor.u32 %v900, %v901
        %v903 = vsel %vm853, %v897, %v902
        %v904 = vrot.slane %v507, 5
        %v905 = vrot.slane %v510, 6
        %v906 = vor.u32 %v904, %v905
        %v907 = vrot.slane %v906, 4
        %v908 = vshrl.u32 %v290, 16
        %v910 = vrot.slane %v908, 5
        %v911 = vrot.slane %v516, 6
        %v912 = vor.u32 %v910, %v911
        %v913 = vsel %vm853, %v907, %v912
        %v914 = vrot.slane %v521, 5
        %v915 = vrot.slane %v524, 6
        %v916 = vor.u32 %v914, %v915
        %v917 = vrot.slane %v916, 4
        %v918 = vshrl.u32 %v292, 16
        %v920 = vrot.slane %v918, 5
        %v921 = vrot.slane %v530, 6
        %v922 = vor.u32 %v920, %v921
        %v923 = vsel %vm853, %v917, %v922
        %v924 = vrot.slane %v535, 5
        %v925 = vrot.slane %v538, 6
        %v926 = vor.u32 %v924, %v925
        %v927 = vrot.slane %v926, 4
        %v928 = vshrl.u32 %v294, 16
        %v930 = vrot.slane %v928, 5
        %v931 = vrot.slane %v544, 6
        %v932 = vor.u32 %v930, %v931
        %v933 = vsel %vm853, %v927, %v932
        %v934 = vld [vmem:[#allocation2] sm:$0xff]
        %v935 = vld [vmem:[#allocation2 + $0x8] sm:$0xff]
        %v936 = vld [vmem:[#allocation2 + $0x10] sm:$0xff]
        %v937 = vld [vmem:[#allocation2 + $0x18] sm:$0xff]
        %v938 = vld [vmem:[#allocation2 + $0x20] sm:$0xff]
        %v939 = vld [vmem:[#allocation2 + $0x28] sm:$0xff]
        %v940 = vld [vmem:[#allocation2 + $0x30] sm:$0xff]
        %v941 = vld [vmem:[#allocation2 + $0x38] sm:$0xff]
        %s942 = scalar_lea.vmem %s257, 48
        %v943 = vld [vmem:[%s942] sm:$0xf]
        %v944 = vld [vmem:[%s942 + $0x4] sm:$0xf]
        %v945 = vld [vmem:[%s942 + $0x8] sm:$0xf]
        %v946 = vld [vmem:[%s942 + $0xc] sm:$0xf]
        %v947 = vunpack.c.l.b16 %v863
        %v948 = vunpack.c.l.b16 %v873
        %v949 = vunpack.c.l.b16 %v883
        %v950 = vunpack.c.l.b16 %v893
        %v951 = vunpack.c.l.b16 %v903
        %v952 = vunpack.c.l.b16 %v913
        %v953 = vunpack.c.l.b16 %v923
        %v954 = vunpack.c.l.b16 %v933
        %v955 = vpack.c.b16 %v948, %v947
        %v956 = vpack.c.b16 %v950, %v949
        %v957 = vpack.c.b16 %v952, %v951
        %v958 = vpack.c.b16 %v954, %v953
        %v963 = vunpack.c.l.b16 %v943
        %v964 = vunpack.c.l.b16 %v944
        %v965 = vunpack.c.l.b16 %v945
        %v966 = vunpack.c.l.b16 %v946
        %v967 = vpack.c.b16 %v964, %v963
        %v968 = vpack.c.b16 %v966, %v965
        %v972 = vsel %vm339, %v955, 0
        %v975 = vsel %vm339, %v956, 0
        %v978 = vsel %vm339, %v957, 0
        %v981 = vsel %vm339, %v958, 0
        %983 = vmatprep.subr.bf16.mxu0 0
        %984 = vmatpush1.bf16.msra.mxu0 %v967
        %985 = vmatprep.subr.bf16.mxu0 0
        %986 = vmatpush1.bf16.msra.mxu0 %v968
        %987 = vmatprep.subr.bf16.mxu0 0
        %988 = vmatpush1.bf16.msra.mxu0 0
        %989 = vmatprep.subr.bf16.mxu0 0
        %990 = vmatpush1.bf16.msra.mxu0 0
        %991 = vmatprep.subr.bf16.mxu0 0
        %992 = vmatpush1.bf16.msra.mxu0 0
        %993 = vmatprep.subr.bf16.mxu0 0
        %994 = vmatpush1.bf16.msra.mxu0 0
        %995 = vmatprep.subr.bf16.mxu0 0
        %996 = vmatpush1.bf16.msra.mxu0 0
        %997 = vmatprep.subr.bf16.mxu0 0
        %998 = vmatpush1.bf16.msra.mxu0 0
        %999 = vmatprep.subr.bf16.mxu0 0
        %1000 = vmatpush1.bf16.msra.mxu0 0
        %1001 = vmatprep.subr.bf16.mxu0 0
        %1002 = vmatpush1.bf16.msra.mxu0 0
        %1003 = vmatprep.subr.bf16.mxu0 0
        %1004 = vmatpush1.bf16.msra.mxu0 0
        %1005 = vmatprep.subr.bf16.mxu0 0
        %1006 = vmatpush1.bf16.msra.mxu0 0
        %1007 = vmatprep.subr.bf16.mxu0 0
        %1008 = vmatpush1.bf16.msra.mxu0 0
        %1009 = vmatprep.subr.bf16.mxu0 0
        %1010 = vmatpush1.bf16.msra.mxu0 0
        %1011 = vmatprep.subr.bf16.mxu0 0
        %1012 = vmatpush1.bf16.msra.mxu0 0
        %1013 = vmatprep.subr.bf16.mxu0 0
        %1014 = vmatpush1.bf16.msra.mxu0 0
        %1015 = vmatprep.mubr.bf16.mxu0 0
        %1016 = vmatmul.mubr.bf16.gmra.mrb[0].mxu0 %v972
        %v1017 = vpop.f32.mrb[0].mxu0
        %v1018 = vadd.f32 0.0, %v1017
        %v1019 = vpop.f32.mrb[0].mxu0
        %v1020 = vpop.f32.mrb[0].mxu0
        %v1021 = vadd.f32 0.0, %v1020
        %v1022 = vpop.f32.mrb[0].mxu0
        %1023 = vmatprep.mubr.bf16.mxu0 0
        %1024 = vmatmul.mubr.bf16.gmra.mrb[0].mxu0 %v975
        %v1025 = vpop.f32.mrb[0].mxu0
        %v1026 = vadd.f32 0.0, %v1025
        %v1027 = vpop.f32.mrb[0].mxu0
        %v1028 = vpop.f32.mrb[0].mxu0
        %v1029 = vadd.f32 0.0, %v1028
        %v1030 = vpop.f32.mrb[0].mxu0
        %1031 = vmatprep.mubr.bf16.mxu0 0
        %1032 = vmatmul.mubr.bf16.gmra.mrb[0].mxu0 %v978
        %v1033 = vpop.f32.mrb[0].mxu0
        %v1034 = vadd.f32 0.0, %v1033
        %v1035 = vpop.f32.mrb[0].mxu0
        %v1036 = vpop.f32.mrb[0].mxu0
        %v1037 = vadd.f32 0.0, %v1036
        %v1038 = vpop.f32.mrb[0].mxu0
        %1039 = vmatprep.mubr.bf16.mxu0 0
        %1040 = vmatmul.mubr.bf16.gmra.mrb[0].mxu0 %v981
        %v1041 = vpop.f32.mrb[0].mxu0
        %v1042 = vadd.f32 0.0, %v1041
        %v1043 = vpop.f32.mrb[0].mxu0
        %v1044 = vpop.f32.mrb[0].mxu0
        %v1045 = vadd.f32 0.0, %v1044
        %v1046 = vpop.f32.mrb[0].mxu0
        %1047 = vdwg.mxu0
        %v1048 = vadd.f32 %v934, %v1018
        %v1049 = vadd.f32 %v935, %v1021
        %v1050 = vadd.f32 %v936, %v1026
        %v1051 = vadd.f32 %v937, %v1029
        %v1052 = vadd.f32 %v938, %v1034
        %v1053 = vadd.f32 %v939, %v1037
        %v1054 = vadd.f32 %v940, %v1042
        %v1055 = vadd.f32 %v941, %v1045
        %1056 = vst.msk [vmem:[#allocation2] sm:$0xff] %vm267, %v1048
        %1057 = vst.msk [vmem:[#allocation2 + $0x8] sm:$0xff] %vm267, %v1049
        %1058 = vst.msk [vmem:[#allocation2 + $0x10] sm:$0xff] %vm267, %v1050
        %1059 = vst.msk [vmem:[#allocation2 + $0x18] sm:$0xff] %vm267, %v1051
        %1060 = vst.msk [vmem:[#allocation2 + $0x20] sm:$0xff] %vm267, %v1052
        %1061 = vst.msk [vmem:[#allocation2 + $0x28] sm:$0xff] %vm267, %v1053
        %1062 = vst.msk [vmem:[#allocation2 + $0x30] sm:$0xff] %vm267, %v1054
        %1063 = vst.msk [vmem:[#allocation2 + $0x38] sm:$0xff] %vm267, %v1055
        %s1064 = sadd.s32 %s266, 1
        %s1065 = smul.u32 %s1064, 2
        %s1066 = smul.addr %s1065, 4
        %s1067 = scalar_lea.vmem %s253, %s1066
        %v1068 = vld [vmem:[%s1067] sm:$0xf]
        %v1069 = vld [vmem:[%s1067 + $0x4] sm:$0x3]
        %v1070 = vld [vmem:[%s1067 + $0x8] sm:$0xf]
        %v1071 = vld [vmem:[%s1067 + $0xc] sm:$0x3]
        %v1072 = vld [vmem:[%s1067 + $0x10] sm:$0xf]
        %v1073 = vld [vmem:[%s1067 + $0x14] sm:$0x3]
        %v1074 = vld [vmem:[%s1067 + $0x18] sm:$0xf]
        %v1075 = vld [vmem:[%s1067 + $0x1c] sm:$0x3]
        %v1076 = vld [vmem:[%s1067 + $0x20] sm:$0xf]
        %v1077 = vld [vmem:[%s1067 + $0x24] sm:$0x3]
        %v1078 = vld [vmem:[%s1067 + $0x28] sm:$0xf]
        %v1079 = vld [vmem:[%s1067 + $0x2c] sm:$0x3]
        %v1080 = vld [vmem:[%s1067 + $0x30] sm:$0xf]
        %v1081 = vld [vmem:[%s1067 + $0x34] sm:$0x3]
        %v1082 = vld [vmem:[%s1067 + $0x38] sm:$0xf]
        %v1083 = vld [vmem:[%s1067 + $0x3c] sm:$0x3]
        %v1084 = vld [vmem:[#allocation2] sm:$0xff]
        %v1085 = vld [vmem:[#allocation2 + $0x8] sm:$0xff]
        %v1086 = vld [vmem:[#allocation2 + $0x10] sm:$0xff]
        %v1087 = vld [vmem:[#allocation2 + $0x18] sm:$0xff]
        %v1088 = vld [vmem:[#allocation2 + $0x20] sm:$0xff]
        %v1089 = vld [vmem:[#allocation2 + $0x28] sm:$0xff]
        %v1090 = vld [vmem:[#allocation2 + $0x30] sm:$0xff]
        %v1091 = vld [vmem:[#allocation2 + $0x38] sm:$0xff]
        %s1092 = scalar_lea.vmem %s257, 64
        %v1093 = vld [vmem:[%s1092] sm:$0xf]
        %v1094 = vld [vmem:[%s1092 + $0x4] sm:$0xf]
        %v1095 = vld [vmem:[%s1092 + $0x8] sm:$0xf]
        %v1096 = vld [vmem:[%s1092 + $0xc] sm:$0xf]
        %v1105 = vunpack.c.l.b16 %v1068
        %v1106 = vunpack.c.l.b16 %v1070
        %v1107 = vunpack.c.l.b16 %v1072
        %v1108 = vunpack.c.l.b16 %v1074
        %v1109 = vunpack.c.l.b16 %v1076
        %v1110 = vunpack.c.l.b16 %v1078
        %v1111 = vunpack.c.l.b16 %v1080
        %v1112 = vunpack.c.l.b16 %v1082
        %v1113 = vpack.c.b16 %v1106, %v1105
        %v1114 = vpack.c.b16 %v1108, %v1107
        %v1115 = vpack.c.b16 %v1110, %v1109
        %v1116 = vpack.c.b16 %v1112, %v1111
        %v1121 = vunpack.c.l.b16 %v1093
        %v1122 = vunpack.c.l.b16 %v1094
        %v1123 = vunpack.c.l.b16 %v1095
        %v1124 = vunpack.c.l.b16 %v1096
        %v1125 = vpack.c.b16 %v1122, %v1121
        %v1126 = vpack.c.b16 %v1124, %v1123
        %v1130 = vsel %vm339, %v1113, 0
        %v1133 = vsel %vm339, %v1114, 0
        %v1136 = vsel %vm339, %v1115, 0
        %v1139 = vsel %vm339, %v1116, 0
        %1141 = vmatprep.subr.bf16.mxu0 0
        %1142 = vmatpush1.bf16.msra.mxu0 %v1125
        %1143 = vmatprep.subr.bf16.mxu0 0
        %1144 = vmatpush1.bf16.msra.mxu0 %v1126
        %1145 = vmatprep.subr.bf16.mxu0 0
        %1146 = vmatpush1.bf16.msra.mxu0 0
        %1147 = vmatprep.subr.bf16.mxu0 0
        %1148 = vmatpush1.bf16.msra.mxu0 0
        %1149 = vmatprep.subr.bf16.mxu0 0
        %1150 = vmatpush1.bf16.msra.mxu0 0
        %1151 = vmatprep.subr.bf16.mxu0 0
        %1152 = vmatpush1.bf16.msra.mxu0 0
        %1153 = vmatprep.subr.bf16.mxu0 0
        %1154 = vmatpush1.bf16.msra.mxu0 0
        %1155 = vmatprep.subr.bf16.mxu0 0
        %1156 = vmatpush1.bf16.msra.mxu0 0
        %1157 = vmatprep.subr.bf16.mxu0 0
        %1158 = vmatpush1.bf16.msra.mxu0 0
        %1159 = vmatprep.subr.bf16.mxu0 0
        %1160 = vmatpush1.bf16.msra.mxu0 0
        %1161 = vmatprep.subr.bf16.mxu0 0
        %1162 = vmatpush1.bf16.msra.mxu0 0
        %1163 = vmatprep.subr.bf16.mxu0 0
        %1164 = vmatpush1.bf16.msra.mxu0 0
        %1165 = vmatprep.subr.bf16.mxu0 0
        %1166 = vmatpush1.bf16.msra.mxu0 0
        %1167 = vmatprep.subr.bf16.mxu0 0
        %1168 = vmatpush1.bf16.msra.mxu0 0
        %1169 = vmatprep.subr.bf16.mxu0 0
        %1170 = vmatpush1.bf16.msra.mxu0 0
        %1171 = vmatprep.subr.bf16.mxu0 0
        %1172 = vmatpush1.bf16.msra.mxu0 0
        %1173 = vmatprep.mubr.bf16.mxu0 0
        %1174 = vmatmul.mubr.bf16.gmra.mrb[0].mxu0 %v1130
        %v1175 = vpop.f32.mrb[0].mxu0
        %v1176 = vadd.f32 0.0, %v1175
        %v1177 = vpop.f32.mrb[0].mxu0
        %v1178 = vpop.f32.mrb[0].mxu0
        %v1179 = vadd.f32 0.0, %v1178
        %v1180 = vpop.f32.mrb[0].mxu0
        %1181 = vmatprep.mubr.bf16.mxu0 0
        %1182 = vmatmul.mubr.bf16.gmra.mrb[0].mxu0 %v1133
        %v1183 = vpop.f32.mrb[0].mxu0
        %v1184 = vadd.f32 0.0, %v1183
        %v1185 = vpop.f32.mrb[0].mxu0
        %v1186 = vpop.f32.mrb[0].mxu0
        %v1187 = vadd.f32 0.0, %v1186
        %v1188 = vpop.f32.mrb[0].mxu0
        %1189 = vmatprep.mubr.bf16.mxu0 0
        %1190 = vmatmul.mubr.bf16.gmra.mrb[0].mxu0 %v1136
        %v1191 = vpop.f32.mrb[0].mxu0
        %v1192 = vadd.f32 0.0, %v1191
        %v1193 = vpop.f32.mrb[0].mxu0
        %v1194 = vpop.f32.mrb[0].mxu0
        %v1195 = vadd.f32 0.0, %v1194
        %v1196 = vpop.f32.mrb[0].mxu0
        %1197 = vmatprep.mubr.bf16.mxu0 0
        %1198 = vmatmul.mubr.bf16.gmra.mrb[0].mxu0 %v1139
        %v1199 = vpop.f32.mrb[0].mxu0
        %v1200 = vadd.f32 0.0, %v1199
        %v1201 = vpop.f32.mrb[0].mxu0
        %v1202 = vpop.f32.mrb[0].mxu0
        %v1203 = vadd.f32 0.0, %v1202
        %v1204 = vpop.f32.mrb[0].mxu0
        %1205 = vdwg.mxu0
        %v1206 = vadd.f32 %v1084, %v1176
        %v1207 = vadd.f32 %v1085, %v1179
        %v1208 = vadd.f32 %v1086, %v1184
        %v1209 = vadd.f32 %v1087, %v1187
        %v1210 = vadd.f32 %v1088, %v1192
        %v1211 = vadd.f32 %v1089, %v1195
        %v1212 = vadd.f32 %v1090, %v1200
        %v1213 = vadd.f32 %v1091, %v1203
        %1214 = vst.msk [vmem:[#allocation2] sm:$0xff] %vm267, %v1206
        %1215 = vst.msk [vmem:[#allocation2 + $0x8] sm:$0xff] %vm267, %v1207
        %1216 = vst.msk [vmem:[#allocation2 + $0x10] sm:$0xff] %vm267, %v1208
        %1217 = vst.msk [vmem:[#allocation2 + $0x18] sm:$0xff] %vm267, %v1209
        %1218 = vst.msk [vmem:[#allocation2 + $0x20] sm:$0xff] %vm267, %v1210
        %1219 = vst.msk [vmem:[#allocation2 + $0x28] sm:$0xff] %vm267, %v1211
        %1220 = vst.msk [vmem:[#allocation2 + $0x30] sm:$0xff] %vm267, %v1212
        %1221 = vst.msk [vmem:[#allocation2 + $0x38] sm:$0xff] %vm267, %v1213
        %v1223 = vshrl.u32 %v1068, 16
        %v1225 = vrot.slane %v1223, 4
        %v1226 = vshll.u32 %v1068, 16
        %v1228 = vrot.slane %v1226, 5
        %v1229 = vor.u32 %v1225, %v1228
        %v1230 = vrot.slane %v1229, 4
        %v1232 = vshll.u32 %v1069, 16
        %v1234 = vrot.slane %v1232, 5
        %v1235 = vsel %vm435, %v1230, %v1234
        %v1237 = vshrl.u32 %v1070, 16
        %v1239 = vrot.slane %v1237, 4
        %v1240 = vshll.u32 %v1070, 16
        %v1242 = vrot.slane %v1240, 5
        %v1243 = vor.u32 %v1239, %v1242
        %v1244 = vrot.slane %v1243, 4
        %v1246 = vshll.u32 %v1071, 16
        %v1248 = vrot.slane %v1246, 5
        %v1249 = vsel %vm435, %v1244, %v1248
        %v1251 = vshrl.u32 %v1072, 16
        %v1253 = vrot.slane %v1251, 4
        %v1254 = vshll.u32 %v1072, 16
        %v1256 = vrot.slane %v1254, 5
        %v1257 = vor.u32 %v1253, %v1256
        %v1258 = vrot.slane %v1257, 4
        %v1260 = vshll.u32 %v1073, 16
        %v1262 = vrot.slane %v1260, 5
        %v1263 = vsel %vm435, %v1258, %v1262
        %v1265 = vshrl.u32 %v1074, 16
        %v1267 = vrot.slane %v1265, 4
        %v1268 = vshll.u32 %v1074, 16
        %v1270 = vrot.slane %v1268, 5
        %v1271 = vor.u32 %v1267, %v1270
        %v1272 = vrot.slane %v1271, 4
        %v1274 = vshll.u32 %v1075, 16
        %v1276 = vrot.slane %v1274, 5
        %v1277 = vsel %vm435, %v1272, %v1276
        %v1279 = vshrl.u32 %v1076, 16
        %v1281 = vrot.slane %v1279, 4
        %v1282 = vshll.u32 %v1076, 16
        %v1284 = vrot.slane %v1282, 5
        %v1285 = vor.u32 %v1281, %v1284
        %v1286 = vrot.slane %v1285, 4
        %v1288 = vshll.u32 %v1077, 16
        %v1290 = vrot.slane %v1288, 5
        %v1291 = vsel %vm435, %v1286, %v1290
        %v1293 = vshrl.u32 %v1078, 16
        %v1295 = vrot.slane %v1293, 4
        %v1296 = vshll.u32 %v1078, 16
        %v1298 = vrot.slane %v1296, 5
        %v1299 = vor.u32 %v1295, %v1298
        %v1300 = vrot.slane %v1299, 4
        %v1302 = vshll.u32 %v1079, 16
        %v1304 = vrot.slane %v1302, 5
        %v1305 = vsel %vm435, %v1300, %v1304
        %v1307 = vshrl.u32 %v1080, 16
        %v1309 = vrot.slane %v1307, 4
        %v1310 = vshll.u32 %v1080, 16
        %v1312 = vrot.slane %v1310, 5
        %v1313 = vor.u32 %v1309, %v1312
        %v1314 = vrot.slane %v1313, 4
        %v1316 = vshll.u32 %v1081, 16
        %v1318 = vrot.slane %v1316, 5
        %v1319 = vsel %vm435, %v1314, %v1318
        %v1321 = vshrl.u32 %v1082, 16
        %v1323 = vrot.slane %v1321, 4
        %v1324 = vshll.u32 %v1082, 16
        %v1326 = vrot.slane %v1324, 5
        %v1327 = vor.u32 %v1323, %v1326
        %v1328 = vrot.slane %v1327, 4
        %v1330 = vshll.u32 %v1083, 16
        %v1332 = vrot.slane %v1330, 5
        %v1333 = vsel %vm435, %v1328, %v1332
        %v1334 = vld [vmem:[#allocation2] sm:$0xff]
        %v1335 = vld [vmem:[#allocation2 + $0x8] sm:$0xff]
        %v1336 = vld [vmem:[#allocation2 + $0x10] sm:$0xff]
        %v1337 = vld [vmem:[#allocation2 + $0x18] sm:$0xff]
        %v1338 = vld [vmem:[#allocation2 + $0x20] sm:$0xff]
        %v1339 = vld [vmem:[#allocation2 + $0x28] sm:$0xff]
        %v1340 = vld [vmem:[#allocation2 + $0x30] sm:$0xff]
        %v1341 = vld [vmem:[#allocation2 + $0x38] sm:$0xff]
        %s1342 = scalar_lea.vmem %s257, 80
        %v1343 = vld [vmem:[%s1342] sm:$0xf]
        %v1344 = vld [vmem:[%s1342 + $0x4] sm:$0xf]
        %v1345 = vld [vmem:[%s1342 + $0x8] sm:$0xf]
        %v1346 = vld [vmem:[%s1342 + $0xc] sm:$0xf]
        %v1347 = vunpack.c.l.b16 %v1235
        %v1348 = vunpack.c.l.b16 %v1249
        %v1349 = vunpack.c.l.b16 %v1263
        %v1350 = vunpack.c.l.b16 %v1277
        %v1351 = vunpack.c.l.b16 %v1291
        %v1352 = vunpack.c.l.b16 %v1305
        %v1353 = vunpack.c.l.b16 %v1319
        %v1354 = vunpack.c.l.b16 %v1333
        %v1355 = vpack.c.b16 %v1348, %v1347
        %v1356 = vpack.c.b16 %v1350, %v1349
        %v1357 = vpack.c.b16 %v1352, %v1351
        %v1358 = vpack.c.b16 %v1354, %v1353
        %v1363 = vunpack.c.l.b16 %v1343
        %v1364 = vunpack.c.l.b16 %v1344
        %v1365 = vunpack.c.l.b16 %v1345
        %v1366 = vunpack.c.l.b16 %v1346
        %v1367 = vpack.c.b16 %v1364, %v1363
        %v1368 = vpack.c.b16 %v1366, %v1365
        %v1372 = vsel %vm339, %v1355, 0
        %v1375 = vsel %vm339, %v1356, 0
        %v1378 = vsel %vm339, %v1357, 0
        %v1381 = vsel %vm339, %v1358, 0
        %1383 = vmatprep.subr.bf16.mxu0 0
        %1384 = vmatpush1.bf16.msra.mxu0 %v1367
        %1385 = vmatprep.subr.bf16.mxu0 0
        %1386 = vmatpush1.bf16.msra.mxu0 %v1368
        %1387 = vmatprep.subr.bf16.mxu0 0
        %1388 = vmatpush1.bf16.msra.mxu0 0
        %1389 = vmatprep.subr.bf16.mxu0 0
        %1390 = vmatpush1.bf16.msra.mxu0 0
        %1391 = vmatprep.subr.bf16.mxu0 0
        %1392 = vmatpush1.bf16.msra.mxu0 0
        %1393 = vmatprep.subr.bf16.mxu0 0
        %1394 = vmatpush1.bf16.msra.mxu0 0
        %1395 = vmatprep.subr.bf16.mxu0 0
        %1396 = vmatpush1.bf16.msra.mxu0 0
        %1397 = vmatprep.subr.bf16.mxu0 0
        %1398 = vmatpush1.bf16.msra.mxu0 0
        %1399 = vmatprep.subr.bf16.mxu0 0
        %1400 = vmatpush1.bf16.msra.mxu0 0
        %1401 = vmatprep.subr.bf16.mxu0 0
        %1402 = vmatpush1.bf16.msra.mxu0 0
        %1403 = vmatprep.subr.bf16.mxu0 0
        %1404 = vmatpush1.bf16.msra.mxu0 0
        %1405 = vmatprep.subr.bf16.mxu0 0
        %1406 = vmatpush1.bf16.msra.mxu0 0
        %1407 = vmatprep.subr.bf16.mxu0 0
        %1408 = vmatpush1.bf16.msra.mxu0 0
        %1409 = vmatprep.subr.bf16.mxu0 0
        %1410 = vmatpush1.bf16.msra.mxu0 0
        %1411 = vmatprep.subr.bf16.mxu0 0
        %1412 = vmatpush1.bf16.msra.mxu0 0
        %1413 = vmatprep.subr.bf16.mxu0 0
        %1414 = vmatpush1.bf16.msra.mxu0 0
        %1415 = vmatprep.mubr.bf16.mxu0 0
        %1416 = vmatmul.mubr.bf16.gmra.mrb[0].mxu0 %v1372
        %v1417 = vpop.f32.mrb[0].mxu0
        %v1418 = vadd.f32 0.0, %v1417
        %v1419 = vpop.f32.mrb[0].mxu0
        %v1420 = vpop.f32.mrb[0].mxu0
        %v1421 = vadd.f32 0.0, %v1420
        %v1422 = vpop.f32.mrb[0].mxu0
        %1423 = vmatprep.mubr.bf16.mxu0 0
        %1424 = vmatmul.mubr.bf16.gmra.mrb[0].mxu0 %v1375
        %v1425 = vpop.f32.mrb[0].mxu0
        %v1426 = vadd.f32 0.0, %v1425
        %v1427 = vpop.f32.mrb[0].mxu0
        %v1428 = vpop.f32.mrb[0].mxu0
        %v1429 = vadd.f32 0.0, %v1428
        %v1430 = vpop.f32.mrb[0].mxu0
        %1431 = vmatprep.mubr.bf16.mxu0 0
        %1432 = vmatmul.mubr.bf16.gmra.mrb[0].mxu0 %v1378
        %v1433 = vpop.f32.mrb[0].mxu0
        %v1434 = vadd.f32 0.0, %v1433
        %v1435 = vpop.f32.mrb[0].mxu0
        %v1436 = vpop.f32.mrb[0].mxu0
        %v1437 = vadd.f32 0.0, %v1436
        %v1438 = vpop.f32.mrb[0].mxu0
        %1439 = vmatprep.mubr.bf16.mxu0 0
        %1440 = vmatmul.mubr.bf16.gmra.mrb[0].mxu0 %v1381
        %v1441 = vpop.f32.mrb[0].mxu0
        %v1442 = vadd.f32 0.0, %v1441
        %v1443 = vpop.f32.mrb[0].mxu0
        %v1444 = vpop.f32.mrb[0].mxu0
        %v1445 = vadd.f32 0.0, %v1444
        %v1446 = vpop.f32.mrb[0].mxu0
        %1447 = vdwg.mxu0
        %v1448 = vadd.f32 %v1334, %v1418
        %v1449 = vadd.f32 %v1335, %v1421
        %v1450 = vadd.f32 %v1336, %v1426
        %v1451 = vadd.f32 %v1337, %v1429
        %v1452 = vadd.f32 %v1338, %v1434
        %v1453 = vadd.f32 %v1339, %v1437
        %v1454 = vadd.f32 %v1340, %v1442
        %v1455 = vadd.f32 %v1341, %v1445
        %1456 = vst.msk [vmem:[#allocation2] sm:$0xff] %vm267, %v1448
        %1457 = vst.msk [vmem:[#allocation2 + $0x8] sm:$0xff] %vm267, %v1449
        %1458 = vst.msk [vmem:[#allocation2 + $0x10] sm:$0xff] %vm267, %v1450
        %1459 = vst.msk [vmem:[#allocation2 + $0x18] sm:$0xff] %vm267, %v1451
        %1460 = vst.msk [vmem:[#allocation2 + $0x20] sm:$0xff] %vm267, %v1452
        %1461 = vst.msk [vmem:[#allocation2 + $0x28] sm:$0xff] %vm267, %v1453
        %1462 = vst.msk [vmem:[#allocation2 + $0x30] sm:$0xff] %vm267, %v1454
        %1463 = vst.msk [vmem:[#allocation2 + $0x38] sm:$0xff] %vm267, %v1455
        %v1472 = vrot.slane %v1068, 5
        %v1473 = vrot.slane %v1472, 4
        %v1474 = vrot.slane %v1069, 5
        %v1475 = vsel %vm688, %v1473, %v1474
        %v1476 = vrot.slane %v1070, 5
        %v1477 = vrot.slane %v1476, 4
        %v1478 = vrot.slane %v1071, 5
        %v1479 = vsel %vm688, %v1477, %v1478
        %v1480 = vrot.slane %v1072, 5
        %v1481 = vrot.slane %v1480, 4
        %v1482 = vrot.slane %v1073, 5
        %v1483 = vsel %vm688, %v1481, %v1482
        %v1484 = vrot.slane %v1074, 5
        %v1485 = vrot.slane %v1484, 4
        %v1486 = vrot.slane %v1075, 5
        %v1487 = vsel %vm688, %v1485, %v1486
        %v1488 = vrot.slane %v1076, 5
        %v1489 = vrot.slane %v1488, 4
        %v1490 = vrot.slane %v1077, 5
        %v1491 = vsel %vm688, %v1489, %v1490
        %v1492 = vrot.slane %v1078, 5
        %v1493 = vrot.slane %v1492, 4
        %v1494 = vrot.slane %v1079, 5
        %v1495 = vsel %vm688, %v1493, %v1494
        %v1496 = vrot.slane %v1080, 5
        %v1497 = vrot.slane %v1496, 4
        %v1498 = vrot.slane %v1081, 5
        %v1499 = vsel %vm688, %v1497, %v1498
        %v1500 = vrot.slane %v1082, 5
        %v1501 = vrot.slane %v1500, 4
        %v1502 = vrot.slane %v1083, 5
        %v1503 = vsel %vm688, %v1501, %v1502
        %v1504 = vld [vmem:[#allocation2] sm:$0xff]
        %v1505 = vld [vmem:[#allocation2 + $0x8] sm:$0xff]
        %v1506 = vld [vmem:[#allocation2 + $0x10] sm:$0xff]
        %v1507 = vld [vmem:[#allocation2 + $0x18] sm:$0xff]
        %v1508 = vld [vmem:[#allocation2 + $0x20] sm:$0xff]
        %v1509 = vld [vmem:[#allocation2 + $0x28] sm:$0xff]
        %v1510 = vld [vmem:[#allocation2 + $0x30] sm:$0xff]
        %v1511 = vld [vmem:[#allocation2 + $0x38] sm:$0xff]
        %s1512 = scalar_lea.vmem %s257, 96
        %v1513 = vld [vmem:[%s1512] sm:$0xf]
        %v1514 = vld [vmem:[%s1512 + $0x4] sm:$0xf]
        %v1515 = vld [vmem:[%s1512 + $0x8] sm:$0xf]
        %v1516 = vld [vmem:[%s1512 + $0xc] sm:$0xf]
        %v1517 = vunpack.c.l.b16 %v1475
        %v1518 = vunpack.c.l.b16 %v1479
        %v1519 = vunpack.c.l.b16 %v1483
        %v1520 = vunpack.c.l.b16 %v1487
        %v1521 = vunpack.c.l.b16 %v1491
        %v1522 = vunpack.c.l.b16 %v1495
        %v1523 = vunpack.c.l.b16 %v1499
        %v1524 = vunpack.c.l.b16 %v1503
        %v1525 = vpack.c.b16 %v1518, %v1517
        %v1526 = vpack.c.b16 %v1520, %v1519
        %v1527 = vpack.c.b16 %v1522, %v1521
        %v1528 = vpack.c.b16 %v1524, %v1523
        %v1533 = vunpack.c.l.b16 %v1513
        %v1534 = vunpack.c.l.b16 %v1514
        %v1535 = vunpack.c.l.b16 %v1515
        %v1536 = vunpack.c.l.b16 %v1516
        %v1537 = vpack.c.b16 %v1534, %v1533
        %v1538 = vpack.c.b16 %v1536, %v1535
        %v1542 = vsel %vm339, %v1525, 0
        %v1545 = vsel %vm339, %v1526, 0
        %v1548 = vsel %vm339, %v1527, 0
        %v1551 = vsel %vm339, %v1528, 0
        %1553 = vmatprep.subr.bf16.mxu0 0
        %1554 = vmatpush1.bf16.msra.mxu0 %v1537
        %1555 = vmatprep.subr.bf16.mxu0 0
        %1556 = vmatpush1.bf16.msra.mxu0 %v1538
        %1557 = vmatprep.subr.bf16.mxu0 0
        %1558 = vmatpush1.bf16.msra.mxu0 0
        %1559 = vmatprep.subr.bf16.mxu0 0
        %1560 = vmatpush1.bf16.msra.mxu0 0
        %1561 = vmatprep.subr.bf16.mxu0 0
        %1562 = vmatpush1.bf16.msra.mxu0 0
        %1563 = vmatprep.subr.bf16.mxu0 0
        %1564 = vmatpush1.bf16.msra.mxu0 0
        %1565 = vmatprep.subr.bf16.mxu0 0
        %1566 = vmatpush1.bf16.msra.mxu0 0
        %1567 = vmatprep.subr.bf16.mxu0 0
        %1568 = vmatpush1.bf16.msra.mxu0 0
        %1569 = vmatprep.subr.bf16.mxu0 0
        %1570 = vmatpush1.bf16.msra.mxu0 0
        %1571 = vmatprep.subr.bf16.mxu0 0
        %1572 = vmatpush1.bf16.msra.mxu0 0
        %1573 = vmatprep.subr.bf16.mxu0 0
        %1574 = vmatpush1.bf16.msra.mxu0 0
        %1575 = vmatprep.subr.bf16.mxu0 0
        %1576 = vmatpush1.bf16.msra.mxu0 0
        %1577 = vmatprep.subr.bf16.mxu0 0
        %1578 = vmatpush1.bf16.msra.mxu0 0
        %1579 = vmatprep.subr.bf16.mxu0 0
        %1580 = vmatpush1.bf16.msra.mxu0 0
        %1581 = vmatprep.subr.bf16.mxu0 0
        %1582 = vmatpush1.bf16.msra.mxu0 0
        %1583 = vmatprep.subr.bf16.mxu0 0
        %1584 = vmatpush1.bf16.msra.mxu0 0
        %1585 = vmatprep.mubr.bf16.mxu0 0
        %1586 = vmatmul.mubr.bf16.gmra.mrb[0].mxu0 %v1542
        %v1587 = vpop.f32.mrb[0].mxu0
        %v1588 = vadd.f32 0.0, %v1587
        %v1589 = vpop.f32.mrb[0].mxu0
        %v1590 = vpop.f32.mrb[0].mxu0
        %v1591 = vadd.f32 0.0, %v1590
        %v1592 = vpop.f32.mrb[0].mxu0
        %1593 = vmatprep.mubr.bf16.mxu0 0
        %1594 = vmatmul.mubr.bf16.gmra.mrb[0].mxu0 %v1545
        %v1595 = vpop.f32.mrb[0].mxu0
        %v1596 = vadd.f32 0.0, %v1595
        %v1597 = vpop.f32.mrb[0].mxu0
        %v1598 = vpop.f32.mrb[0].mxu0
        %v1599 = vadd.f32 0.0, %v1598
        %v1600 = vpop.f32.mrb[0].mxu0
        %1601 = vmatprep.mubr.bf16.mxu0 0
        %1602 = vmatmul.mubr.bf16.gmra.mrb[0].mxu0 %v1548
        %v1603 = vpop.f32.mrb[0].mxu0
        %v1604 = vadd.f32 0.0, %v1603
        %v1605 = vpop.f32.mrb[0].mxu0
        %v1606 = vpop.f32.mrb[0].mxu0
        %v1607 = vadd.f32 0.0, %v1606
        %v1608 = vpop.f32.mrb[0].mxu0
        %1609 = vmatprep.mubr.bf16.mxu0 0
        %1610 = vmatmul.mubr.bf16.gmra.mrb[0].mxu0 %v1551
        %v1611 = vpop.f32.mrb[0].mxu0
        %v1612 = vadd.f32 0.0, %v1611
        %v1613 = vpop.f32.mrb[0].mxu0
        %v1614 = vpop.f32.mrb[0].mxu0
        %v1615 = vadd.f32 0.0, %v1614
        %v1616 = vpop.f32.mrb[0].mxu0
        %1617 = vdwg.mxu0
        %v1618 = vadd.f32 %v1504, %v1588
        %v1619 = vadd.f32 %v1505, %v1591
        %v1620 = vadd.f32 %v1506, %v1596
        %v1621 = vadd.f32 %v1507, %v1599
        %v1622 = vadd.f32 %v1508, %v1604
        %v1623 = vadd.f32 %v1509, %v1607
        %v1624 = vadd.f32 %v1510, %v1612
        %v1625 = vadd.f32 %v1511, %v1615
        %1626 = vst.msk [vmem:[#allocation2] sm:$0xff] %vm267, %v1618
        %1627 = vst.msk [vmem:[#allocation2 + $0x8] sm:$0xff] %vm267, %v1619
        %1628 = vst.msk [vmem:[#allocation2 + $0x10] sm:$0xff] %vm267, %v1620
        %1629 = vst.msk [vmem:[#allocation2 + $0x18] sm:$0xff] %vm267, %v1621
        %1630 = vst.msk [vmem:[#allocation2 + $0x20] sm:$0xff] %vm267, %v1622
        %1631 = vst.msk [vmem:[#allocation2 + $0x28] sm:$0xff] %vm267, %v1623
        %1632 = vst.msk [vmem:[#allocation2 + $0x30] sm:$0xff] %vm267, %v1624
        %1633 = vst.msk [vmem:[#allocation2 + $0x38] sm:$0xff] %vm267, %v1625
        %v1634 = vrot.slane %v1223, 5
        %v1635 = vrot.slane %v1226, 6
        %v1636 = vor.u32 %v1634, %v1635
        %v1637 = vrot.slane %v1636, 4
        %v1638 = vshrl.u32 %v1069, 16
        %v1640 = vrot.slane %v1638, 5
        %v1641 = vrot.slane %v1232, 6
        %v1642 = vor.u32 %v1640, %v1641
        %v1643 = vsel %vm853, %v1637, %v1642
        %v1644 = vrot.slane %v1237, 5
        %v1645 = vrot.slane %v1240, 6
        %v1646 = vor.u32 %v1644, %v1645
        %v1647 = vrot.slane %v1646, 4
        %v1648 = vshrl.u32 %v1071, 16
        %v1650 = vrot.slane %v1648, 5
        %v1651 = vrot.slane %v1246, 6
        %v1652 = vor.u32 %v1650, %v1651
        %v1653 = vsel %vm853, %v1647, %v1652
        %v1654 = vrot.slane %v1251, 5
        %v1655 = vrot.slane %v1254, 6
        %v1656 = vor.u32 %v1654, %v1655
        %v1657 = vrot.slane %v1656, 4
        %v1658 = vshrl.u32 %v1073, 16
        %v1660 = vrot.slane %v1658, 5
        %v1661 = vrot.slane %v1260, 6
        %v1662 = vor.u32 %v1660, %v1661
        %v1663 = vsel %vm853, %v1657, %v1662
        %v1664 = vrot.slane %v1265, 5
        %v1665 = vrot.slane %v1268, 6
        %v1666 = vor.u32 %v1664, %v1665
        %v1667 = vrot.slane %v1666, 4
        %v1668 = vshrl.u32 %v1075, 16
        %v1670 = vrot.slane %v1668, 5
        %v1671 = vrot.slane %v1274, 6
        %v1672 = vor.u32 %v1670, %v1671
        %v1673 = vsel %vm853, %v1667, %v1672
        %v1674 = vrot.slane %v1279, 5
        %v1675 = vrot.slane %v1282, 6
        %v1676 = vor.u32 %v1674, %v1675
        %v1677 = vrot.slane %v1676, 4
        %v1678 = vshrl.u32 %v1077, 16
        %v1680 = vrot.slane %v1678, 5
        %v1681 = vrot.slane %v1288, 6
        %v1682 = vor.u32 %v1680, %v1681
        %v1683 = vsel %vm853, %v1677, %v1682
        %v1684 = vrot.slane %v1293, 5
        %v1685 = vrot.slane %v1296, 6
        %v1686 = vor.u32 %v1684, %v1685
        %v1687 = vrot.slane %v1686, 4
        %v1688 = vshrl.u32 %v1079, 16
        %v1690 = vrot.slane %v1688, 5
        %v1691 = vrot.slane %v1302, 6
        %v1692 = vor.u32 %v1690, %v1691
        %v1693 = vsel %vm853, %v1687, %v1692
        %v1694 = vrot.slane %v1307, 5
        %v1695 = vrot.slane %v1310, 6
        %v1696 = vor.u32 %v1694, %v1695
        %v1697 = vrot.slane %v1696, 4
        %v1698 = vshrl.u32 %v1081, 16
        %v1700 = vrot.slane %v1698, 5
        %v1701 = vrot.slane %v1316, 6
        %v1702 = vor.u32 %v1700, %v1701
        %v1703 = vsel %vm853, %v1697, %v1702
        %v1704 = vrot.slane %v1321, 5
        %v1705 = vrot.slane %v1324, 6
        %v1706 = vor.u32 %v1704, %v1705
        %v1707 = vrot.slane %v1706, 4
        %v1708 = vshrl.u32 %v1083, 16
        %v1710 = vrot.slane %v1708, 5
        %v1711 = vrot.slane %v1330, 6
        %v1712 = vor.u32 %v1710, %v1711
        %v1713 = vsel %vm853, %v1707, %v1712
        %v1714 = vld [vmem:[#allocation2] sm:$0xff]
        %v1715 = vld [vmem:[#allocation2 + $0x8] sm:$0xff]
        %v1716 = vld [vmem:[#allocation2 + $0x10] sm:$0xff]
        %v1717 = vld [vmem:[#allocation2 + $0x18] sm:$0xff]
        %v1718 = vld [vmem:[#allocation2 + $0x20] sm:$0xff]
        %v1719 = vld [vmem:[#allocation2 + $0x28] sm:$0xff]
        %v1720 = vld [vmem:[#allocation2 + $0x30] sm:$0xff]
        %v1721 = vld [vmem:[#allocation2 + $0x38] sm:$0xff]
        %s1722 = scalar_lea.vmem %s257, 112
        %v1723 = vld [vmem:[%s1722] sm:$0xf]
        %v1724 = vld [vmem:[%s1722 + $0x4] sm:$0xf]
        %v1725 = vld [vmem:[%s1722 + $0x8] sm:$0xf]
        %v1726 = vld [vmem:[%s1722 + $0xc] sm:$0xf]
        %v1727 = vunpack.c.l.b16 %v1643
        %v1728 = vunpack.c.l.b16 %v1653
        %v1729 = vunpack.c.l.b16 %v1663
        %v1730 = vunpack.c.l.b16 %v1673
        %v1731 = vunpack.c.l.b16 %v1683
        %v1732 = vunpack.c.l.b16 %v1693
        %v1733 = vunpack.c.l.b16 %v1703
        %v1734 = vunpack.c.l.b16 %v1713
        %v1735 = vpack.c.b16 %v1728, %v1727
        %v1736 = vpack.c.b16 %v1730, %v1729
        %v1737 = vpack.c.b16 %v1732, %v1731
        %v1738 = vpack.c.b16 %v1734, %v1733
        %v1743 = vunpack.c.l.b16 %v1723
        %v1744 = vunpack.c.l.b16 %v1724
        %v1745 = vunpack.c.l.b16 %v1725
        %v1746 = vunpack.c.l.b16 %v1726
        %v1747 = vpack.c.b16 %v1744, %v1743
        %v1748 = vpack.c.b16 %v1746, %v1745
        %v1752 = vsel %vm339, %v1735, 0
        %v1755 = vsel %vm339, %v1736, 0
        %v1758 = vsel %vm339, %v1737, 0
        %v1761 = vsel %vm339, %v1738, 0
        %1763 = vmatprep.subr.bf16.mxu0 0
        %1764 = vmatpush1.bf16.msra.mxu0 %v1747
        %1765 = vmatprep.subr.bf16.mxu0 0
        %1766 = vmatpush1.bf16.msra.mxu0 %v1748
        %1767 = vmatprep.subr.bf16.mxu0 0
        %1768 = vmatpush1.bf16.msra.mxu0 0
        %1769 = vmatprep.subr.bf16.mxu0 0
        %1770 = vmatpush1.bf16.msra.mxu0 0
        %1771 = vmatprep.subr.bf16.mxu0 0
        %1772 = vmatpush1.bf16.msra.mxu0 0
        %1773 = vmatprep.subr.bf16.mxu0 0
        %1774 = vmatpush1.bf16.msra.mxu0 0
        %1775 = vmatprep.subr.bf16.mxu0 0
        %1776 = vmatpush1.bf16.msra.mxu0 0
        %1777 = vmatprep.subr.bf16.mxu0 0
        %1778 = vmatpush1.bf16.msra.mxu0 0
        %1779 = vmatprep.subr.bf16.mxu0 0
        %1780 = vmatpush1.bf16.msra.mxu0 0
        %1781 = vmatprep.subr.bf16.mxu0 0
        %1782 = vmatpush1.bf16.msra.mxu0 0
        %1783 = vmatprep.subr.bf16.mxu0 0
        %1784 = vmatpush1.bf16.msra.mxu0 0
        %1785 = vmatprep.subr.bf16.mxu0 0
        %1786 = vmatpush1.bf16.msra.mxu0 0
        %1787 = vmatprep.subr.bf16.mxu0 0
        %1788 = vmatpush1.bf16.msra.mxu0 0
        %1789 = vmatprep.subr.bf16.mxu0 0
        %1790 = vmatpush1.bf16.msra.mxu0 0
        %1791 = vmatprep.subr.bf16.mxu0 0
        %1792 = vmatpush1.bf16.msra.mxu0 0
        %1793 = vmatprep.subr.bf16.mxu0 0
        %1794 = vmatpush1.bf16.msra.mxu0 0
        %1795 = vmatprep.mubr.bf16.mxu0 0
        %1796 = vmatmul.mubr.bf16.gmra.mrb[0].mxu0 %v1752
        %v1797 = vpop.f32.mrb[0].mxu0
        %v1798 = vadd.f32 0.0, %v1797
        %v1799 = vpop.f32.mrb[0].mxu0
        %v1800 = vpop.f32.mrb[0].mxu0
        %v1801 = vadd.f32 0.0, %v1800
        %v1802 = vpop.f32.mrb[0].mxu0
        %1803 = vmatprep.mubr.bf16.mxu0 0
        %1804 = vmatmul.mubr.bf16.gmra.mrb[0].mxu0 %v1755
        %v1805 = vpop.f32.mrb[0].mxu0
        %v1806 = vadd.f32 0.0, %v1805
        %v1807 = vpop.f32.mrb[0].mxu0
        %v1808 = vpop.f32.mrb[0].mxu0
        %v1809 = vadd.f32 0.0, %v1808
        %v1810 = vpop.f32.mrb[0].mxu0
        %1811 = vmatprep.mubr.bf16.mxu0 0
        %1812 = vmatmul.mubr.bf16.gmra.mrb[0].mxu0 %v1758
        %v1813 = vpop.f32.mrb[0].mxu0
        %v1814 = vadd.f32 0.0, %v1813
        %v1815 = vpop.f32.mrb[0].mxu0
        %v1816 = vpop.f32.mrb[0].mxu0
        %v1817 = vadd.f32 0.0, %v1816
        %v1818 = vpop.f32.mrb[0].mxu0
        %1819 = vmatprep.mubr.bf16.mxu0 0
        %1820 = vmatmul.mubr.bf16.gmra.mrb[0].mxu0 %v1761
        %v1821 = vpop.f32.mrb[0].mxu0
        %v1822 = vadd.f32 0.0, %v1821
        %v1823 = vpop.f32.mrb[0].mxu0
        %v1824 = vpop.f32.mrb[0].mxu0
        %v1825 = vadd.f32 0.0, %v1824
        %v1826 = vpop.f32.mrb[0].mxu0
        %1827 = vdwg.mxu0
        %v1828 = vadd.f32 %v1714, %v1798
        %v1829 = vadd.f32 %v1715, %v1801
        %v1830 = vadd.f32 %v1716, %v1806
        %v1831 = vadd.f32 %v1717, %v1809
        %v1832 = vadd.f32 %v1718, %v1814
        %v1833 = vadd.f32 %v1719, %v1817
        %v1834 = vadd.f32 %v1720, %v1822
        %v1835 = vadd.f32 %v1721, %v1825
        %1836 = vst.msk [vmem:[#allocation2] sm:$0xff] %vm267, %v1828
        %1837 = vst.msk [vmem:[#allocation2 + $0x8] sm:$0xff] %vm267, %v1829
        %1838 = vst.msk [vmem:[#allocation2 + $0x10] sm:$0xff] %vm267, %v1830
        %1839 = vst.msk [vmem:[#allocation2 + $0x18] sm:$0xff] %vm267, %v1831
        %1840 = vst.msk [vmem:[#allocation2 + $0x20] sm:$0xff] %vm267, %v1832
        %1841 = vst.msk [vmem:[#allocation2 + $0x28] sm:$0xff] %vm267, %v1833
        %1842 = vst.msk [vmem:[#allocation2 + $0x30] sm:$0xff] %vm267, %v1834
        %1843 = vst.msk [vmem:[#allocation2 + $0x38] sm:$0xff] %vm267, %v1835
        %s1844 = sadd.s32 %s266, 2
        %s1845 = smul.u32 %s1844, 2
        %s1846 = smul.addr %s1845, 4
        %s1847 = scalar_lea.vmem %s253, %s1846
        %v1848 = vld [vmem:[%s1847] sm:$0xf]
        %v1849 = vld [vmem:[%s1847 + $0x4] sm:$0x3]
        %v1850 = vld [vmem:[%s1847 + $0x8] sm:$0xf]
        %v1851 = vld [vmem:[%s1847 + $0xc] sm:$0x3]
        %v1852 = vld [vmem:[%s1847 + $0x10] sm:$0xf]
        %v1853 = vld [vmem:[%s1847 + $0x14] sm:$0x3]
        %v1854 = vld [vmem:[%s1847 + $0x18] sm:$0xf]
        %v1855 = vld [vmem:[%s1847 + $0x1c] sm:$0x3]
        %v1856 = vld [vmem:[%s1847 + $0x20] sm:$0xf]
        %v1857 = vld [vmem:[%s1847 + $0x24] sm:$0x3]
        %v1858 = vld [vmem:[%s1847 + $0x28] sm:$0xf]
        %v1859 = vld [vmem:[%s1847 + $0x2c] sm:$0x3]
        %v1860 = vld [vmem:[%s1847 + $0x30] sm:$0xf]
        %v1861 = vld [vmem:[%s1847 + $0x34] sm:$0x3]
        %v1862 = vld [vmem:[%s1847 + $0x38] sm:$0xf]
        %v1863 = vld [vmem:[%s1847 + $0x3c] sm:$0x3]
        %v1864 = vld [vmem:[#allocation2] sm:$0xff]
        %v1865 = vld [vmem:[#allocation2 + $0x8] sm:$0xff]
        %v1866 = vld [vmem:[#allocation2 + $0x10] sm:$0xff]
        %v1867 = vld [vmem:[#allocation2 + $0x18] sm:$0xff]
        %v1868 = vld [vmem:[#allocation2 + $0x20] sm:$0xff]
        %v1869 = vld [vmem:[#allocation2 + $0x28] sm:$0xff]
        %v1870 = vld [vmem:[#allocation2 + $0x30] sm:$0xff]
        %v1871 = vld [vmem:[#allocation2 + $0x38] sm:$0xff]
        %s1872 = scalar_lea.vmem %s257, 128
        %v1873 = vld [vmem:[%s1872] sm:$0xf]
        %v1874 = vld [vmem:[%s1872 + $0x4] sm:$0xf]
        %v1875 = vld [vmem:[%s1872 + $0x8] sm:$0xf]
        %v1876 = vld [vmem:[%s1872 + $0xc] sm:$0xf]
        %v1885 = vunpack.c.l.b16 %v1848
        %v1886 = vunpack.c.l.b16 %v1850
        %v1887 = vunpack.c.l.b16 %v1852
        %v1888 = vunpack.c.l.b16 %v1854
        %v1889 = vunpack.c.l.b16 %v1856
        %v1890 = vunpack.c.l.b16 %v1858
        %v1891 = vunpack.c.l.b16 %v1860
        %v1892 = vunpack.c.l.b16 %v1862
        %v1893 = vpack.c.b16 %v1886, %v1885
        %v1894 = vpack.c.b16 %v1888, %v1887
        %v1895 = vpack.c.b16 %v1890, %v1889
        %v1896 = vpack.c.b16 %v1892, %v1891
        %v1901 = vunpack.c.l.b16 %v1873
        %v1902 = vunpack.c.l.b16 %v1874
        %v1903 = vunpack.c.l.b16 %v1875
        %v1904 = vunpack.c.l.b16 %v1876
        %v1905 = vpack.c.b16 %v1902, %v1901
        %v1906 = vpack.c.b16 %v1904, %v1903
        %v1910 = vsel %vm339, %v1893, 0
        %v1913 = vsel %vm339, %v1894, 0
        %v1916 = vsel %vm339, %v1895, 0
        %v1919 = vsel %vm339, %v1896, 0
        %1921 = vmatprep.subr.bf16.mxu0 0
        %1922 = vmatpush1.bf16.msra.mxu0 %v1905
        %1923 = vmatprep.subr.bf16.mxu0 0
        %1924 = vmatpush1.bf16.msra.mxu0 %v1906
        %1925 = vmatprep.subr.bf16.mxu0 0
        %1926 = vmatpush1.bf16.msra.mxu0 0
        %1927 = vmatprep.subr.bf16.mxu0 0
        %1928 = vmatpush1.bf16.msra.mxu0 0
        %1929 = vmatprep.subr.bf16.mxu0 0
        %1930 = vmatpush1.bf16.msra.mxu0 0
        %1931 = vmatprep.subr.bf16.mxu0 0
        %1932 = vmatpush1.bf16.msra.mxu0 0
        %1933 = vmatprep.subr.bf16.mxu0 0
        %1934 = vmatpush1.bf16.msra.mxu0 0
        %1935 = vmatprep.subr.bf16.mxu0 0
        %1936 = vmatpush1.bf16.msra.mxu0 0
        %1937 = vmatprep.subr.bf16.mxu0 0
        %1938 = vmatpush1.bf16.msra.mxu0 0
        %1939 = vmatprep.subr.bf16.mxu0 0
        %1940 = vmatpush1.bf16.msra.mxu0 0
        %1941 = vmatprep.subr.bf16.mxu0 0
        %1942 = vmatpush1.bf16.msra.mxu0 0
        %1943 = vmatprep.subr.bf16.mxu0 0
        %1944 = vmatpush1.bf16.msra.mxu0 0
        %1945 = vmatprep.subr.bf16.mxu0 0
        %1946 = vmatpush1.bf16.msra.mxu0 0
        %1947 = vmatprep.subr.bf16.mxu0 0
        %1948 = vmatpush1.bf16.msra.mxu0 0
        %1949 = vmatprep.subr.bf16.mxu0 0
        %1950 = vmatpush1.bf16.msra.mxu0 0
        %1951 = vmatprep.subr.bf16.mxu0 0
        %1952 = vmatpush1.bf16.msra.mxu0 0
        %1953 = vmatprep.mubr.bf16.mxu0 0
        %1954 = vmatmul.mubr.bf16.gmra.mrb[0].mxu0 %v1910
        %v1955 = vpop.f32.mrb[0].mxu0
        %v1956 = vadd.f32 0.0, %v1955
        %v1957 = vpop.f32.mrb[0].mxu0
        %v1958 = vpop.f32.mrb[0].mxu0
        %v1959 = vadd.f32 0.0, %v1958
        %v1960 = vpop.f32.mrb[0].mxu0
        %1961 = vmatprep.mubr.bf16.mxu0 0
        %1962 = vmatmul.mubr.bf16.gmra.mrb[0].mxu0 %v1913
        %v1963 = vpop.f32.mrb[0].mxu0
        %v1964 = vadd.f32 0.0, %v1963
        %v1965 = vpop.f32.mrb[0].mxu0
        %v1966 = vpop.f32.mrb[0].mxu0
        %v1967 = vadd.f32 0.0, %v1966
        %v1968 = vpop.f32.mrb[0].mxu0
        %1969 = vmatprep.mubr.bf16.mxu0 0
        %1970 = vmatmul.mubr.bf16.gmra.mrb[0].mxu0 %v1916
        %v1971 = vpop.f32.mrb[0].mxu0
        %v1972 = vadd.f32 0.0, %v1971
        %v1973 = vpop.f32.mrb[0].mxu0
        %v1974 = vpop.f32.mrb[0].mxu0
        %v1975 = vadd.f32 0.0, %v1974
        %v1976 = vpop.f32.mrb[0].mxu0
        %1977 = vmatprep.mubr.bf16.mxu0 0
        %1978 = vmatmul.mubr.bf16.gmra.mrb[0].mxu0 %v1919
        %v1979 = vpop.f32.mrb[0].mxu0
        %v1980 = vadd.f32 0.0, %v1979
        %v1981 = vpop.f32.mrb[0].mxu0
        %v1982 = vpop.f32.mrb[0].mxu0
        %v1983 = vadd.f32 0.0, %v1982
        %v1984 = vpop.f32.mrb[0].mxu0
        %1985 = vdwg.mxu0
        %v1986 = vadd.f32 %v1864, %v1956
        %v1987 = vadd.f32 %v1865, %v1959
        %v1988 = vadd.f32 %v1866, %v1964
        %v1989 = vadd.f32 %v1867, %v1967
        %v1990 = vadd.f32 %v1868, %v1972
        %v1991 = vadd.f32 %v1869, %v1975
        %v1992 = vadd.f32 %v1870, %v1980
        %v1993 = vadd.f32 %v1871, %v1983
        %1994 = vst.msk [vmem:[#allocation2] sm:$0xff] %vm267, %v1986
        %1995 = vst.msk [vmem:[#allocation2 + $0x8] sm:$0xff] %vm267, %v1987
        %1996 = vst.msk [vmem:[#allocation2 + $0x10] sm:$0xff] %vm267, %v1988
        %1997 = vst.msk [vmem:[#allocation2 + $0x18] sm:$0xff] %vm267, %v1989
        %1998 = vst.msk [vmem:[#allocation2 + $0x20] sm:$0xff] %vm267, %v1990
        %1999 = vst.msk [vmem:[#allocation2 + $0x28] sm:$0xff] %vm267, %v1991
        %2000 = vst.msk [vmem:[#allocation2 + $0x30] sm:$0xff] %vm267, %v1992
        %2001 = vst.msk [vmem:[#allocation2 + $0x38] sm:$0xff] %vm267, %v1993
        %v2003 = vshrl.u32 %v1848, 16
        %v2005 = vrot.slane %v2003, 4
        %v2006 = vshll.u32 %v1848, 16
        %v2008 = vrot.slane %v2006, 5
        %v2009 = vor.u32 %v2005, %v2008
        %v2010 = vrot.slane %v2009, 4
        %v2012 = vshll.u32 %v1849, 16
        %v2014 = vrot.slane %v2012, 5
        %v2015 = vsel %vm435, %v2010, %v2014
        %v2017 = vshrl.u32 %v1850, 16
        %v2019 = vrot.slane %v2017, 4
        %v2020 = vshll.u32 %v1850, 16
        %v2022 = vrot.slane %v2020, 5
        %v2023 = vor.u32 %v2019, %v2022
        %v2024 = vrot.slane %v2023, 4
        %v2026 = vshll.u32 %v1851, 16
        %v2028 = vrot.slane %v2026, 5
        %v2029 = vsel %vm435, %v2024, %v2028
        %v2031 = vshrl.u32 %v1852, 16
        %v2033 = vrot.slane %v2031, 4
        %v2034 = vshll.u32 %v1852, 16
        %v2036 = vrot.slane %v2034, 5
        %v2037 = vor.u32 %v2033, %v2036
        %v2038 = vrot.slane %v2037, 4
        %v2040 = vshll.u32 %v1853, 16
        %v2042 = vrot.slane %v2040, 5
        %v2043 = vsel %vm435, %v2038, %v2042
        %v2045 = vshrl.u32 %v1854, 16
        %v2047 = vrot.slane %v2045, 4
        %v2048 = vshll.u32 %v1854, 16
        %v2050 = vrot.slane %v2048, 5
        %v2051 = vor.u32 %v2047, %v2050
        %v2052 = vrot.slane %v2051, 4
        %v2054 = vshll.u32 %v1855, 16
        %v2056 = vrot.slane %v2054, 5
        %v2057 = vsel %vm435, %v2052, %v2056
        %v2059 = vshrl.u32 %v1856, 16
        %v2061 = vrot.slane %v2059, 4
        %v2062 = vshll.u32 %v1856, 16
        %v2064 = vrot.slane %v2062, 5
        %v2065 = vor.u32 %v2061, %v2064
        %v2066 = vrot.slane %v2065, 4
        %v2068 = vshll.u32 %v1857, 16
        %v2070 = vrot.slane %v2068, 5
        %v2071 = vsel %vm435, %v2066, %v2070
        %v2073 = vshrl.u32 %v1858, 16
        %v2075 = vrot.slane %v2073, 4
        %v2076 = vshll.u32 %v1858, 16
        %v2078 = vrot.slane %v2076, 5
        %v2079 = vor.u32 %v2075, %v2078
        %v2080 = vrot.slane %v2079, 4
        %v2082 = vshll.u32 %v1859, 16
        %v2084 = vrot.slane %v2082, 5
        %v2085 = vsel %vm435, %v2080, %v2084
        %v2087 = vshrl.u32 %v1860, 16
        %v2089 = vrot.slane %v2087, 4
        %v2090 = vshll.u32 %v1860, 16
        %v2092 = vrot.slane %v2090, 5
        %v2093 = vor.u32 %v2089, %v2092
        %v2094 = vrot.slane %v2093, 4
        %v2096 = vshll.u32 %v1861, 16
        %v2098 = vrot.slane %v2096, 5
        %v2099 = vsel %vm435, %v2094, %v2098
        %v2101 = vshrl.u32 %v1862, 16
        %v2103 = vrot.slane %v2101, 4
        %v2104 = vshll.u32 %v1862, 16
        %v2106 = vrot.slane %v2104, 5
        %v2107 = vor.u32 %v2103, %v2106
        %v2108 = vrot.slane %v2107, 4
        %v2110 = vshll.u32 %v1863, 16
        %v2112 = vrot.slane %v2110, 5
        %v2113 = vsel %vm435, %v2108, %v2112
        %v2114 = vld [vmem:[#allocation2] sm:$0xff]
        %v2115 = vld [vmem:[#allocation2 + $0x8] sm:$0xff]
        %v2116 = vld [vmem:[#allocation2 + $0x10] sm:$0xff]
        %v2117 = vld [vmem:[#allocation2 + $0x18] sm:$0xff]
        %v2118 = vld [vmem:[#allocation2 + $0x20] sm:$0xff]
        %v2119 = vld [vmem:[#allocation2 + $0x28] sm:$0xff]
        %v2120 = vld [vmem:[#allocation2 + $0x30] sm:$0xff]
        %v2121 = vld [vmem:[#allocation2 + $0x38] sm:$0xff]
        %s2122 = scalar_lea.vmem %s257, 144
        %v2123 = vld [vmem:[%s2122] sm:$0xf]
        %v2124 = vld [vmem:[%s2122 + $0x4] sm:$0xf]
        %v2125 = vld [vmem:[%s2122 + $0x8] sm:$0xf]
        %v2126 = vld [vmem:[%s2122 + $0xc] sm:$0xf]
        %v2127 = vunpack.c.l.b16 %v2015
        %v2128 = vunpack.c.l.b16 %v2029
        %v2129 = vunpack.c.l.b16 %v2043
        %v2130 = vunpack.c.l.b16 %v2057
        %v2131 = vunpack.c.l.b16 %v2071
        %v2132 = vunpack.c.l.b16 %v2085
        %v2133 = vunpack.c.l.b16 %v2099
        %v2134 = vunpack.c.l.b16 %v2113
        %v2135 = vpack.c.b16 %v2128, %v2127
        %v2136 = vpack.c.b16 %v2130, %v2129
        %v2137 = vpack.c.b16 %v2132, %v2131
        %v2138 = vpack.c.b16 %v2134, %v2133
        %v2143 = vunpack.c.l.b16 %v2123
        %v2144 = vunpack.c.l.b16 %v2124
        %v2145 = vunpack.c.l.b16 %v2125
        %v2146 = vunpack.c.l.b16 %v2126
        %v2147 = vpack.c.b16 %v2144, %v2143
        %v2148 = vpack.c.b16 %v2146, %v2145
        %v2152 = vsel %vm339, %v2135, 0
        %v2155 = vsel %vm339, %v2136, 0
        %v2158 = vsel %vm339, %v2137, 0
        %v2161 = vsel %vm339, %v2138, 0
        %2163 = vmatprep.subr.bf16.mxu0 0
        %2164 = vmatpush1.bf16.msra.mxu0 %v2147
        %2165 = vmatprep.subr.bf16.mxu0 0
        %2166 = vmatpush1.bf16.msra.mxu0 %v2148
        %2167 = vmatprep.subr.bf16.mxu0 0
        %2168 = vmatpush1.bf16.msra.mxu0 0
        %2169 = vmatprep.subr.bf16.mxu0 0
        %2170 = vmatpush1.bf16.msra.mxu0 0
        %2171 = vmatprep.subr.bf16.mxu0 0
        %2172 = vmatpush1.bf16.msra.mxu0 0
        %2173 = vmatprep.subr.bf16.mxu0 0
        %2174 = vmatpush1.bf16.msra.mxu0 0
        %2175 = vmatprep.subr.bf16.mxu0 0
        %2176 = vmatpush1.bf16.msra.mxu0 0
        %2177 = vmatprep.subr.bf16.mxu0 0
        %2178 = vmatpush1.bf16.msra.mxu0 0
        %2179 = vmatprep.subr.bf16.mxu0 0
        %2180 = vmatpush1.bf16.msra.mxu0 0
        %2181 = vmatprep.subr.bf16.mxu0 0
        %2182 = vmatpush1.bf16.msra.mxu0 0
        %2183 = vmatprep.subr.bf16.mxu0 0
        %2184 = vmatpush1.bf16.msra.mxu0 0
        %2185 = vmatprep.subr.bf16.mxu0 0
        %2186 = vmatpush1.bf16.msra.mxu0 0
        %2187 = vmatprep.subr.bf16.mxu0 0
        %2188 = vmatpush1.bf16.msra.mxu0 0
        %2189 = vmatprep.subr.bf16.mxu0 0
        %2190 = vmatpush1.bf16.msra.mxu0 0
        %2191 = vmatprep.subr.bf16.mxu0 0
        %2192 = vmatpush1.bf16.msra.mxu0 0
        %2193 = vmatprep.subr.bf16.mxu0 0
        %2194 = vmatpush1.bf16.msra.mxu0 0
        %2195 = vmatprep.mubr.bf16.mxu0 0
        %2196 = vmatmul.mubr.bf16.gmra.mrb[0].mxu0 %v2152
        %v2197 = vpop.f32.mrb[0].mxu0
        %v2198 = vadd.f32 0.0, %v2197
        %v2199 = vpop.f32.mrb[0].mxu0
        %v2200 = vpop.f32.mrb[0].mxu0
        %v2201 = vadd.f32 0.0, %v2200
        %v2202 = vpop.f32.mrb[0].mxu0
        %2203 = vmatprep.mubr.bf16.mxu0 0
        %2204 = vmatmul.mubr.bf16.gmra.mrb[0].mxu0 %v2155
        %v2205 = vpop.f32.mrb[0].mxu0
        %v2206 = vadd.f32 0.0, %v2205
        %v2207 = vpop.f32.mrb[0].mxu0
        %v2208 = vpop.f32.mrb[0].mxu0
        %v2209 = vadd.f32 0.0, %v2208
        %v2210 = vpop.f32.mrb[0].mxu0
        %2211 = vmatprep.mubr.bf16.mxu0 0
        %2212 = vmatmul.mubr.bf16.gmra.mrb[0].mxu0 %v2158
        %v2213 = vpop.f32.mrb[0].mxu0
        %v2214 = vadd.f32 0.0, %v2213
        %v2215 = vpop.f32.mrb[0].mxu0
        %v2216 = vpop.f32.mrb[0].mxu0
        %v2217 = vadd.f32 0.0, %v2216
        %v2218 = vpop.f32.mrb[0].mxu0
        %2219 = vmatprep.mubr.bf16.mxu0 0
        %2220 = vmatmul.mubr.bf16.gmra.mrb[0].mxu0 %v2161
        %v2221 = vpop.f32.mrb[0].mxu0
        %v2222 = vadd.f32 0.0, %v2221
        %v2223 = vpop.f32.mrb[0].mxu0
        %v2224 = vpop.f32.mrb[0].mxu0
        %v2225 = vadd.f32 0.0, %v2224
        %v2226 = vpop.f32.mrb[0].mxu0
        %2227 = vdwg.mxu0
        %v2228 = vadd.f32 %v2114, %v2198
        %v2229 = vadd.f32 %v2115, %v2201
        %v2230 = vadd.f32 %v2116, %v2206
        %v2231 = vadd.f32 %v2117, %v2209
        %v2232 = vadd.f32 %v2118, %v2214
        %v2233 = vadd.f32 %v2119, %v2217
        %v2234 = vadd.f32 %v2120, %v2222
        %v2235 = vadd.f32 %v2121, %v2225
        %2236 = vst.msk [vmem:[#allocation2] sm:$0xff] %vm267, %v2228
        %2237 = vst.msk [vmem:[#allocation2 + $0x8] sm:$0xff] %vm267, %v2229
        %2238 = vst.msk [vmem:[#allocation2 + $0x10] sm:$0xff] %vm267, %v2230
        %2239 = vst.msk [vmem:[#allocation2 + $0x18] sm:$0xff] %vm267, %v2231
        %2240 = vst.msk [vmem:[#allocation2 + $0x20] sm:$0xff] %vm267, %v2232
        %2241 = vst.msk [vmem:[#allocation2 + $0x28] sm:$0xff] %vm267, %v2233
        %2242 = vst.msk [vmem:[#allocation2 + $0x30] sm:$0xff] %vm267, %v2234
        %2243 = vst.msk [vmem:[#allocation2 + $0x38] sm:$0xff] %vm267, %v2235
        %v2252 = vrot.slane %v1848, 5
        %v2253 = vrot.slane %v2252, 4
        %v2254 = vrot.slane %v1849, 5
        %v2255 = vsel %vm688, %v2253, %v2254
        %v2256 = vrot.slane %v1850, 5
        %v2257 = vrot.slane %v2256, 4
        %v2258 = vrot.slane %v1851, 5
        %v2259 = vsel %vm688, %v2257, %v2258
        %v2260 = vrot.slane %v1852, 5
        %v2261 = vrot.slane %v2260, 4
        %v2262 = vrot.slane %v1853, 5
        %v2263 = vsel %vm688, %v2261, %v2262
        %v2264 = vrot.slane %v1854, 5
        %v2265 = vrot.slane %v2264, 4
        %v2266 = vrot.slane %v1855, 5
        %v2267 = vsel %vm688, %v2265, %v2266
        %v2268 = vrot.slane %v1856, 5
        %v2269 = vrot.slane %v2268, 4
        %v2270 = vrot.slane %v1857, 5
        %v2271 = vsel %vm688, %v2269, %v2270
        %v2272 = vrot.slane %v1858, 5
        %v2273 = vrot.slane %v2272, 4
        %v2274 = vrot.slane %v1859, 5
        %v2275 = vsel %vm688, %v2273, %v2274
        %v2276 = vrot.slane %v1860, 5
        %v2277 = vrot.slane %v2276, 4
        %v2278 = vrot.slane %v1861, 5
        %v2279 = vsel %vm688, %v2277, %v2278
        %v2280 = vrot.slane %v1862, 5
        %v2281 = vrot.slane %v2280, 4
        %v2282 = vrot.slane %v1863, 5
        %v2283 = vsel %vm688, %v2281, %v2282
        %v2284 = vld [vmem:[#allocation2] sm:$0xff]
        %v2285 = vld [vmem:[#allocation2 + $0x8] sm:$0xff]
        %v2286 = vld [vmem:[#allocation2 + $0x10] sm:$0xff]
        %v2287 = vld [vmem:[#allocation2 + $0x18] sm:$0xff]
        %v2288 = vld [vmem:[#allocation2 + $0x20] sm:$0xff]
        %v2289 = vld [vmem:[#allocation2 + $0x28] sm:$0xff]
        %v2290 = vld [vmem:[#allocation2 + $0x30] sm:$0xff]
        %v2291 = vld [vmem:[#allocation2 + $0x38] sm:$0xff]
        %s2292 = scalar_lea.vmem %s257, 160
        %v2293 = vld [vmem:[%s2292] sm:$0xf]
        %v2294 = vld [vmem:[%s2292 + $0x4] sm:$0xf]
        %v2295 = vld [vmem:[%s2292 + $0x8] sm:$0xf]
        %v2296 = vld [vmem:[%s2292 + $0xc] sm:$0xf]
        %v2297 = vunpack.c.l.b16 %v2255
        %v2298 = vunpack.c.l.b16 %v2259
        %v2299 = vunpack.c.l.b16 %v2263
        %v2300 = vunpack.c.l.b16 %v2267
        %v2301 = vunpack.c.l.b16 %v2271
        %v2302 = vunpack.c.l.b16 %v2275
        %v2303 = vunpack.c.l.b16 %v2279
        %v2304 = vunpack.c.l.b16 %v2283
        %v2305 = vpack.c.b16 %v2298, %v2297
        %v2306 = vpack.c.b16 %v2300, %v2299
        %v2307 = vpack.c.b16 %v2302, %v2301
        %v2308 = vpack.c.b16 %v2304, %v2303
        %v2313 = vunpack.c.l.b16 %v2293
        %v2314 = vunpack.c.l.b16 %v2294
        %v2315 = vunpack.c.l.b16 %v2295
        %v2316 = vunpack.c.l.b16 %v2296
        %v2317 = vpack.c.b16 %v2314, %v2313
        %v2318 = vpack.c.b16 %v2316, %v2315
        %v2322 = vsel %vm339, %v2305, 0
        %v2325 = vsel %vm339, %v2306, 0
        %v2328 = vsel %vm339, %v2307, 0
        %v2331 = vsel %vm339, %v2308, 0
        %2333 = vmatprep.subr.bf16.mxu0 0
        %2334 = vmatpush1.bf16.msra.mxu0 %v2317
        %2335 = vmatprep.subr.bf16.mxu0 0
        %2336 = vmatpush1.bf16.msra.mxu0 %v2318
        %2337 = vmatprep.subr.bf16.mxu0 0
        %2338 = vmatpush1.bf16.msra.mxu0 0
        %2339 = vmatprep.subr.bf16.mxu0 0
        %2340 = vmatpush1.bf16.msra.mxu0 0
        %2341 = vmatprep.subr.bf16.mxu0 0
        %2342 = vmatpush1.bf16.msra.mxu0 0
        %2343 = vmatprep.subr.bf16.mxu0 0
        %2344 = vmatpush1.bf16.msra.mxu0 0
        %2345 = vmatprep.subr.bf16.mxu0 0
        %2346 = vmatpush1.bf16.msra.mxu0 0
        %2347 = vmatprep.subr.bf16.mxu0 0
        %2348 = vmatpush1.bf16.msra.mxu0 0
        %2349 = vmatprep.subr.bf16.mxu0 0
        %2350 = vmatpush1.bf16.msra.mxu0 0
        %2351 = vmatprep.subr.bf16.mxu0 0
        %2352 = vmatpush1.bf16.msra.mxu0 0
        %2353 = vmatprep.subr.bf16.mxu0 0
        %2354 = vmatpush1.bf16.msra.mxu0 0
        %2355 = vmatprep.subr.bf16.mxu0 0
        %2356 = vmatpush1.bf16.msra.mxu0 0
        %2357 = vmatprep.subr.bf16.mxu0 0
        %2358 = vmatpush1.bf16.msra.mxu0 0
        %2359 = vmatprep.subr.bf16.mxu0 0
        %2360 = vmatpush1.bf16.msra.mxu0 0
        %2361 = vmatprep.subr.bf16.mxu0 0
        %2362 = vmatpush1.bf16.msra.mxu0 0
        %2363 = vmatprep.subr.bf16.mxu0 0
        %2364 = vmatpush1.bf16.msra.mxu0 0
        %2365 = vmatprep.mubr.bf16.mxu0 0
        %2366 = vmatmul.mubr.bf16.gmra.mrb[0].mxu0 %v2322
        %v2367 = vpop.f32.mrb[0].mxu0
        %v2368 = vadd.f32 0.0, %v2367
        %v2369 = vpop.f32.mrb[0].mxu0
        %v2370 = vpop.f32.mrb[0].mxu0
        %v2371 = vadd.f32 0.0, %v2370
        %v2372 = vpop.f32.mrb[0].mxu0
        %2373 = vmatprep.mubr.bf16.mxu0 0
        %2374 = vmatmul.mubr.bf16.gmra.mrb[0].mxu0 %v2325
        %v2375 = vpop.f32.mrb[0].mxu0
        %v2376 = vadd.f32 0.0, %v2375
        %v2377 = vpop.f32.mrb[0].mxu0
        %v2378 = vpop.f32.mrb[0].mxu0
        %v2379 = vadd.f32 0.0, %v2378
        %v2380 = vpop.f32.mrb[0].mxu0
        %2381 = vmatprep.mubr.bf16.mxu0 0
        %2382 = vmatmul.mubr.bf16.gmra.mrb[0].mxu0 %v2328
        %v2383 = vpop.f32.mrb[0].mxu0
        %v2384 = vadd.f32 0.0, %v2383
        %v2385 = vpop.f32.mrb[0].mxu0
        %v2386 = vpop.f32.mrb[0].mxu0
        %v2387 = vadd.f32 0.0, %v2386
        %v2388 = vpop.f32.mrb[0].mxu0
        %2389 = vmatprep.mubr.bf16.mxu0 0
        %2390 = vmatmul.mubr.bf16.gmra.mrb[0].mxu0 %v2331
        %v2391 = vpop.f32.mrb[0].mxu0
        %v2392 = vadd.f32 0.0, %v2391
        %v2393 = vpop.f32.mrb[0].mxu0
        %v2394 = vpop.f32.mrb[0].mxu0
        %v2395 = vadd.f32 0.0, %v2394
        %v2396 = vpop.f32.mrb[0].mxu0
        %2397 = vdwg.mxu0
        %v2398 = vadd.f32 %v2284, %v2368
        %v2399 = vadd.f32 %v2285, %v2371
        %v2400 = vadd.f32 %v2286, %v2376
        %v2401 = vadd.f32 %v2287, %v2379
        %v2402 = vadd.f32 %v2288, %v2384
        %v2403 = vadd.f32 %v2289, %v2387
        %v2404 = vadd.f32 %v2290, %v2392
        %v2405 = vadd.f32 %v2291, %v2395
        %2406 = vst.msk [vmem:[#allocation2] sm:$0xff] %vm267, %v2398
        %2407 = vst.msk [vmem:[#allocation2 + $0x8] sm:$0xff] %vm267, %v2399
        %2408 = vst.msk [vmem:[#allocation2 + $0x10] sm:$0xff] %vm267, %v2400
        %2409 = vst.msk [vmem:[#allocation2 + $0x18] sm:$0xff] %vm267, %v2401
        %2410 = vst.msk [vmem:[#allocation2 + $0x20] sm:$0xff] %vm267, %v2402
        %2411 = vst.msk [vmem:[#allocation2 + $0x28] sm:$0xff] %vm267, %v2403
        %2412 = vst.msk [vmem:[#allocation2 + $0x30] sm:$0xff] %vm267, %v2404
        %2413 = vst.msk [vmem:[#allocation2 + $0x38] sm:$0xff] %vm267, %v2405
        %v2414 = vrot.slane %v2003, 5
        %v2415 = vrot.slane %v2006, 6
        %v2416 = vor.u32 %v2414, %v2415
        %v2417 = vrot.slane %v2416, 4
        %v2418 = vshrl.u32 %v1849, 16
        %v2420 = vrot.slane %v2418, 5
        %v2421 = vrot.slane %v2012, 6
        %v2422 = vor.u32 %v2420, %v2421
        %v2423 = vsel %vm853, %v2417, %v2422
        %v2424 = vrot.slane %v2017, 5
        %v2425 = vrot.slane %v2020, 6
        %v2426 = vor.u32 %v2424, %v2425
        %v2427 = vrot.slane %v2426, 4
        %v2428 = vshrl.u32 %v1851, 16
        %v2430 = vrot.slane %v2428, 5
        %v2431 = vrot.slane %v2026, 6
        %v2432 = vor.u32 %v2430, %v2431
        %v2433 = vsel %vm853, %v2427, %v2432
        %v2434 = vrot.slane %v2031, 5
        %v2435 = vrot.slane %v2034, 6
        %v2436 = vor.u32 %v2434, %v2435
        %v2437 = vrot.slane %v2436, 4
        %v2438 = vshrl.u32 %v1853, 16
        %v2440 = vrot.slane %v2438, 5
        %v2441 = vrot.slane %v2040, 6
        %v2442 = vor.u32 %v2440, %v2441
        %v2443 = vsel %vm853, %v2437, %v2442
        %v2444 = vrot.slane %v2045, 5
        %v2445 = vrot.slane %v2048, 6
        %v2446 = vor.u32 %v2444, %v2445
        %v2447 = vrot.slane %v2446, 4
        %v2448 = vshrl.u32 %v1855, 16
        %v2450 = vrot.slane %v2448, 5
        %v2451 = vrot.slane %v2054, 6
        %v2452 = vor.u32 %v2450, %v2451
        %v2453 = vsel %vm853, %v2447, %v2452
        %v2454 = vrot.slane %v2059, 5
        %v2455 = vrot.slane %v2062, 6
        %v2456 = vor.u32 %v2454, %v2455
        %v2457 = vrot.slane %v2456, 4
        %v2458 = vshrl.u32 %v1857, 16
        %v2460 = vrot.slane %v2458, 5
        %v2461 = vrot.slane %v2068, 6
        %v2462 = vor.u32 %v2460, %v2461
        %v2463 = vsel %vm853, %v2457, %v2462
        %v2464 = vrot.slane %v2073, 5
        %v2465 = vrot.slane %v2076, 6
        %v2466 = vor.u32 %v2464, %v2465
        %v2467 = vrot.slane %v2466, 4
        %v2468 = vshrl.u32 %v1859, 16
        %v2470 = vrot.slane %v2468, 5
        %v2471 = vrot.slane %v2082, 6
        %v2472 = vor.u32 %v2470, %v2471
        %v2473 = vsel %vm853, %v2467, %v2472
        %v2474 = vrot.slane %v2087, 5
        %v2475 = vrot.slane %v2090, 6
        %v2476 = vor.u32 %v2474, %v2475
        %v2477 = vrot.slane %v2476, 4
        %v2478 = vshrl.u32 %v1861, 16
        %v2480 = vrot.slane %v2478, 5
        %v2481 = vrot.slane %v2096, 6
        %v2482 = vor.u32 %v2480, %v2481
        %v2483 = vsel %vm853, %v2477, %v2482
        %v2484 = vrot.slane %v2101, 5
        %v2485 = vrot.slane %v2104, 6
        %v2486 = vor.u32 %v2484, %v2485
        %v2487 = vrot.slane %v2486, 4
        %v2488 = vshrl.u32 %v1863, 16
        %v2490 = vrot.slane %v2488, 5
        %v2491 = vrot.slane %v2110, 6
        %v2492 = vor.u32 %v2490, %v2491
        %v2493 = vsel %vm853, %v2487, %v2492
        %v2494 = vld [vmem:[#allocation2] sm:$0xff]
        %v2495 = vld [vmem:[#allocation2 + $0x8] sm:$0xff]
        %v2496 = vld [vmem:[#allocation2 + $0x10] sm:$0xff]
        %v2497 = vld [vmem:[#allocation2 + $0x18] sm:$0xff]
        %v2498 = vld [vmem:[#allocation2 + $0x20] sm:$0xff]
        %v2499 = vld [vmem:[#allocation2 + $0x28] sm:$0xff]
        %v2500 = vld [vmem:[#allocation2 + $0x30] sm:$0xff]
        %v2501 = vld [vmem:[#allocation2 + $0x38] sm:$0xff]
        %s2502 = scalar_lea.vmem %s257, 176
        %v2503 = vld [vmem:[%s2502] sm:$0xf]
        %v2504 = vld [vmem:[%s2502 + $0x4] sm:$0xf]
        %v2505 = vld [vmem:[%s2502 + $0x8] sm:$0xf]
        %v2506 = vld [vmem:[%s2502 + $0xc] sm:$0xf]
        %v2507 = vunpack.c.l.b16 %v2423
        %v2508 = vunpack.c.l.b16 %v2433
        %v2509 = vunpack.c.l.b16 %v2443
        %v2510 = vunpack.c.l.b16 %v2453
        %v2511 = vunpack.c.l.b16 %v2463
        %v2512 = vunpack.c.l.b16 %v2473
        %v2513 = vunpack.c.l.b16 %v2483
        %v2514 = vunpack.c.l.b16 %v2493
        %v2515 = vpack.c.b16 %v2508, %v2507
        %v2516 = vpack.c.b16 %v2510, %v2509
        %v2517 = vpack.c.b16 %v2512, %v2511
        %v2518 = vpack.c.b16 %v2514, %v2513
        %v2523 = vunpack.c.l.b16 %v2503
        %v2524 = vunpack.c.l.b16 %v2504
        %v2525 = vunpack.c.l.b16 %v2505
        %v2526 = vunpack.c.l.b16 %v2506
        %v2527 = vpack.c.b16 %v2524, %v2523
        %v2528 = vpack.c.b16 %v2526, %v2525
        %v2532 = vsel %vm339, %v2515, 0
        %v2535 = vsel %vm339, %v2516, 0
        %v2538 = vsel %vm339, %v2517, 0
        %v2541 = vsel %vm339, %v2518, 0
        %2543 = vmatprep.subr.bf16.mxu0 0
        %2544 = vmatpush1.bf16.msra.mxu0 %v2527
        %2545 = vmatprep.subr.bf16.mxu0 0
        %2546 = vmatpush1.bf16.msra.mxu0 %v2528
        %2547 = vmatprep.subr.bf16.mxu0 0
        %2548 = vmatpush1.bf16.msra.mxu0 0
        %2549 = vmatprep.subr.bf16.mxu0 0
        %2550 = vmatpush1.bf16.msra.mxu0 0
        %2551 = vmatprep.subr.bf16.mxu0 0
        %2552 = vmatpush1.bf16.msra.mxu0 0
        %2553 = vmatprep.subr.bf16.mxu0 0
        %2554 = vmatpush1.bf16.msra.mxu0 0
        %2555 = vmatprep.subr.bf16.mxu0 0
        %2556 = vmatpush1.bf16.msra.mxu0 0
        %2557 = vmatprep.subr.bf16.mxu0 0
        %2558 = vmatpush1.bf16.msra.mxu0 0
        %2559 = vmatprep.subr.bf16.mxu0 0
        %2560 = vmatpush1.bf16.msra.mxu0 0
        %2561 = vmatprep.subr.bf16.mxu0 0
        %2562 = vmatpush1.bf16.msra.mxu0 0
        %2563 = vmatprep.subr.bf16.mxu0 0
        %2564 = vmatpush1.bf16.msra.mxu0 0
        %2565 = vmatprep.subr.bf16.mxu0 0
        %2566 = vmatpush1.bf16.msra.mxu0 0
        %2567 = vmatprep.subr.bf16.mxu0 0
        %2568 = vmatpush1.bf16.msra.mxu0 0
        %2569 = vmatprep.subr.bf16.mxu0 0
        %2570 = vmatpush1.bf16.msra.mxu0 0
        %2571 = vmatprep.subr.bf16.mxu0 0
        %2572 = vmatpush1.bf16.msra.mxu0 0
        %2573 = vmatprep.subr.bf16.mxu0 0
        %2574 = vmatpush1.bf16.msra.mxu0 0
        %2575 = vmatprep.mubr.bf16.mxu0 0
        %2576 = vmatmul.mubr.bf16.gmra.mrb[0].mxu0 %v2532
        %v2577 = vpop.f32.mrb[0].mxu0
        %v2578 = vadd.f32 0.0, %v2577
        %v2579 = vpop.f32.mrb[0].mxu0
        %v2580 = vpop.f32.mrb[0].mxu0
        %v2581 = vadd.f32 0.0, %v2580
        %v2582 = vpop.f32.mrb[0].mxu0
        %2583 = vmatprep.mubr.bf16.mxu0 0
        %2584 = vmatmul.mubr.bf16.gmra.mrb[0].mxu0 %v2535
        %v2585 = vpop.f32.mrb[0].mxu0
        %v2586 = vadd.f32 0.0, %v2585
        %v2587 = vpop.f32.mrb[0].mxu0
        %v2588 = vpop.f32.mrb[0].mxu0
        %v2589 = vadd.f32 0.0, %v2588
        %v2590 = vpop.f32.mrb[0].mxu0
        %2591 = vmatprep.mubr.bf16.mxu0 0
        %2592 = vmatmul.mubr.bf16.gmra.mrb[0].mxu0 %v2538
        %v2593 = vpop.f32.mrb[0].mxu0
        %v2594 = vadd.f32 0.0, %v2593
        %v2595 = vpop.f32.mrb[0].mxu0
        %v2596 = vpop.f32.mrb[0].mxu0
        %v2597 = vadd.f32 0.0, %v2596
        %v2598 = vpop.f32.mrb[0].mxu0
        %2599 = vmatprep.mubr.bf16.mxu0 0
        %2600 = vmatmul.mubr.bf16.gmra.mrb[0].mxu0 %v2541
        %v2601 = vpop.f32.mrb[0].mxu0
        %v2602 = vadd.f32 0.0, %v2601
        %v2603 = vpop.f32.mrb[0].mxu0
        %v2604 = vpop.f32.mrb[0].mxu0
        %v2605 = vadd.f32 0.0, %v2604
        %v2606 = vpop.f32.mrb[0].mxu0
        %2607 = vdwg.mxu0
        %v2608 = vadd.f32 %v2494, %v2578
        %v2609 = vadd.f32 %v2495, %v2581
        %v2610 = vadd.f32 %v2496, %v2586
        %v2611 = vadd.f32 %v2497, %v2589
        %v2612 = vadd.f32 %v2498, %v2594
        %v2613 = vadd.f32 %v2499, %v2597
        %v2614 = vadd.f32 %v2500, %v2602
        %v2615 = vadd.f32 %v2501, %v2605
        %2616 = vst.msk [vmem:[#allocation2] sm:$0xff] %vm267, %v2608
        %2617 = vst.msk [vmem:[#allocation2 + $0x8] sm:$0xff] %vm267, %v2609
        %2618 = vst.msk [vmem:[#allocation2 + $0x10] sm:$0xff] %vm267, %v2610
        %2619 = vst.msk [vmem:[#allocation2 + $0x18] sm:$0xff] %vm267, %v2611
        %2620 = vst.msk [vmem:[#allocation2 + $0x20] sm:$0xff] %vm267, %v2612
        %2621 = vst.msk [vmem:[#allocation2 + $0x28] sm:$0xff] %vm267, %v2613
        %2622 = vst.msk [vmem:[#allocation2 + $0x30] sm:$0xff] %vm267, %v2614
        %2623 = vst.msk [vmem:[#allocation2 + $0x38] sm:$0xff] %vm267, %v2615
        %s2624 = sadd.s32 %s266, 3
        %s2625 = smul.u32 %s2624, 2
        %s2626 = smul.addr %s2625, 4
        %s2627 = scalar_lea.vmem %s253, %s2626
        %v2628 = vld [vmem:[%s2627] sm:$0xf]
        %v2629 = vld [vmem:[%s2627 + $0x4] sm:$0x3]
        %v2630 = vld [vmem:[%s2627 + $0x8] sm:$0xf]
        %v2631 = vld [vmem:[%s2627 + $0xc] sm:$0x3]
        %v2632 = vld [vmem:[%s2627 + $0x10] sm:$0xf]
        %v2633 = vld [vmem:[%s2627 + $0x14] sm:$0x3]
        %v2634 = vld [vmem:[%s2627 + $0x18] sm:$0xf]
        %v2635 = vld [vmem:[%s2627 + $0x1c] sm:$0x3]
        %v2636 = vld [vmem:[%s2627 + $0x20] sm:$0xf]
        %v2637 = vld [vmem:[%s2627 + $0x24] sm:$0x3]
        %v2638 = vld [vmem:[%s2627 + $0x28] sm:$0xf]
        %v2639 = vld [vmem:[%s2627 + $0x2c] sm:$0x3]
        %v2640 = vld [vmem:[%s2627 + $0x30] sm:$0xf]
        %v2641 = vld [vmem:[%s2627 + $0x34] sm:$0x3]
        %v2642 = vld [vmem:[%s2627 + $0x38] sm:$0xf]
        %v2643 = vld [vmem:[%s2627 + $0x3c] sm:$0x3]
        %v2644 = vld [vmem:[#allocation2] sm:$0xff]
        %v2645 = vld [vmem:[#allocation2 + $0x8] sm:$0xff]
        %v2646 = vld [vmem:[#allocation2 + $0x10] sm:$0xff]
        %v2647 = vld [vmem:[#allocation2 + $0x18] sm:$0xff]
        %v2648 = vld [vmem:[#allocation2 + $0x20] sm:$0xff]
        %v2649 = vld [vmem:[#allocation2 + $0x28] sm:$0xff]
        %v2650 = vld [vmem:[#allocation2 + $0x30] sm:$0xff]
        %v2651 = vld [vmem:[#allocation2 + $0x38] sm:$0xff]
        %s2652 = scalar_lea.vmem %s257, 192
        %v2653 = vld [vmem:[%s2652] sm:$0xf]
        %v2654 = vld [vmem:[%s2652 + $0x4] sm:$0xf]
        %v2655 = vld [vmem:[%s2652 + $0x8] sm:$0xf]
        %v2656 = vld [vmem:[%s2652 + $0xc] sm:$0xf]
        %v2665 = vunpack.c.l.b16 %v2628
        %v2666 = vunpack.c.l.b16 %v2630
        %v2667 = vunpack.c.l.b16 %v2632
        %v2668 = vunpack.c.l.b16 %v2634
        %v2669 = vunpack.c.l.b16 %v2636
        %v2670 = vunpack.c.l.b16 %v2638
        %v2671 = vunpack.c.l.b16 %v2640
        %v2672 = vunpack.c.l.b16 %v2642
        %v2673 = vpack.c.b16 %v2666, %v2665
        %v2674 = vpack.c.b16 %v2668, %v2667
        %v2675 = vpack.c.b16 %v2670, %v2669
        %v2676 = vpack.c.b16 %v2672, %v2671
        %v2681 = vunpack.c.l.b16 %v2653
        %v2682 = vunpack.c.l.b16 %v2654
        %v2683 = vunpack.c.l.b16 %v2655
        %v2684 = vunpack.c.l.b16 %v2656
        %v2685 = vpack.c.b16 %v2682, %v2681
        %v2686 = vpack.c.b16 %v2684, %v2683
        %v2690 = vsel %vm339, %v2673, 0
        %v2693 = vsel %vm339, %v2674, 0
        %v2696 = vsel %vm339, %v2675, 0
        %v2699 = vsel %vm339, %v2676, 0
        %2701 = vmatprep.subr.bf16.mxu0 0
        %2702 = vmatpush1.bf16.msra.mxu0 %v2685
        %2703 = vmatprep.subr.bf16.mxu0 0
        %2704 = vmatpush1.bf16.msra.mxu0 %v2686
        %2705 = vmatprep.subr.bf16.mxu0 0
        %2706 = vmatpush1.bf16.msra.mxu0 0
        %2707 = vmatprep.subr.bf16.mxu0 0
        %2708 = vmatpush1.bf16.msra.mxu0 0
        %2709 = vmatprep.subr.bf16.mxu0 0
        %2710 = vmatpush1.bf16.msra.mxu0 0
        %2711 = vmatprep.subr.bf16.mxu0 0
        %2712 = vmatpush1.bf16.msra.mxu0 0
        %2713 = vmatprep.subr.bf16.mxu0 0
        %2714 = vmatpush1.bf16.msra.mxu0 0
        %2715 = vmatprep.subr.bf16.mxu0 0
        %2716 = vmatpush1.bf16.msra.mxu0 0
        %2717 = vmatprep.subr.bf16.mxu0 0
        %2718 = vmatpush1.bf16.msra.mxu0 0
        %2719 = vmatprep.subr.bf16.mxu0 0
        %2720 = vmatpush1.bf16.msra.mxu0 0
        %2721 = vmatprep.subr.bf16.mxu0 0
        %2722 = vmatpush1.bf16.msra.mxu0 0
        %2723 = vmatprep.subr.bf16.mxu0 0
        %2724 = vmatpush1.bf16.msra.mxu0 0
        %2725 = vmatprep.subr.bf16.mxu0 0
        %2726 = vmatpush1.bf16.msra.mxu0 0
        %2727 = vmatprep.subr.bf16.mxu0 0
        %2728 = vmatpush1.bf16.msra.mxu0 0
        %2729 = vmatprep.subr.bf16.mxu0 0
        %2730 = vmatpush1.bf16.msra.mxu0 0
        %2731 = vmatprep.subr.bf16.mxu0 0
        %2732 = vmatpush1.bf16.msra.mxu0 0
        %2733 = vmatprep.mubr.bf16.mxu0 0
        %2734 = vmatmul.mubr.bf16.gmra.mrb[0].mxu0 %v2690
        %v2735 = vpop.f32.mrb[0].mxu0
        %v2736 = vadd.f32 0.0, %v2735
        %v2737 = vpop.f32.mrb[0].mxu0
        %v2738 = vpop.f32.mrb[0].mxu0
        %v2739 = vadd.f32 0.0, %v2738
        %v2740 = vpop.f32.mrb[0].mxu0
        %2741 = vmatprep.mubr.bf16.mxu0 0
        %2742 = vmatmul.mubr.bf16.gmra.mrb[0].mxu0 %v2693
        %v2743 = vpop.f32.mrb[0].mxu0
        %v2744 = vadd.f32 0.0, %v2743
        %v2745 = vpop.f32.mrb[0].mxu0
        %v2746 = vpop.f32.mrb[0].mxu0
        %v2747 = vadd.f32 0.0, %v2746
        %v2748 = vpop.f32.mrb[0].mxu0
        %2749 = vmatprep.mubr.bf16.mxu0 0
        %2750 = vmatmul.mubr.bf16.gmra.mrb[0].mxu0 %v2696
        %v2751 = vpop.f32.mrb[0].mxu0
        %v2752 = vadd.f32 0.0, %v2751
        %v2753 = vpop.f32.mrb[0].mxu0
        %v2754 = vpop.f32.mrb[0].mxu0
        %v2755 = vadd.f32 0.0, %v2754
        %v2756 = vpop.f32.mrb[0].mxu0
        %2757 = vmatprep.mubr.bf16.mxu0 0
        %2758 = vmatmul.mubr.bf16.gmra.mrb[0].mxu0 %v2699
        %v2759 = vpop.f32.mrb[0].mxu0
        %v2760 = vadd.f32 0.0, %v2759
        %v2761 = vpop.f32.mrb[0].mxu0
        %v2762 = vpop.f32.mrb[0].mxu0
        %v2763 = vadd.f32 0.0, %v2762
        %v2764 = vpop.f32.mrb[0].mxu0
        %2765 = vdwg.mxu0
        %v2766 = vadd.f32 %v2644, %v2736
        %v2767 = vadd.f32 %v2645, %v2739
        %v2768 = vadd.f32 %v2646, %v2744
        %v2769 = vadd.f32 %v2647, %v2747
        %v2770 = vadd.f32 %v2648, %v2752
        %v2771 = vadd.f32 %v2649, %v2755
        %v2772 = vadd.f32 %v2650, %v2760
        %v2773 = vadd.f32 %v2651, %v2763
        %2774 = vst.msk [vmem:[#allocation2] sm:$0xff] %vm267, %v2766
        %2775 = vst.msk [vmem:[#allocation2 + $0x8] sm:$0xff] %vm267, %v2767
        %2776 = vst.msk [vmem:[#allocation2 + $0x10] sm:$0xff] %vm267, %v2768
        %2777 = vst.msk [vmem:[#allocation2 + $0x18] sm:$0xff] %vm267, %v2769
        %2778 = vst.msk [vmem:[#allocation2 + $0x20] sm:$0xff] %vm267, %v2770
        %2779 = vst.msk [vmem:[#allocation2 + $0x28] sm:$0xff] %vm267, %v2771
        %2780 = vst.msk [vmem:[#allocation2 + $0x30] sm:$0xff] %vm267, %v2772
        %2781 = vst.msk [vmem:[#allocation2 + $0x38] sm:$0xff] %vm267, %v2773
        %v2783 = vshrl.u32 %v2628, 16
        %v2785 = vrot.slane %v2783, 4
        %v2786 = vshll.u32 %v2628, 16
        %v2788 = vrot.slane %v2786, 5
        %v2789 = vor.u32 %v2785, %v2788
        %v2790 = vrot.slane %v2789, 4
        %v2792 = vshll.u32 %v2629, 16
        %v2794 = vrot.slane %v2792, 5
        %v2795 = vsel %vm435, %v2790, %v2794
        %v2797 = vshrl.u32 %v2630, 16
        %v2799 = vrot.slane %v2797, 4
        %v2800 = vshll.u32 %v2630, 16
        %v2802 = vrot.slane %v2800, 5
        %v2803 = vor.u32 %v2799, %v2802
        %v2804 = vrot.slane %v2803, 4
        %v2806 = vshll.u32 %v2631, 16
        %v2808 = vrot.slane %v2806, 5
        %v2809 = vsel %vm435, %v2804, %v2808
        %v2811 = vshrl.u32 %v2632, 16
        %v2813 = vrot.slane %v2811, 4
        %v2814 = vshll.u32 %v2632, 16
        %v2816 = vrot.slane %v2814, 5
        %v2817 = vor.u32 %v2813, %v2816
        %v2818 = vrot.slane %v2817, 4
        %v2820 = vshll.u32 %v2633, 16
        %v2822 = vrot.slane %v2820, 5
        %v2823 = vsel %vm435, %v2818, %v2822
        %v2825 = vshrl.u32 %v2634, 16
        %v2827 = vrot.slane %v2825, 4
        %v2828 = vshll.u32 %v2634, 16
        %v2830 = vrot.slane %v2828, 5
        %v2831 = vor.u32 %v2827, %v2830
        %v2832 = vrot.slane %v2831, 4
        %v2834 = vshll.u32 %v2635, 16
        %v2836 = vrot.slane %v2834, 5
        %v2837 = vsel %vm435, %v2832, %v2836
        %v2839 = vshrl.u32 %v2636, 16
        %v2841 = vrot.slane %v2839, 4
        %v2842 = vshll.u32 %v2636, 16
        %v2844 = vrot.slane %v2842, 5
        %v2845 = vor.u32 %v2841, %v2844
        %v2846 = vrot.slane %v2845, 4
        %v2848 = vshll.u32 %v2637, 16
        %v2850 = vrot.slane %v2848, 5
        %v2851 = vsel %vm435, %v2846, %v2850
        %v2853 = vshrl.u32 %v2638, 16
        %v2855 = vrot.slane %v2853, 4
        %v2856 = vshll.u32 %v2638, 16
        %v2858 = vrot.slane %v2856, 5
        %v2859 = vor.u32 %v2855, %v2858
        %v2860 = vrot.slane %v2859, 4
        %v2862 = vshll.u32 %v2639, 16
        %v2864 = vrot.slane %v2862, 5
        %v2865 = vsel %vm435, %v2860, %v2864
        %v2867 = vshrl.u32 %v2640, 16
        %v2869 = vrot.slane %v2867, 4
        %v2870 = vshll.u32 %v2640, 16
        %v2872 = vrot.slane %v2870, 5
        %v2873 = vor.u32 %v2869, %v2872
        %v2874 = vrot.slane %v2873, 4
        %v2876 = vshll.u32 %v2641, 16
        %v2878 = vrot.slane %v2876, 5
        %v2879 = vsel %vm435, %v2874, %v2878
        %v2881 = vshrl.u32 %v2642, 16
        %v2883 = vrot.slane %v2881, 4
        %v2884 = vshll.u32 %v2642, 16
        %v2886 = vrot.slane %v2884, 5
        %v2887 = vor.u32 %v2883, %v2886
        %v2888 = vrot.slane %v2887, 4
        %v2890 = vshll.u32 %v2643, 16
        %v2892 = vrot.slane %v2890, 5
        %v2893 = vsel %vm435, %v2888, %v2892
        %v2894 = vld [vmem:[#allocation2] sm:$0xff]
        %v2895 = vld [vmem:[#allocation2 + $0x8] sm:$0xff]
        %v2896 = vld [vmem:[#allocation2 + $0x10] sm:$0xff]
        %v2897 = vld [vmem:[#allocation2 + $0x18] sm:$0xff]
        %v2898 = vld [vmem:[#allocation2 + $0x20] sm:$0xff]
        %v2899 = vld [vmem:[#allocation2 + $0x28] sm:$0xff]
        %v2900 = vld [vmem:[#allocation2 + $0x30] sm:$0xff]
        %v2901 = vld [vmem:[#allocation2 + $0x38] sm:$0xff]
        %s2902 = scalar_lea.vmem %s257, 208
        %v2903 = vld [vmem:[%s2902] sm:$0xf]
        %v2904 = vld [vmem:[%s2902 + $0x4] sm:$0xf]
        %v2905 = vld [vmem:[%s2902 + $0x8] sm:$0xf]
        %v2906 = vld [vmem:[%s2902 + $0xc] sm:$0xf]
        %v2907 = vunpack.c.l.b16 %v2795
        %v2908 = vunpack.c.l.b16 %v2809
        %v2909 = vunpack.c.l.b16 %v2823
        %v2910 = vunpack.c.l.b16 %v2837
        %v2911 = vunpack.c.l.b16 %v2851
        %v2912 = vunpack.c.l.b16 %v2865
        %v2913 = vunpack.c.l.b16 %v2879
        %v2914 = vunpack.c.l.b16 %v2893
        %v2915 = vpack.c.b16 %v2908, %v2907
        %v2916 = vpack.c.b16 %v2910, %v2909
        %v2917 = vpack.c.b16 %v2912, %v2911
        %v2918 = vpack.c.b16 %v2914, %v2913
        %v2923 = vunpack.c.l.b16 %v2903
        %v2924 = vunpack.c.l.b16 %v2904
        %v2925 = vunpack.c.l.b16 %v2905
        %v2926 = vunpack.c.l.b16 %v2906
        %v2927 = vpack.c.b16 %v2924, %v2923
        %v2928 = vpack.c.b16 %v2926, %v2925
        %v2932 = vsel %vm339, %v2915, 0
        %v2935 = vsel %vm339, %v2916, 0
        %v2938 = vsel %vm339, %v2917, 0
        %v2941 = vsel %vm339, %v2918, 0
        %2943 = vmatprep.subr.bf16.mxu0 0
        %2944 = vmatpush1.bf16.msra.mxu0 %v2927
        %2945 = vmatprep.subr.bf16.mxu0 0
        %2946 = vmatpush1.bf16.msra.mxu0 %v2928
        %2947 = vmatprep.subr.bf16.mxu0 0
        %2948 = vmatpush1.bf16.msra.mxu0 0
        %2949 = vmatprep.subr.bf16.mxu0 0
        %2950 = vmatpush1.bf16.msra.mxu0 0
        %2951 = vmatprep.subr.bf16.mxu0 0
        %2952 = vmatpush1.bf16.msra.mxu0 0
        %2953 = vmatprep.subr.bf16.mxu0 0
        %2954 = vmatpush1.bf16.msra.mxu0 0
        %2955 = vmatprep.subr.bf16.mxu0 0
        %2956 = vmatpush1.bf16.msra.mxu0 0
        %2957 = vmatprep.subr.bf16.mxu0 0
        %2958 = vmatpush1.bf16.msra.mxu0 0
        %2959 = vmatprep.subr.bf16.mxu0 0
        %2960 = vmatpush1.bf16.msra.mxu0 0
        %2961 = vmatprep.subr.bf16.mxu0 0
        %2962 = vmatpush1.bf16.msra.mxu0 0
        %2963 = vmatprep.subr.bf16.mxu0 0
        %2964 = vmatpush1.bf16.msra.mxu0 0
        %2965 = vmatprep.subr.bf16.mxu0 0
        %2966 = vmatpush1.bf16.msra.mxu0 0
        %2967 = vmatprep.subr.bf16.mxu0 0
        %2968 = vmatpush1.bf16.msra.mxu0 0
        %2969 = vmatprep.subr.bf16.mxu0 0
        %2970 = vmatpush1.bf16.msra.mxu0 0
        %2971 = vmatprep.subr.bf16.mxu0 0
        %2972 = vmatpush1.bf16.msra.mxu0 0
        %2973 = vmatprep.subr.bf16.mxu0 0
        %2974 = vmatpush1.bf16.msra.mxu0 0
        %2975 = vmatprep.mubr.bf16.mxu0 0
        %2976 = vmatmul.mubr.bf16.gmra.mrb[0].mxu0 %v2932
        %v2977 = vpop.f32.mrb[0].mxu0
        %v2978 = vadd.f32 0.0, %v2977
        %v2979 = vpop.f32.mrb[0].mxu0
        %v2980 = vpop.f32.mrb[0].mxu0
        %v2981 = vadd.f32 0.0, %v2980
        %v2982 = vpop.f32.mrb[0].mxu0
        %2983 = vmatprep.mubr.bf16.mxu0 0
        %2984 = vmatmul.mubr.bf16.gmra.mrb[0].mxu0 %v2935
        %v2985 = vpop.f32.mrb[0].mxu0
        %v2986 = vadd.f32 0.0, %v2985
        %v2987 = vpop.f32.mrb[0].mxu0
        %v2988 = vpop.f32.mrb[0].mxu0
        %v2989 = vadd.f32 0.0, %v2988
        %v2990 = vpop.f32.mrb[0].mxu0
        %2991 = vmatprep.mubr.bf16.mxu0 0
        %2992 = vmatmul.mubr.bf16.gmra.mrb[0].mxu0 %v2938
        %v2993 = vpop.f32.mrb[0].mxu0
        %v2994 = vadd.f32 0.0, %v2993
        %v2995 = vpop.f32.mrb[0].mxu0
        %v2996 = vpop.f32.mrb[0].mxu0
        %v2997 = vadd.f32 0.0, %v2996
        %v2998 = vpop.f32.mrb[0].mxu0
        %2999 = vmatprep.mubr.bf16.mxu0 0
        %3000 = vmatmul.mubr.bf16.gmra.mrb[0].mxu0 %v2941
        %v3001 = vpop.f32.mrb[0].mxu0
        %v3002 = vadd.f32 0.0, %v3001
        %v3003 = vpop.f32.mrb[0].mxu0
        %v3004 = vpop.f32.mrb[0].mxu0
        %v3005 = vadd.f32 0.0, %v3004
        %v3006 = vpop.f32.mrb[0].mxu0
        %3007 = vdwg.mxu0
        %v3008 = vadd.f32 %v2894, %v2978
        %v3009 = vadd.f32 %v2895, %v2981
        %v3010 = vadd.f32 %v2896, %v2986
        %v3011 = vadd.f32 %v2897, %v2989
        %v3012 = vadd.f32 %v2898, %v2994
        %v3013 = vadd.f32 %v2899, %v2997
        %v3014 = vadd.f32 %v2900, %v3002
        %v3015 = vadd.f32 %v2901, %v3005
        %3016 = vst.msk [vmem:[#allocation2] sm:$0xff] %vm267, %v3008
        %3017 = vst.msk [vmem:[#allocation2 + $0x8] sm:$0xff] %vm267, %v3009
        %3018 = vst.msk [vmem:[#allocation2 + $0x10] sm:$0xff] %vm267, %v3010
        %3019 = vst.msk [vmem:[#allocation2 + $0x18] sm:$0xff] %vm267, %v3011
        %3020 = vst.msk [vmem:[#allocation2 + $0x20] sm:$0xff] %vm267, %v3012
        %3021 = vst.msk [vmem:[#allocation2 + $0x28] sm:$0xff] %vm267, %v3013
        %3022 = vst.msk [vmem:[#allocation2 + $0x30] sm:$0xff] %vm267, %v3014
        %3023 = vst.msk [vmem:[#allocation2 + $0x38] sm:$0xff] %vm267, %v3015
        %v3032 = vrot.slane %v2628, 5
        %v3033 = vrot.slane %v3032, 4
        %v3034 = vrot.slane %v2629, 5
        %v3035 = vsel %vm688, %v3033, %v3034
        %v3036 = vrot.slane %v2630, 5
        %v3037 = vrot.slane %v3036, 4
        %v3038 = vrot.slane %v2631, 5
        %v3039 = vsel %vm688, %v3037, %v3038
        %v3040 = vrot.slane %v2632, 5
        %v3041 = vrot.slane %v3040, 4
        %v3042 = vrot.slane %v2633, 5
        %v3043 = vsel %vm688, %v3041, %v3042
        %v3044 = vrot.slane %v2634, 5
        %v3045 = vrot.slane %v3044, 4
        %v3046 = vrot.slane %v2635, 5
        %v3047 = vsel %vm688, %v3045, %v3046
        %v3048 = vrot.slane %v2636, 5
        %v3049 = vrot.slane %v3048, 4
        %v3050 = vrot.slane %v2637, 5
        %v3051 = vsel %vm688, %v3049, %v3050
        %v3052 = vrot.slane %v2638, 5
        %v3053 = vrot.slane %v3052, 4
        %v3054 = vrot.slane %v2639, 5
        %v3055 = vsel %vm688, %v3053, %v3054
        %v3056 = vrot.slane %v2640, 5
        %v3057 = vrot.slane %v3056, 4
        %v3058 = vrot.slane %v2641, 5
        %v3059 = vsel %vm688, %v3057, %v3058
        %v3060 = vrot.slane %v2642, 5
        %v3061 = vrot.slane %v3060, 4
        %v3062 = vrot.slane %v2643, 5
        %v3063 = vsel %vm688, %v3061, %v3062
        %v3064 = vld [vmem:[#allocation2] sm:$0xff]
        %v3065 = vld [vmem:[#allocation2 + $0x8] sm:$0xff]
        %v3066 = vld [vmem:[#allocation2 + $0x10] sm:$0xff]
        %v3067 = vld [vmem:[#allocation2 + $0x18] sm:$0xff]
        %v3068 = vld [vmem:[#allocation2 + $0x20] sm:$0xff]
        %v3069 = vld [vmem:[#allocation2 + $0x28] sm:$0xff]
        %v3070 = vld [vmem:[#allocation2 + $0x30] sm:$0xff]
        %v3071 = vld [vmem:[#allocation2 + $0x38] sm:$0xff]
        %s3072 = scalar_lea.vmem %s257, 224
        %v3073 = vld [vmem:[%s3072] sm:$0xf]
        %v3074 = vld [vmem:[%s3072 + $0x4] sm:$0xf]
        %v3075 = vld [vmem:[%s3072 + $0x8] sm:$0xf]
        %v3076 = vld [vmem:[%s3072 + $0xc] sm:$0xf]
        %v3077 = vunpack.c.l.b16 %v3035
        %v3078 = vunpack.c.l.b16 %v3039
        %v3079 = vunpack.c.l.b16 %v3043
        %v3080 = vunpack.c.l.b16 %v3047
        %v3081 = vunpack.c.l.b16 %v3051
        %v3082 = vunpack.c.l.b16 %v3055
        %v3083 = vunpack.c.l.b16 %v3059
        %v3084 = vunpack.c.l.b16 %v3063
        %v3085 = vpack.c.b16 %v3078, %v3077
        %v3086 = vpack.c.b16 %v3080, %v3079
        %v3087 = vpack.c.b16 %v3082, %v3081
        %v3088 = vpack.c.b16 %v3084, %v3083
        %v3093 = vunpack.c.l.b16 %v3073
        %v3094 = vunpack.c.l.b16 %v3074
        %v3095 = vunpack.c.l.b16 %v3075
        %v3096 = vunpack.c.l.b16 %v3076
        %v3097 = vpack.c.b16 %v3094, %v3093
        %v3098 = vpack.c.b16 %v3096, %v3095
        %v3102 = vsel %vm339, %v3085, 0
        %v3105 = vsel %vm339, %v3086, 0
        %v3108 = vsel %vm339, %v3087, 0
        %v3111 = vsel %vm339, %v3088, 0
        %3113 = vmatprep.subr.bf16.mxu0 0
        %3114 = vmatpush1.bf16.msra.mxu0 %v3097
        %3115 = vmatprep.subr.bf16.mxu0 0
        %3116 = vmatpush1.bf16.msra.mxu0 %v3098
        %3117 = vmatprep.subr.bf16.mxu0 0
        %3118 = vmatpush1.bf16.msra.mxu0 0
        %3119 = vmatprep.subr.bf16.mxu0 0
        %3120 = vmatpush1.bf16.msra.mxu0 0
        %3121 = vmatprep.subr.bf16.mxu0 0
        %3122 = vmatpush1.bf16.msra.mxu0 0
        %3123 = vmatprep.subr.bf16.mxu0 0
        %3124 = vmatpush1.bf16.msra.mxu0 0
        %3125 = vmatprep.subr.bf16.mxu0 0
        %3126 = vmatpush1.bf16.msra.mxu0 0
        %3127 = vmatprep.subr.bf16.mxu0 0
        %3128 = vmatpush1.bf16.msra.mxu0 0
        %3129 = vmatprep.subr.bf16.mxu0 0
        %3130 = vmatpush1.bf16.msra.mxu0 0
        %3131 = vmatprep.subr.bf16.mxu0 0
        %3132 = vmatpush1.bf16.msra.mxu0 0
        %3133 = vmatprep.subr.bf16.mxu0 0
        %3134 = vmatpush1.bf16.msra.mxu0 0
        %3135 = vmatprep.subr.bf16.mxu0 0
        %3136 = vmatpush1.bf16.msra.mxu0 0
        %3137 = vmatprep.subr.bf16.mxu0 0
        %3138 = vmatpush1.bf16.msra.mxu0 0
        %3139 = vmatprep.subr.bf16.mxu0 0
        %3140 = vmatpush1.bf16.msra.mxu0 0
        %3141 = vmatprep.subr.bf16.mxu0 0
        %3142 = vmatpush1.bf16.msra.mxu0 0
        %3143 = vmatprep.subr.bf16.mxu0 0
        %3144 = vmatpush1.bf16.msra.mxu0 0
        %3145 = vmatprep.mubr.bf16.mxu0 0
        %3146 = vmatmul.mubr.bf16.gmra.mrb[0].mxu0 %v3102
        %v3147 = vpop.f32.mrb[0].mxu0
        %v3148 = vadd.f32 0.0, %v3147
        %v3149 = vpop.f32.mrb[0].mxu0
        %v3150 = vpop.f32.mrb[0].mxu0
        %v3151 = vadd.f32 0.0, %v3150
        %v3152 = vpop.f32.mrb[0].mxu0
        %3153 = vmatprep.mubr.bf16.mxu0 0
        %3154 = vmatmul.mubr.bf16.gmra.mrb[0].mxu0 %v3105
        %v3155 = vpop.f32.mrb[0].mxu0
        %v3156 = vadd.f32 0.0, %v3155
        %v3157 = vpop.f32.mrb[0].mxu0
        %v3158 = vpop.f32.mrb[0].mxu0
        %v3159 = vadd.f32 0.0, %v3158
        %v3160 = vpop.f32.mrb[0].mxu0
        %3161 = vmatprep.mubr.bf16.mxu0 0
        %3162 = vmatmul.mubr.bf16.gmra.mrb[0].mxu0 %v3108
        %v3163 = vpop.f32.mrb[0].mxu0
        %v3164 = vadd.f32 0.0, %v3163
        %v3165 = vpop.f32.mrb[0].mxu0
        %v3166 = vpop.f32.mrb[0].mxu0
        %v3167 = vadd.f32 0.0, %v3166
        %v3168 = vpop.f32.mrb[0].mxu0
        %3169 = vmatprep.mubr.bf16.mxu0 0
        %3170 = vmatmul.mubr.bf16.gmra.mrb[0].mxu0 %v3111
        %v3171 = vpop.f32.mrb[0].mxu0
        %v3172 = vadd.f32 0.0, %v3171
        %v3173 = vpop.f32.mrb[0].mxu0
        %v3174 = vpop.f32.mrb[0].mxu0
        %v3175 = vadd.f32 0.0, %v3174
        %v3176 = vpop.f32.mrb[0].mxu0
        %3177 = vdwg.mxu0
        %v3178 = vadd.f32 %v3064, %v3148
        %v3179 = vadd.f32 %v3065, %v3151
        %v3180 = vadd.f32 %v3066, %v3156
        %v3181 = vadd.f32 %v3067, %v3159
        %v3182 = vadd.f32 %v3068, %v3164
        %v3183 = vadd.f32 %v3069, %v3167
        %v3184 = vadd.f32 %v3070, %v3172
        %v3185 = vadd.f32 %v3071, %v3175
        %3186 = vst.msk [vmem:[#allocation2] sm:$0xff] %vm267, %v3178
        %3187 = vst.msk [vmem:[#allocation2 + $0x8] sm:$0xff] %vm267, %v3179
        %3188 = vst.msk [vmem:[#allocation2 + $0x10] sm:$0xff] %vm267, %v3180
        %3189 = vst.msk [vmem:[#allocation2 + $0x18] sm:$0xff] %vm267, %v3181
        %3190 = vst.msk [vmem:[#allocation2 + $0x20] sm:$0xff] %vm267, %v3182
        %3191 = vst.msk [vmem:[#allocation2 + $0x28] sm:$0xff] %vm267, %v3183
        %3192 = vst.msk [vmem:[#allocation2 + $0x30] sm:$0xff] %vm267, %v3184
        %3193 = vst.msk [vmem:[#allocation2 + $0x38] sm:$0xff] %vm267, %v3185
        %v3194 = vrot.slane %v2783, 5
        %v3195 = vrot.slane %v2786, 6
        %v3196 = vor.u32 %v3194, %v3195
        %v3197 = vrot.slane %v3196, 4
        %v3198 = vshrl.u32 %v2629, 16
        %v3200 = vrot.slane %v3198, 5
        %v3201 = vrot.slane %v2792, 6
        %v3202 = vor.u32 %v3200, %v3201
        %v3203 = vsel %vm853, %v3197, %v3202
        %v3204 = vrot.slane %v2797, 5
        %v3205 = vrot.slane %v2800, 6
        %v3206 = vor.u32 %v3204, %v3205
        %v3207 = vrot.slane %v3206, 4
        %v3208 = vshrl.u32 %v2631, 16
        %v3210 = vrot.slane %v3208, 5
        %v3211 = vrot.slane %v2806, 6
        %v3212 = vor.u32 %v3210, %v3211
        %v3213 = vsel %vm853, %v3207, %v3212
        %v3214 = vrot.slane %v2811, 5
        %v3215 = vrot.slane %v2814, 6
        %v3216 = vor.u32 %v3214, %v3215
        %v3217 = vrot.slane %v3216, 4
        %v3218 = vshrl.u32 %v2633, 16
        %v3220 = vrot.slane %v3218, 5
        %v3221 = vrot.slane %v2820, 6
        %v3222 = vor.u32 %v3220, %v3221
        %v3223 = vsel %vm853, %v3217, %v3222
        %v3224 = vrot.slane %v2825, 5
        %v3225 = vrot.slane %v2828, 6
        %v3226 = vor.u32 %v3224, %v3225
        %v3227 = vrot.slane %v3226, 4
        %v3228 = vshrl.u32 %v2635, 16
        %v3230 = vrot.slane %v3228, 5
        %v3231 = vrot.slane %v2834, 6
        %v3232 = vor.u32 %v3230, %v3231
        %v3233 = vsel %vm853, %v3227, %v3232
        %v3234 = vrot.slane %v2839, 5
        %v3235 = vrot.slane %v2842, 6
        %v3236 = vor.u32 %v3234, %v3235
        %v3237 = vrot.slane %v3236, 4
        %v3238 = vshrl.u32 %v2637, 16
        %v3240 = vrot.slane %v3238, 5
        %v3241 = vrot.slane %v2848, 6
        %v3242 = vor.u32 %v3240, %v3241
        %v3243 = vsel %vm853, %v3237, %v3242
        %v3244 = vrot.slane %v2853, 5
        %v3245 = vrot.slane %v2856, 6
        %v3246 = vor.u32 %v3244, %v3245
        %v3247 = vrot.slane %v3246, 4
        %v3248 = vshrl.u32 %v2639, 16
        %v3250 = vrot.slane %v3248, 5
        %v3251 = vrot.slane %v2862, 6
        %v3252 = vor.u32 %v3250, %v3251
        %v3253 = vsel %vm853, %v3247, %v3252
        %v3254 = vrot.slane %v2867, 5
        %v3255 = vrot.slane %v2870, 6
        %v3256 = vor.u32 %v3254, %v3255
        %v3257 = vrot.slane %v3256, 4
        %v3258 = vshrl.u32 %v2641, 16
        %v3260 = vrot.slane %v3258, 5
        %v3261 = vrot.slane %v2876, 6
        %v3262 = vor.u32 %v3260, %v3261
        %v3263 = vsel %vm853, %v3257, %v3262
        %v3264 = vrot.slane %v2881, 5
        %v3265 = vrot.slane %v2884, 6
        %v3266 = vor.u32 %v3264, %v3265
        %v3267 = vrot.slane %v3266, 4
        %v3268 = vshrl.u32 %v2643, 16
        %v3270 = vrot.slane %v3268, 5
        %v3271 = vrot.slane %v2890, 6
        %v3272 = vor.u32 %v3270, %v3271
        %v3273 = vsel %vm853, %v3267, %v3272
        %v3274 = vld [vmem:[#allocation2] sm:$0xff]
        %v3275 = vld [vmem:[#allocation2 + $0x8] sm:$0xff]
        %v3276 = vld [vmem:[#allocation2 + $0x10] sm:$0xff]
        %v3277 = vld [vmem:[#allocation2 + $0x18] sm:$0xff]
        %v3278 = vld [vmem:[#allocation2 + $0x20] sm:$0xff]
        %v3279 = vld [vmem:[#allocation2 + $0x28] sm:$0xff]
        %v3280 = vld [vmem:[#allocation2 + $0x30] sm:$0xff]
        %v3281 = vld [vmem:[#allocation2 + $0x38] sm:$0xff]
        %s3282 = scalar_lea.vmem %s257, 240
        %v3283 = vld [vmem:[%s3282] sm:$0xf]
        %v3284 = vld [vmem:[%s3282 + $0x4] sm:$0xf]
        %v3285 = vld [vmem:[%s3282 + $0x8] sm:$0xf]
        %v3286 = vld [vmem:[%s3282 + $0xc] sm:$0xf]
        %v3287 = vunpack.c.l.b16 %v3203
        %v3288 = vunpack.c.l.b16 %v3213
        %v3289 = vunpack.c.l.b16 %v3223
        %v3290 = vunpack.c.l.b16 %v3233
        %v3291 = vunpack.c.l.b16 %v3243
        %v3292 = vunpack.c.l.b16 %v3253
        %v3293 = vunpack.c.l.b16 %v3263
        %v3294 = vunpack.c.l.b16 %v3273
        %v3295 = vpack.c.b16 %v3288, %v3287
        %v3296 = vpack.c.b16 %v3290, %v3289
        %v3297 = vpack.c.b16 %v3292, %v3291
        %v3298 = vpack.c.b16 %v3294, %v3293
        %v3303 = vunpack.c.l.b16 %v3283
        %v3304 = vunpack.c.l.b16 %v3284
        %v3305 = vunpack.c.l.b16 %v3285
        %v3306 = vunpack.c.l.b16 %v3286
        %v3307 = vpack.c.b16 %v3304, %v3303
        %v3308 = vpack.c.b16 %v3306, %v3305
        %v3312 = vsel %vm339, %v3295, 0
        %v3315 = vsel %vm339, %v3296, 0
        %v3318 = vsel %vm339, %v3297, 0
        %v3321 = vsel %vm339, %v3298, 0
        %3323 = vmatprep.subr.bf16.mxu0 0
        %3324 = vmatpush1.bf16.msra.mxu0 %v3307
        %3325 = vmatprep.subr.bf16.mxu0 0
        %3326 = vmatpush1.bf16.msra.mxu0 %v3308
        %3327 = vmatprep.subr.bf16.mxu0 0
        %3328 = vmatpush1.bf16.msra.mxu0 0
        %3329 = vmatprep.subr.bf16.mxu0 0
        %3330 = vmatpush1.bf16.msra.mxu0 0
        %3331 = vmatprep.subr.bf16.mxu0 0
        %3332 = vmatpush1.bf16.msra.mxu0 0
        %3333 = vmatprep.subr.bf16.mxu0 0
        %3334 = vmatpush1.bf16.msra.mxu0 0
        %3335 = vmatprep.subr.bf16.mxu0 0
        %3336 = vmatpush1.bf16.msra.mxu0 0
        %3337 = vmatprep.subr.bf16.mxu0 0
        %3338 = vmatpush1.bf16.msra.mxu0 0
        %3339 = vmatprep.subr.bf16.mxu0 0
        %3340 = vmatpush1.bf16.msra.mxu0 0
        %3341 = vmatprep.subr.bf16.mxu0 0
        %3342 = vmatpush1.bf16.msra.mxu0 0
        %3343 = vmatprep.subr.bf16.mxu0 0
        %3344 = vmatpush1.bf16.msra.mxu0 0
        %3345 = vmatprep.subr.bf16.mxu0 0
        %3346 = vmatpush1.bf16.msra.mxu0 0
        %3347 = vmatprep.subr.bf16.mxu0 0
        %3348 = vmatpush1.bf16.msra.mxu0 0
        %3349 = vmatprep.subr.bf16.mxu0 0
        %3350 = vmatpush1.bf16.msra.mxu0 0
        %3351 = vmatprep.subr.bf16.mxu0 0
        %3352 = vmatpush1.bf16.msra.mxu0 0
        %3353 = vmatprep.subr.bf16.mxu0 0
        %3354 = vmatpush1.bf16.msra.mxu0 0
        %3355 = vmatprep.mubr.bf16.mxu0 0
        %3356 = vmatmul.mubr.bf16.gmra.mrb[0].mxu0 %v3312
        %v3357 = vpop.f32.mrb[0].mxu0
        %v3358 = vadd.f32 0.0, %v3357
        %v3359 = vpop.f32.mrb[0].mxu0
        %v3360 = vpop.f32.mrb[0].mxu0
        %v3361 = vadd.f32 0.0, %v3360
        %v3362 = vpop.f32.mrb[0].mxu0
        %3363 = vmatprep.mubr.bf16.mxu0 0
        %3364 = vmatmul.mubr.bf16.gmra.mrb[0].mxu0 %v3315
        %v3365 = vpop.f32.mrb[0].mxu0
        %v3366 = vadd.f32 0.0, %v3365
        %v3367 = vpop.f32.mrb[0].mxu0
        %v3368 = vpop.f32.mrb[0].mxu0
        %v3369 = vadd.f32 0.0, %v3368
        %v3370 = vpop.f32.mrb[0].mxu0
        %3371 = vmatprep.mubr.bf16.mxu0 0
        %3372 = vmatmul.mubr.bf16.gmra.mrb[0].mxu0 %v3318
        %v3373 = vpop.f32.mrb[0].mxu0
        %v3374 = vadd.f32 0.0, %v3373
        %v3375 = vpop.f32.mrb[0].mxu0
        %v3376 = vpop.f32.mrb[0].mxu0
        %v3377 = vadd.f32 0.0, %v3376
        %v3378 = vpop.f32.mrb[0].mxu0
        %3379 = vmatprep.mubr.bf16.mxu0 0
        %3380 = vmatmul.mubr.bf16.gmra.mrb[0].mxu0 %v3321
        %v3381 = vpop.f32.mrb[0].mxu0
        %v3382 = vadd.f32 0.0, %v3381
        %v3383 = vpop.f32.mrb[0].mxu0
        %v3384 = vpop.f32.mrb[0].mxu0
        %v3385 = vadd.f32 0.0, %v3384
        %v3386 = vpop.f32.mrb[0].mxu0
        %3387 = vdwg.mxu0
        %v3388 = vadd.f32 %v3274, %v3358
        %v3389 = vadd.f32 %v3275, %v3361
        %v3390 = vadd.f32 %v3276, %v3366
        %v3391 = vadd.f32 %v3277, %v3369
        %v3392 = vadd.f32 %v3278, %v3374
        %v3393 = vadd.f32 %v3279, %v3377
        %v3394 = vadd.f32 %v3280, %v3382
        %v3395 = vadd.f32 %v3281, %v3385
        %3396 = vst.msk [vmem:[#allocation2] sm:$0xff] %vm267, %v3388
        %3397 = vst.msk [vmem:[#allocation2 + $0x8] sm:$0xff] %vm267, %v3389
        %3398 = vst.msk [vmem:[#allocation2 + $0x10] sm:$0xff] %vm267, %v3390
        %3399 = vst.msk [vmem:[#allocation2 + $0x18] sm:$0xff] %vm267, %v3391
        %3400 = vst.msk [vmem:[#allocation2 + $0x20] sm:$0xff] %vm267, %v3392
        %3401 = vst.msk [vmem:[#allocation2 + $0x28] sm:$0xff] %vm267, %v3393
        %3402 = vst.msk [vmem:[#allocation2 + $0x30] sm:$0xff] %vm267, %v3394
        %3403 = vst.msk [vmem:[#allocation2 + $0x38] sm:$0xff] %vm267, %v3395
        %v3404 = vld [vmem:[#allocation2] sm:$0xff]
        %v3405 = vld [vmem:[#allocation2 + $0x8] sm:$0xff]
        %v3406 = vld [vmem:[#allocation2 + $0x10] sm:$0xff]
        %v3407 = vld [vmem:[#allocation2 + $0x18] sm:$0xff]
        %v3408 = vld [vmem:[#allocation2 + $0x20] sm:$0xff]
        %v3409 = vld [vmem:[#allocation2 + $0x28] sm:$0xff]
        %v3410 = vld [vmem:[#allocation2 + $0x30] sm:$0xff]
        %v3411 = vld [vmem:[#allocation2 + $0x38] sm:$0xff]
        %v3412 = vld [vmem:[%s260] sm:$0x1]
        %v3414 = vlaneseq
        %v3415 = vshrl.u32 %v3414, 7
        %v3416 = vsub.s32 0, %v3415
        %v3417 = vrot.slane %v3412, %v3416
        %v3419 = vmul.f32 %v3404, %v3417
        %v3420 = vmul.f32 %v3405, %v3417
        %v3421 = vmul.f32 %v3406, %v3417
        %v3422 = vmul.f32 %v3407, %v3417
        %v3423 = vmul.f32 %v3408, %v3417
        %v3424 = vmul.f32 %v3409, %v3417
        %v3425 = vmul.f32 %v3410, %v3417
        %v3426 = vmul.f32 %v3411, %v3417
        %v3427 = vld [vmem:[%s263] sm:$0x1]
        %v3429 = vlaneseq
        %v3430 = vshrl.u32 %v3429, 7
        %v3431 = vsub.s32 0, %v3430
        %v3432 = vrot.slane %v3427, %v3431
        %v3434 = vadd.f32 %v3419, %v3432
        %v3435 = vadd.f32 %v3420, %v3432
        %v3436 = vadd.f32 %v3421, %v3432
        %v3437 = vadd.f32 %v3422, %v3432
        %v3438 = vadd.f32 %v3423, %v3432
        %v3439 = vadd.f32 %v3424, %v3432
        %v3440 = vadd.f32 %v3425, %v3432
        %v3441 = vadd.f32 %v3426, %v3432
        %v3442 = vmax.f32 %v3434, 0.0
        %v3443 = vmax.f32 %v3435, 0.0
        %v3444 = vmax.f32 %v3436, 0.0
        %v3445 = vmax.f32 %v3437, 0.0
        %v3446 = vmax.f32 %v3438, 0.0
        %v3447 = vmax.f32 %v3439, 0.0
        %v3448 = vmax.f32 %v3440, 0.0
        %v3449 = vmax.f32 %v3441, 0.0
        %v3450 = vpack.c.bf16 %v3442, %v3442
        %v3451 = vpack.c.bf16 %v3443, %v3443
        %v3452 = vpack.c.bf16 %v3444, %v3444
        %v3453 = vpack.c.bf16 %v3445, %v3445
        %v3454 = vpack.c.bf16 %v3446, %v3446
        %v3455 = vpack.c.bf16 %v3447, %v3447
        %v3456 = vpack.c.bf16 %v3448, %v3448
        %v3457 = vpack.c.bf16 %v3449, %v3449
        %vm3458 = vcmask 519168
        %3459 = vst.msk [vmem:[%s248] sm:$0xf] %vm3458, %v3450
        %3460 = vst.msk [vmem:[%s248 + $0x4] sm:$0xf] %vm3458, %v3451
        %3461 = vst.msk [vmem:[%s248 + $0x8] sm:$0xf] %vm3458, %v3452
        %3462 = vst.msk [vmem:[%s248 + $0xc] sm:$0xf] %vm3458, %v3453
        %3463 = vst.msk [vmem:[%s248 + $0x10] sm:$0xf] %vm3458, %v3454
        %3464 = vst.msk [vmem:[%s248 + $0x14] sm:$0xf] %vm3458, %v3455
        %3465 = vst.msk [vmem:[%s248 + $0x18] sm:$0xf] %vm3458, %v3456
        %3466 = vst.msk [vmem:[%s248 + $0x1c] sm:$0xf] %vm3458, %v3457
        %s3467 = sand.u32 %s153, 1
        %s3468 = scalar_lea.sflag [#allocation4], %s3467
        %s3469 = sand.u32 %s153, 1
        %s3470 = smul.addr %s3469, 32
        %s3471 = scalar_lea.vmem [#allocation3], %s3470
        // Predicated region
        $region37: #{tpu_custom_call.1} parent=35 // pred_check
          %p3472 = pneg %p163
        $region38: #{tpu_custom_call.1} parent=35 // pred_check_branch
          %3474 = sbr.rel (%p3472) target = $region40
        $region39: #{tpu_custom_call.1} parent=35 // pred_region
          %s3475 = smul.u32 8, %s25
          %s3477 = ssub.s32 512, 512
          %3478 = vsyncadd %s3468, %s3477
          %s3479 = sadd.s32 %s24, %s3475
          %s3480 = smul.addr %s23, 8
          %s3481 = sadd.s32 %s3479, %s3480
          %s3482 = smul.addr %s3481, 64
          %s3483 = scalar_lea.hbm %s4, %s3482
          %s3484 = sshll.u32 %s3471, 4
          %s3485 = int_to_ptr.vmem [resolvable:$true] %s3484
          %3490 = dma.vmem_to_hbm [thread:$0]  %s3485, 512, %s3483, %s3468, 64, 64, 4
        $region40: #{tpu_custom_call.1} parent=35 // pred_fallthru
          _
      $region36: #{tpu_custom_call.1} parent=5 // pred_fallthru
        _
      %p3491 = scmp.le.s32.totalorder 2, %s13
      // Predicated region
      $region41: #{tpu_custom_call.1} parent=5 // pred_check
        %p3492 = pneg %p3491
      $region42: #{tpu_custom_call.1} parent=5 // pred_check_branch
        %3494 = sbr.rel (%p3492) target = $region44
      $region43: #{tpu_custom_call.1} parent=5 // pred_region
        %s3495 = ssub.s32 %s13, 2
        // Predicated region
        $region45: #{tpu_custom_call.1} parent=43 // pred_check
          %p3496 = pneg %p169
        $region46: #{tpu_custom_call.1} parent=43 // pred_check_branch
          %3498 = sbr.rel (%p3496) target = $region48
        $region47: #{tpu_custom_call.1} parent=43 // pred_region
          %s3499 = sand.u32 %s154, 1
          %s3500 = scalar_lea.sflag [#allocation4], %s3499
          %s3501 = sand.u32 %s154, 1
          %s3502 = smul.addr %s3501, 32
          %s3503 = scalar_lea.vmem [#allocation3], %s3502
          %3504 = dma.done %s3500, 512
        $region48: #{tpu_custom_call.1} parent=43 // pred_fallthru
          _
      $region44: #{tpu_custom_call.1} parent=5 // pred_fallthru
        _
    $region6: #{tpu_custom_call.1} parent=1 // loop_footer
      %s17 = sadd.s32 1, %s13
    $region7: #{tpu_custom_call.1} parent=1 // loop_footer_branch
      %12 = sbr.rel target = $region3
    $region8: #{tpu_custom_call.1} parent=1 // loop_exit
      _
    %3505 = vsyncpa [#allocation4], 1
    %s3506 = scalar_lea.sflag [#allocation4], 1
    %3507 = vsyncpa %s3506, 1

</llo_original>
